<compile_context>
chip_gen: v6e
topology: v6e:2x2x1
jax: 0.10.0
libtpu: 0.0.40
codegen_flags: <defaults>
</compile_context>

<pallas_src>
import math
import functools

import jax
import jax.numpy as jnp
import numpy as np
from jax import lax
from jax.experimental import pallas as pl
from jax.experimental.pallas import tpu as pltpu


def _rope_mha_kernel(*refs, d_k, hp, seq_len, mm_dtype, self_attn, has_bias,
                     bias_per_head, causal, has_attn_out, approx_recip):
    f32 = jnp.float32
    half = d_k // 2
    S = seq_len

    # ---- unpack refs (layout decided at trace time by compile-time flags) ----
    idx = 0
    if self_attn:
        x_ref = refs[idx]; idx += 1
    else:
        q_ref, k_ref, v_ref = refs[idx], refs[idx + 1], refs[idx + 2]
        idx += 3
    wqkv_ref, bqkv_ref, wo_ref, bo_ref, cos_ref, sin_ref = refs[idx:idx + 6]
    idx += 6
    bias_ref = None
    if has_bias:
        bias_ref = refs[idx]; idx += 1
    out_ref = refs[idx]; idx += 1
    attn_ref = refs[idx] if has_attn_out else None

    hs = pl.program_id(1)

    if self_attn:
        x = x_ref[0].astype(mm_dtype)                    # [S, D]
    else:
        xq = q_ref[0].astype(mm_dtype)
        xk = k_ref[0].astype(mm_dtype)
        xv = v_ref[0].astype(mm_dtype)

    cos = cos_ref[...]                                   # [S, d_k] f32
    sin = sin_ref[...]                                   # [S, d_k] f32 (sign folded)

    if causal:
        # In-kernel mask: no S^2 bias array in HBM/VMEM.  Hoisted out of the
        # per-head loop (broadcast_in_dim is not CSE'd by JAX).
        row = lax.broadcasted_iota(jnp.int32, (S, S), 0)
        col = lax.broadcasted_iota(jnp.int32, (S, S), 1)
        keep = row >= col

    ctx_parts = []
    for i in range(hp):                                   # static unroll (hp <= 2)
        w = wqkv_ref[i]                                   # [D, 3*d_k], mm_dtype
        b = bqkv_ref[i]                                   # [1, 3*d_k], f32

        if self_attn:
            # Single fused projection, N = 3*d_k (full MXU width on v6e/v7x).
            qkv = jnp.dot(x, w, preferred_element_type=f32) + b          # [S, 3*d_k]
            qh = qkv[:, :d_k]
            kh = qkv[:, d_k:2 * d_k]
            vh = qkv[:, 2 * d_k:]
        else:
            qh = jnp.dot(xq, w[:, :d_k], preferred_element_type=f32) + b[:, :d_k]
            kh = jnp.dot(xk, w[:, d_k:2 * d_k], preferred_element_type=f32) + b[:, d_k:2 * d_k]
            vh = jnp.dot(xv, w[:, 2 * d_k:], preferred_element_type=f32) + b[:, 2 * d_k:]

        # RoPE (rotate-half): rotate_half(x) == roll(x, d_k/2) * sign; the sign
        # is folded into the sin table, roll runs on the XLU slot.
        qh = qh * cos + pltpu.roll(qh, half, 1) * sin
        kh = kh * cos + pltpu.roll(kh, half, 1) * sin

        # Scores: contract d_k on the last dim of both operands (no .T copy).
        scores = lax.dot_general(
            qh.astype(mm_dtype), kh.astype(mm_dtype),
            dimension_numbers=(((1,), (1,)), ((), ())),
            preferred_element_type=f32)                                   # [S, S]
        if bias_ref is not None:
            scores = scores + (bias_ref[0, i] if bias_per_head else bias_ref[0, 0])
        if causal:
            scores = jnp.where(keep, scores, -1e9)

        # Softmax in f32.
        m = jnp.max(scores, axis=-1, keepdims=True)
        e = jnp.exp(scores - m)
        denom = jnp.sum(e, axis=-1, keepdims=True)
        if approx_recip:
            inv = pl.reciprocal(denom, approx=True)       # EUP slot
        else:
            inv = 1.0 / denom

        if attn_ref is not None:
            attn = e * inv
            attn_ref[0, i] = attn.astype(attn_ref.dtype)  # optional bf16 writeback
            ctx = jnp.dot(attn.astype(mm_dtype), vh.astype(mm_dtype),
                          preferred_element_type=f32)                     # [S, d_k]
        else:
            # Deferred normalization: scale the [S, d_k] context, not [S, S].
            ctx = jnp.dot(e.astype(mm_dtype), vh.astype(mm_dtype),
                          preferred_element_type=f32) * inv
        ctx_parts.append(ctx)

    # Pair the heads of this step: output projection contracts K = hp*d_k.
    ctx_cat = ctx_parts[0] if hp == 1 else jnp.concatenate(ctx_parts, axis=-1)
    head_out = jnp.dot(ctx_cat.astype(mm_dtype), wo_ref[0],
                       preferred_element_type=f32)                        # [S, D]

    @pl.when(hs == 0)
    def _():
        out_ref[0] = head_out + bo_ref[...]               # init without a round trip

    @pl.when(hs > 0)
    def _():
        out_ref[0] += head_out


def make_rope_tables(seq_len, d_k, base=10000.0):
    inv_freq = 1.0 / (base ** (jnp.arange(0, d_k, 2, dtype=jnp.float32) / d_k))
    pos = jnp.arange(seq_len, dtype=jnp.float32)
    freqs = jnp.outer(pos, inv_freq)                                     # [S, d_k/2]
    cos = jnp.concatenate([jnp.cos(freqs), jnp.cos(freqs)], axis=-1)     # [S, d_k]
    sin = jnp.concatenate([jnp.sin(freqs), jnp.sin(freqs)], axis=-1)     # [S, d_k]
    return cos, sin


def rope_multihead_attention(query, key, value, params, mask=None, *,
                             num_heads, rope_base=10000.0, causal=False,
                             matmul_dtype=jnp.bfloat16,
                             return_attn_weights=True,
                             attn_weights_dtype=jnp.float32,
                             approx_reciprocal=True,
                             heads_per_step=None,
                             vmem_limit_bytes=None):
    """query/key/value: [B, S, D] f32; mask: [B or 1, 1 or H, S, S] (0 -> masked).

    causal=True (requires mask=None) builds the causal mask in-kernel (no S^2
    bias array).  Returns (output [B,S,D] f32, attn [B,H,S,S] or None).
    """
    B, S, D = query.shape
    H = num_heads
    assert D % H == 0
    d_k = D // H
    assert d_k % 2 == 0, "RoPE needs an even head dimension"
    scale = 1.0 / math.sqrt(d_k)
    if causal:
        assert mask is None, "causal=True generates the mask in-kernel"

    self_attn = (query is key) and (key is value)

    if heads_per_step is None:
        heads_per_step = 2 if H % 2 == 0 else 1
    hp = heads_per_step
    assert H % hp == 0
    Hs = H // hp

    wq, bq, wk, bk, wv, bv, wo, bo = params

    # ---- wrapper-side layout plumbing (runs once in XLA, not in the kernel) ----
    cos, sin = make_rope_tables(S, d_k, rope_base)
    sign = jnp.concatenate([jnp.full((1, d_k // 2), -1.0, jnp.float32),
                            jnp.ones((1, d_k // 2), jnp.float32)], axis=-1)
    sin_signed = (sin * sign).astype(jnp.float32)
    cos = cos.astype(jnp.float32)

    def per_head_in(w):                      # [D, D] -> [H, D, d_k]
        return w.reshape(D, H, d_k).transpose(1, 0, 2)

    wq_h = per_head_in(wq * scale)           # 1/sqrt(d_k) folded in
    wk_h = per_head_in(wk)
    wv_h = per_head_in(wv)
    w_qkv = jnp.concatenate([wq_h, wk_h, wv_h], axis=-1).astype(matmul_dtype)  # [H,D,3dk]

    bq_h = (jnp.reshape(bq, (-1,)) * scale).reshape(H, 1, d_k)
    bk_h = jnp.reshape(bk, (-1,)).reshape(H, 1, d_k)
    bv_h = jnp.reshape(bv, (-1,)).reshape(H, 1, d_k)
    b_qkv = jnp.concatenate([bq_h, bk_h, bv_h], axis=-1).astype(jnp.float32)   # [H,1,3dk]

    wo_h = wo.reshape(Hs, hp * d_k, D).astype(matmul_dtype)                    # [Hs,hp*dk,D]
    bo_2d = jnp.reshape(bo, (1, D)).astype(jnp.float32)

    # Additive attention bias only when an explicit mask is provided.
    has_bias = mask is not None
    bias = None
    bias_per_head = False
    if has_bias:
        assert mask.ndim == 4
        bias = jnp.where(mask == 0, -1e9, 0.0).astype(jnp.float32)
        bias_per_head = bias.shape[1] != 1
        assert bias.shape[1] in (1, H)

    # ---- BlockSpecs: grid = (batch, head_group) ----
    x_spec = pl.BlockSpec((1, S, D), lambda b, hs: (b, 0, 0))
    in_specs = []
    operands = []
    if self_attn:
        in_specs.append(x_spec)
        operands.append(query)               # DMA x once, not 3x
    else:
        in_specs += [x_spec, x_spec, x_spec]
        operands += [query, key, value]

    in_specs += [
        pl.BlockSpec((hp, D, 3 * d_k), lambda b, hs: (hs, 0, 0)),
        pl.BlockSpec((hp, 1, 3 * d_k), lambda b, hs: (hs, 0, 0)),
        pl.BlockSpec((1, hp * d_k, D), lambda b, hs: (hs, 0, 0)),
        pl.BlockSpec((1, D), lambda b, hs: (0, 0)),
        pl.BlockSpec((S, d_k), lambda b, hs: (0, 0)),
        pl.BlockSpec((S, d_k), lambda b, hs: (0, 0)),
    ]
    operands += [w_qkv, b_qkv, wo_h, bo_2d, cos, sin_signed]

    if has_bias:
        bh = hp if bias_per_head else 1
        bcast_batch = bias.shape[0] == 1
        if bias_per_head:
            bias_spec = pl.BlockSpec(
                (1, bh, S, S),
                lambda b, hs: ((0 if bcast_batch else b), hs, 0, 0))
        else:
            bias_spec = pl.BlockSpec(
                (1, 1, S, S),
                lambda b, hs: ((0 if bcast_batch else b), 0, 0, 0))
        in_specs.append(bias_spec)
        operands.append(bias)

    out_spec = pl.BlockSpec((1, S, D), lambda b, hs: (b, 0, 0))
    if return_attn_weights:
        attn_spec = pl.BlockSpec((1, hp, S, S), lambda b, hs: (b, hs, 0, 0))
        out_shape = (jax.ShapeDtypeStruct((B, S, D), jnp.float32),
                     jax.ShapeDtypeStruct((B, H, S, S), attn_weights_dtype))
        out_specs = (out_spec, attn_spec)
    else:
        out_shape = jax.ShapeDtypeStruct((B, S, D), jnp.float32)
        out_specs = out_spec

    kernel = functools.partial(
        _rope_mha_kernel, d_k=d_k, hp=hp, seq_len=S, mm_dtype=matmul_dtype,
        self_attn=self_attn, has_bias=has_bias, bias_per_head=bias_per_head,
        causal=causal, has_attn_out=return_attn_weights,
        approx_recip=approx_reciprocal)

    # Advisory cost estimate so XLA schedules the wrapper-side reshapes/casts
    # around the custom call instead of serializing.
    extra_kwargs = {}
    if hasattr(pl, "CostEstimate"):
        mm_bytes = jnp.dtype(matmul_dtype).itemsize
        flops = 2 * B * H * S * (3 * D * d_k + 2 * S * d_k + D * d_k)
        transcendentals = B * H * S * S
        bytes_accessed = ((1 if self_attn else 3) * B * S * D * 4
                          + H * D * 3 * d_k * mm_bytes + H * d_k * D * mm_bytes
                          + H * 3 * d_k * 4 + D * 4 + 2 * S * d_k * 4
                          + (int(bias.size) * 4 if has_bias else 0)
                          + B * S * D * 4
                          + (B * H * S * S * jnp.dtype(attn_weights_dtype).itemsize
                             if return_attn_weights else 0))
        extra_kwargs["cost_estimate"] = pl.CostEstimate(
            flops=flops, transcendentals=transcendentals,
            bytes_accessed=bytes_accessed)

    result = pl.pallas_call(
        kernel,
        out_shape=out_shape,
        grid=(B, Hs),
        in_specs=in_specs,
        out_specs=out_specs,
        compiler_params=pltpu.CompilerParams(
            # batch steps independent -> "parallel" (megacore); head-group axis
            # accumulates the output projection -> "arbitrary" (innermost).
            dimension_semantics=("parallel", "arbitrary"),
            vmem_limit_bytes=vmem_limit_bytes),
        **extra_kwargs,
    )(*operands)

    if return_attn_weights:
        out, attn = result
        return out, attn
    return result, None


def reference_forward(query, key, value, params, mask, *, num_heads,
                      rope_base=10000.0):
    """Pure-JAX reference mirroring the PyTorch module (eval mode, f32)."""
    B, S, D = query.shape
    d_k = D // num_heads
    wq, bq, wk, bk, wv, bv, wo, bo = params
    cos, sin = make_rope_tables(S, d_k, rope_base)

    def proj(x, w, b):
        y = x @ w + b
        return y.reshape(B, S, num_heads, d_k).transpose(0, 2, 1, 3)

    Q = proj(query, wq, bq)
    K = proj(key, wk, bk)
    V = proj(value, wv, bv)

    def rot_half(x):
        return jnp.concatenate([-x[..., d_k // 2:], x[..., :d_k // 2]], axis=-1)

    Q = Q * cos + rot_half(Q) * sin
    K = K * cos + rot_half(K) * sin

    scores = jnp.einsum("bhqd,bhkd->bhqk", Q, K) / math.sqrt(d_k)
    if mask is not None:
        scores = jnp.where(mask == 0, -1000000000.0, scores)
    attn = jax.nn.softmax(scores, axis=-1)
    ctx = jnp.einsum("bhqk,bhkd->bhqd", attn, V)
    ctx = ctx.transpose(0, 2, 1, 3).reshape(B, S, D)
    out = ctx @ wo + bo
    return out, attn


if __name__ == "__main__":
    # TPU-friendly small shapes: d_k = D // H = 128, S and D multiples of 128 so
    # every matmul and store is lane-dense.
    B, S, D, H = 2, 128, 256, 2

    key0 = jax.random.PRNGKey(0)
    ks = jax.random.split(key0, 12)
    wscale = 1.0 / math.sqrt(D)

    wq = jax.random.normal(ks[0], (D, D), jnp.float32) * wscale
    bq = jax.random.normal(ks[1], (1, D), jnp.float32) * 0.01
    wk = jax.random.normal(ks[2], (D, D), jnp.float32) * wscale
    bk = jax.random.normal(ks[3], (1, D), jnp.float32) * 0.01
    wv = jax.random.normal(ks[4], (D, D), jnp.float32) * wscale
    bv = jax.random.normal(ks[5], (1, D), jnp.float32) * 0.01
    wo = jax.random.normal(ks[6], (D, D), jnp.float32) * wscale
    bo = jax.random.normal(ks[7], (1, D), jnp.float32) * 0.01
    params = (wq, bq, wk, bk, wv, bv, wo, bo)

    x = jax.random.normal(ks[8], (B, S, D), jnp.float32)
    q2 = jax.random.normal(ks[9], (B, S, D), jnp.float32)
    k2 = jax.random.normal(ks[10], (B, S, D), jnp.float32)
    v2 = jax.random.normal(ks[11], (B, S, D), jnp.float32)

    causal2d = jnp.tril(jnp.ones((S, S), jnp.float32))
    causal_mask = causal2d[None, None]                                   # [1,1,S,S]

    # Per-batch mask (causal + key padding for batch 1) to exercise the
    # per-batch bias index_map.  No fully masked rows.
    valid_len = jnp.array([S, 96], jnp.int32)
    key_valid = (jnp.arange(S)[None, :] < valid_len[:, None]).astype(jnp.float32)
    mask_padded = causal2d[None, None] * key_valid[:, None, None, :]     # [B,1,S,S]

    # ---------- Test 1: self-attention, fused QKV, in-kernel causal, f32 ----------
    ref_out_sa, ref_attn_sa = reference_forward(x, x, x, params, causal_mask,
                                                num_heads=H)
    out1, attn1 = rope_multihead_attention(
        x, x, x, params, mask=None, causal=True, num_heads=H,
        matmul_dtype=jnp.float32, approx_reciprocal=False)
    jax.block_until_ready(out1)
    np.testing.assert_allclose(np.asarray(out1), np.asarray(ref_out_sa),
                               rtol=2e-2, atol=2e-2)
    np.testing.assert_allclose(np.asarray(attn1), np.asarray(ref_attn_sa),
                               rtol=2e-2, atol=2e-2)

    # ---------- Test 2: cross-attention path, explicit per-batch mask, bf16 ----------
    ref_out2, ref_attn2 = reference_forward(q2, k2, v2, params, mask_padded,
                                            num_heads=H)
    out2, attn2 = rope_multihead_attention(q2, k2, v2, params, mask=mask_padded,
                                           num_heads=H)
    jax.block_until_ready(out2)
    np.testing.assert_allclose(np.asarray(out2), np.asarray(ref_out2),
                               rtol=6e-2, atol=6e-2)
    np.testing.assert_allclose(np.asarray(attn2), np.asarray(ref_attn2),
                               rtol=6e-2, atol=6e-2)

    # ---------- Test 3: fast path — no attn writeback, deferred normalization ----------
    out3, none3 = rope_multihead_attention(x, x, x, params, mask=None, causal=True,
                                           num_heads=H, return_attn_weights=False)
    jax.block_until_ready(out3)
    assert none3 is None
    np.testing.assert_allclose(np.asarray(out3), np.asarray(ref_out_sa),
                               rtol=6e-2, atol=6e-2)

    # ---------- Test 4: heads_per_step=1 (head accumulation) + bf16 attn output ----------
    out4, attn4 = rope_multihead_attention(
        x, x, x, params, mask=None, causal=True, num_heads=H,
        matmul_dtype=jnp.float32, approx_reciprocal=False,
        heads_per_step=1, attn_weights_dtype=jnp.bfloat16)
    jax.block_until_ready(out4)
    np.testing.assert_allclose(np.asarray(out4), np.asarray(ref_out_sa),
                               rtol=2e-2, atol=2e-2)
    np.testing.assert_allclose(np.asarray(attn4).astype(np.float32),
                               np.asarray(ref_attn_sa), rtol=2e-2, atol=2e-2)

    print("KERNEL_OK")
</pallas_src>

<mosaic_0001>
module attributes {stable_mosaic.version = 11 : i64} {
  func.func @_rope_mha_kernel(%arg0: i32, %arg1: i32, %arg2: memref<1x128x256xf32, #tpu.memory_space<vmem>>, %arg3: memref<2x256x384xf32, #tpu.memory_space<vmem>>, %arg4: memref<2x1x384xf32, #tpu.memory_space<vmem>>, %arg5: memref<1x256x256xf32, #tpu.memory_space<vmem>>, %arg6: memref<1x256xf32, #tpu.memory_space<vmem>>, %arg7: memref<128x128xf32, #tpu.memory_space<vmem>>, %arg8: memref<128x128xf32, #tpu.memory_space<vmem>>, %arg9: memref<1x128x256xf32, #tpu.memory_space<vmem>>, %arg10: memref<1x2x128x128xf32, #tpu.memory_space<vmem>>) attributes {dimension_semantics = [#tpu.dimension_semantics<parallel>, #tpu.dimension_semantics<arbitrary>], iteration_bounds = array<i64: 2, 1>, scalar_prefetch = 0 : i64, scratch_operands = 0 : i64, tpu.core_type = #tpu.core_type<tc>, window_params = [{transform_indices = @transform_0, window_bounds = array<i64: 1, 128, 256>}, {transform_indices = @transform_1, window_bounds = array<i64: 2, 256, 384>}, {transform_indices = @transform_2, window_bounds = array<i64: 2, 1, 384>}, {transform_indices = @transform_3, window_bounds = array<i64: 1, 256, 256>}, {pipeline_mode = #tpu.pipeline_mode<synchronous>, transform_indices = @transform_4, window_bounds = array<i64: 1, 256>}, {pipeline_mode = #tpu.pipeline_mode<synchronous>, transform_indices = @transform_5, window_bounds = array<i64: 128, 128>}, {pipeline_mode = #tpu.pipeline_mode<synchronous>, transform_indices = @transform_6, window_bounds = array<i64: 128, 128>}, {transform_indices = @transform_7, window_bounds = array<i64: 1, 128, 256>}, {transform_indices = @transform_8, window_bounds = array<i64: 1, 2, 128, 128>}]} {
    %c0 = arith.constant 0 : index
    %c0_0 = arith.constant 0 : index
    %c0_1 = arith.constant 0 : index
    %0 = vector.load %arg2[%c0, %c0_0, %c0_1] : memref<1x128x256xf32, #tpu.memory_space<vmem>>, vector<1x128x256xf32>
    %1 = vector.shape_cast %0 : vector<1x128x256xf32> to vector<128x256xf32>
    %c0_2 = arith.constant 0 : index
    %c0_3 = arith.constant 0 : index
    %2 = vector.load %arg7[%c0_2, %c0_3] : memref<128x128xf32, #tpu.memory_space<vmem>>, vector<128x128xf32>
    %c0_4 = arith.constant 0 : index
    %c0_5 = arith.constant 0 : index
    %3 = vector.load %arg8[%c0_4, %c0_5] : memref<128x128xf32, #tpu.memory_space<vmem>>, vector<128x128xf32>
    %4 = tpu.iota {dimensions = array<i32: 0>} : vector<128x128xi32>
    %5 = tpu.iota {dimensions = array<i32: 1>} : vector<128x128xi32>
    %6 = arith.cmpi sge, %4, %5 : vector<128x128xi32>
    %c0_6 = arith.constant 0 : index
    %c0_7 = arith.constant 0 : index
    %c0_8 = arith.constant 0 : index
    %7 = vector.load %arg3[%c0_6, %c0_7, %c0_8] : memref<2x256x384xf32, #tpu.memory_space<vmem>>, vector<1x256x384xf32>
    %8 = vector.shape_cast %7 : vector<1x256x384xf32> to vector<256x384xf32>
    %c0_9 = arith.constant 0 : index
    %c0_10 = arith.constant 0 : index
    %c0_11 = arith.constant 0 : index
    %9 = vector.load %arg4[%c0_9, %c0_10, %c0_11] : memref<2x1x384xf32, #tpu.memory_space<vmem>>, vector<1x1x384xf32>
    %10 = vector.shape_cast %9 : vector<1x1x384xf32> to vector<1x384xf32>
    %cst = arith.constant dense<0.000000e+00> : vector<128x384xf32>
    %11 = tpu.matmul %1, %8, %cst {dimension_numbers = #tpu.dot_dimension_numbers<[1], [0], [0], [1], [0, 0, 1, 1], [], []>} : vector<128x256xf32>, vector<256x384xf32>, vector<128x384xf32> -> vector<128x384xf32>
    %12 = vector.broadcast %10 : vector<1x384xf32> to vector<128x384xf32>
    %13 = arith.addf %11, %12 : vector<128x384xf32>
    %14 = vector.extract_strided_slice %13 {offsets = [0, 0], sizes = [128, 128], strides = [1, 1]} : vector<128x384xf32> to vector<128x128xf32>
    %15 = vector.extract_strided_slice %13 {offsets = [0, 128], sizes = [128, 128], strides = [1, 1]} : vector<128x384xf32> to vector<128x128xf32>
    %16 = vector.extract_strided_slice %13 {offsets = [0, 256], sizes = [128, 128], strides = [1, 1]} : vector<128x384xf32> to vector<128x128xf32>
    %17 = arith.mulf %14, %2 : vector<128x128xf32>
    %c64_i32 = arith.constant 64 : i32
    %18 = tpu.dynamic_rotate %14 by %c64_i32 dim 1 : vector<128x128xf32>, i32 -> vector<128x128xf32>
    %19 = arith.mulf %18, %3 : vector<128x128xf32>
    %20 = arith.addf %17, %19 : vector<128x128xf32>
    %21 = arith.mulf %15, %2 : vector<128x128xf32>
    %c64_i32_12 = arith.constant 64 : i32
    %22 = tpu.dynamic_rotate %15 by %c64_i32_12 dim 1 : vector<128x128xf32>, i32 -> vector<128x128xf32>
    %23 = arith.mulf %22, %3 : vector<128x128xf32>
    %24 = arith.addf %21, %23 : vector<128x128xf32>
    %cst_13 = arith.constant dense<0.000000e+00> : vector<128x128xf32>
    %25 = tpu.matmul %20, %24, %cst_13 {dimension_numbers = #tpu.dot_dimension_numbers<[1], [1], [0], [0], [0, 0, 1, 0], [], []>} : vector<128x128xf32>, vector<128x128xf32>, vector<128x128xf32> -> vector<128x128xf32>
    %cst_14 = arith.constant -1.000000e+09 : f32
    %26 = vector.broadcast %cst_14 : f32 to vector<128x128xf32>
    %27 = arith.select %6, %25, %26 : vector<128x128xi1>, vector<128x128xf32>
    %cst_15 = arith.constant dense<0xFF800000> : vector<128xf32>
    %28 = vector.multi_reduction <maximumf>, %27, %cst_15 [1] : vector<128x128xf32> to vector<128xf32>
    %29 = vector.shape_cast %28 : vector<128xf32> to vector<128x1xf32>
    %30 = vector.broadcast %29 : vector<128x1xf32> to vector<128x128xf32>
    %31 = arith.subf %27, %30 : vector<128x128xf32>
    %32 = math.exp %31 : vector<128x128xf32>
    %cst_16 = arith.constant dense<0.000000e+00> : vector<128xf32>
    %33 = vector.multi_reduction <add>, %32, %cst_16 [1] : vector<128x128xf32> to vector<128xf32>
    %34 = vector.shape_cast %33 : vector<128xf32> to vector<128x1xf32>
    %cst_17 = arith.constant 1.000000e+00 : f32
    %35 = vector.broadcast %cst_17 : f32 to vector<128x1xf32>
    %36 = arith.divf %35, %34 : vector<128x1xf32>
    %37 = vector.broadcast %36 : vector<128x1xf32> to vector<128x128xf32>
    %38 = arith.mulf %32, %37 : vector<128x128xf32>
    %c0_18 = arith.constant 0 : index
    %c0_19 = arith.constant 0 : index
    %c0_20 = arith.constant 0 : index
    %c0_21 = arith.constant 0 : index
    %39 = vector.load %arg10[%c0_18, %c0_19, %c0_20, %c0_21] : memref<1x2x128x128xf32, #tpu.memory_space<vmem>>, vector<1x1x128x128xf32>
    %40 = vector.shape_cast %39 : vector<1x1x128x128xf32> to vector<128x128xf32>
    %41 = vector.shape_cast %38 : vector<128x128xf32> to vector<1x1x128x128xf32>
    tpu.vector_store %arg10[%c0_18, %c0_19, %c0_20, %c0_21], %41 {strides = array<i32>} : memref<1x2x128x128xf32, #tpu.memory_space<vmem>>, vector<1x1x128x128xf32>,
    %cst_22 = arith.constant dense<0.000000e+00> : vector<128x128xf32>
    %42 = tpu.matmul %38, %16, %cst_22 {dimension_numbers = #tpu.dot_dimension_numbers<[1], [0], [0], [1], [0, 0, 1, 1], [], []>} : vector<128x128xf32>, vector<128x128xf32>, vector<128x128xf32> -> vector<128x128xf32>
    %c1 = arith.constant 1 : index
    %c0_23 = arith.constant 0 : index
    %c0_24 = arith.constant 0 : index
    %43 = vector.load %arg3[%c1, %c0_23, %c0_24] : memref<2x256x384xf32, #tpu.memory_space<vmem>>, vector<1x256x384xf32>
    %44 = vector.shape_cast %43 : vector<1x256x384xf32> to vector<256x384xf32>
    %c1_25 = arith.constant 1 : index
    %c0_26 = arith.constant 0 : index
    %c0_27 = arith.constant 0 : index
    %45 = vector.load %arg4[%c1_25, %c0_26, %c0_27] : memref<2x1x384xf32, #tpu.memory_space<vmem>>, vector<1x1x384xf32>
    %46 = vector.shape_cast %45 : vector<1x1x384xf32> to vector<1x384xf32>
    %cst_28 = arith.constant dense<0.000000e+00> : vector<128x384xf32>
    %47 = tpu.matmul %1, %44, %cst_28 {dimension_numbers = #tpu.dot_dimension_numbers<[1], [0], [0], [1], [0, 0, 1, 1], [], []>} : vector<128x256xf32>, vector<256x384xf32>, vector<128x384xf32> -> vector<128x384xf32>
    %48 = vector.broadcast %46 : vector<1x384xf32> to vector<128x384xf32>
    %49 = arith.addf %47, %48 : vector<128x384xf32>
    %50 = vector.extract_strided_slice %49 {offsets = [0, 0], sizes = [128, 128], strides = [1, 1]} : vector<128x384xf32> to vector<128x128xf32>
    %51 = vector.extract_strided_slice %49 {offsets = [0, 128], sizes = [128, 128], strides = [1, 1]} : vector<128x384xf32> to vector<128x128xf32>
    %52 = vector.extract_strided_slice %49 {offsets = [0, 256], sizes = [128, 128], strides = [1, 1]} : vector<128x384xf32> to vector<128x128xf32>
    %53 = arith.mulf %50, %2 : vector<128x128xf32>
    %c64_i32_29 = arith.constant 64 : i32
    %54 = tpu.dynamic_rotate %50 by %c64_i32_29 dim 1 : vector<128x128xf32>, i32 -> vector<128x128xf32>
    %55 = arith.mulf %54, %3 : vector<128x128xf32>
    %56 = arith.addf %53, %55 : vector<128x128xf32>
    %57 = arith.mulf %51, %2 : vector<128x128xf32>
    %c64_i32_30 = arith.constant 64 : i32
    %58 = tpu.dynamic_rotate %51 by %c64_i32_30 dim 1 : vector<128x128xf32>, i32 -> vector<128x128xf32>
    %59 = arith.mulf %58, %3 : vector<128x128xf32>
    %60 = arith.addf %57, %59 : vector<128x128xf32>
    %cst_31 = arith.constant dense<0.000000e+00> : vector<128x128xf32>
    %61 = tpu.matmul %56, %60, %cst_31 {dimension_numbers = #tpu.dot_dimension_numbers<[1], [1], [0], [0], [0, 0, 1, 0], [], []>} : vector<128x128xf32>, vector<128x128xf32>, vector<128x128xf32> -> vector<128x128xf32>
    %cst_32 = arith.constant -1.000000e+09 : f32
    %62 = vector.broadcast %cst_32 : f32 to vector<128x128xf32>
    %63 = arith.select %6, %61, %62 : vector<128x128xi1>, vector<128x128xf32>
    %cst_33 = arith.constant dense<0xFF800000> : vector<128xf32>
    %64 = vector.multi_reduction <maximumf>, %63, %cst_33 [1] : vector<128x128xf32> to vector<128xf32>
    %65 = vector.shape_cast %64 : vector<128xf32> to vector<128x1xf32>
    %66 = vector.broadcast %65 : vector<128x1xf32> to vector<128x128xf32>
    %67 = arith.subf %63, %66 : vector<128x128xf32>
    %68 = math.exp %67 : vector<128x128xf32>
    %cst_34 = arith.constant dense<0.000000e+00> : vector<128xf32>
    %69 = vector.multi_reduction <add>, %68, %cst_34 [1] : vector<128x128xf32> to vector<128xf32>
    %70 = vector.shape_cast %69 : vector<128xf32> to vector<128x1xf32>
    %cst_35 = arith.constant 1.000000e+00 : f32
    %71 = vector.broadcast %cst_35 : f32 to vector<128x1xf32>
    %72 = arith.divf %71, %70 : vector<128x1xf32>
    %73 = vector.broadcast %72 : vector<128x1xf32> to vector<128x128xf32>
    %74 = arith.mulf %68, %73 : vector<128x128xf32>
    %c0_36 = arith.constant 0 : index
    %c1_37 = arith.constant 1 : index
    %c0_38 = arith.constant 0 : index
    %c0_39 = arith.constant 0 : index
    %75 = vector.load %arg10[%c0_36, %c1_37, %c0_38, %c0_39] : memref<1x2x128x128xf32, #tpu.memory_space<vmem>>, vector<1x1x128x128xf32>
    %76 = vector.shape_cast %75 : vector<1x1x128x128xf32> to vector<128x128xf32>
    %77 = vector.shape_cast %74 : vector<128x128xf32> to vector<1x1x128x128xf32>
    tpu.vector_store %arg10[%c0_36, %c1_37, %c0_38, %c0_39], %77 {strides = array<i32>} : memref<1x2x128x128xf32, #tpu.memory_space<vmem>>, vector<1x1x128x128xf32>,
    %cst_40 = arith.constant dense<0.000000e+00> : vector<128x128xf32>
    %78 = tpu.matmul %74, %52, %cst_40 {dimension_numbers = #tpu.dot_dimension_numbers<[1], [0], [0], [1], [0, 0, 1, 1], [], []>} : vector<128x128xf32>, vector<128x128xf32>, vector<128x128xf32> -> vector<128x128xf32>
    %79 = tpu.concatenate %42, %78 in 1 : vector<128x128xf32>, vector<128x128xf32> -> vector<128x256xf32>
    %c0_41 = arith.constant 0 : index
    %c0_42 = arith.constant 0 : index
    %c0_43 = arith.constant 0 : index
    %80 = vector.load %arg5[%c0_41, %c0_42, %c0_43] : memref<1x256x256xf32, #tpu.memory_space<vmem>>, vector<1x256x256xf32>
    %81 = vector.shape_cast %80 : vector<1x256x256xf32> to vector<256x256xf32>
    %cst_44 = arith.constant dense<0.000000e+00> : vector<128x256xf32>
    %82 = tpu.matmul %79, %81, %cst_44 {dimension_numbers = #tpu.dot_dimension_numbers<[1], [0], [0], [1], [0, 0, 1, 1], [], []>} : vector<128x256xf32>, vector<256x256xf32>, vector<128x256xf32> -> vector<128x256xf32>
    %c0_i32 = arith.constant 0 : i32
    %83 = arith.cmpi eq, %arg1, %c0_i32 : i32
    %84 = arith.extui %83 : i1 to i32
    %c0_i32_45 = arith.constant 0 : i32
    %85 = arith.cmpi ne, %84, %c0_i32_45 : i32
    scf.if %85 {
      %c0_48 = arith.constant 0 : index
      %c0_49 = arith.constant 0 : index
      %89 = vector.load %arg6[%c0_48, %c0_49] : memref<1x256xf32, #tpu.memory_space<vmem>>, vector<1x256xf32>
      %90 = vector.broadcast %89 : vector<1x256xf32> to vector<128x256xf32>
      %91 = arith.addf %82, %90 : vector<128x256xf32>
      %c0_50 = arith.constant 0 : index
      %c0_51 = arith.constant 0 : index
      %c0_52 = arith.constant 0 : index
      %92 = vector.load %arg9[%c0_50, %c0_51, %c0_52] : memref<1x128x256xf32, #tpu.memory_space<vmem>>, vector<1x128x256xf32>
      %93 = vector.shape_cast %92 : vector<1x128x256xf32> to vector<128x256xf32>
      %94 = vector.shape_cast %91 : vector<128x256xf32> to vector<1x128x256xf32>
      tpu.vector_store %arg9[%c0_50, %c0_51, %c0_52], %94 {strides = array<i32>} : memref<1x128x256xf32, #tpu.memory_space<vmem>>, vector<1x128x256xf32>,
    } else {
    }
    %c0_i32_46 = arith.constant 0 : i32
    %86 = arith.cmpi sgt, %arg1, %c0_i32_46 : i32
    %87 = arith.extui %86 : i1 to i32
    %c0_i32_47 = arith.constant 0 : i32
    %88 = arith.cmpi ne, %87, %c0_i32_47 : i32
    scf.if %88 {
      %c0_48 = arith.constant 0 : index
      %c0_49 = arith.constant 0 : index
      %c0_50 = arith.constant 0 : index
      %89 = vector.load %arg9[%c0_48, %c0_49, %c0_50] : memref<1x128x256xf32, #tpu.memory_space<vmem>>, vector<1x128x256xf32>
      %90 = vector.shape_cast %89 : vector<1x128x256xf32> to vector<128x256xf32>
      %91 = arith.addf %90, %82 : vector<128x256xf32>
      %c0_51 = arith.constant 0 : index
      %c0_52 = arith.constant 0 : index
      %c0_53 = arith.constant 0 : index
      %92 = vector.load %arg9[%c0_51, %c0_52, %c0_53] : memref<1x128x256xf32, #tpu.memory_space<vmem>>, vector<1x128x256xf32>
      %93 = vector.shape_cast %92 : vector<1x128x256xf32> to vector<128x256xf32>
      %94 = vector.shape_cast %91 : vector<128x256xf32> to vector<1x128x256xf32>
      tpu.vector_store %arg9[%c0_51, %c0_52, %c0_53], %94 {strides = array<i32>} : memref<1x128x256xf32, #tpu.memory_space<vmem>>, vector<1x128x256xf32>,
    } else {
    }
    return
  }
  func.func @transform_0(%arg0: i32, %arg1: i32) -> (i32, i32, i32) {
    %c0_i32 = arith.constant 0 : i32
    %c0_i32_0 = arith.constant 0 : i32
    %c0_i32_1 = arith.constant 0 : i32
    return %arg0, %c0_i32, %c0_i32_0 : i32, i32, i32
  }
  func.func @transform_1(%arg0: i32, %arg1: i32) -> (i32, i32, i32) {
    %c0_i32 = arith.constant 0 : i32
    %c0_i32_0 = arith.constant 0 : i32
    %c0_i32_1 = arith.constant 0 : i32
    return %arg1, %c0_i32, %c0_i32_0 : i32, i32, i32
  }
  func.func @transform_2(%arg0: i32, %arg1: i32) -> (i32, i32, i32) {
    %c0_i32 = arith.constant 0 : i32
    %c0_i32_0 = arith.constant 0 : i32
    %c0_i32_1 = arith.constant 0 : i32
    return %arg1, %c0_i32, %c0_i32_0 : i32, i32, i32
  }
  func.func @transform_3(%arg0: i32, %arg1: i32) -> (i32, i32, i32) {
    %c0_i32 = arith.constant 0 : i32
    %c0_i32_0 = arith.constant 0 : i32
    %c0_i32_1 = arith.constant 0 : i32
    return %arg1, %c0_i32, %c0_i32_0 : i32, i32, i32
  }
  func.func @transform_4(%arg0: i32, %arg1: i32) -> (i32, i32) {
    %c0_i32 = arith.constant 0 : i32
    %c0_i32_0 = arith.constant 0 : i32
    %c0_i32_1 = arith.constant 0 : i32
    return %c0_i32, %c0_i32_0 : i32, i32
  }
  func.func @transform_5(%arg0: i32, %arg1: i32) -> (i32, i32) {
    %c0_i32 = arith.constant 0 : i32
    %c0_i32_0 = arith.constant 0 : i32
    %c0_i32_1 = arith.constant 0 : i32
    return %c0_i32, %c0_i32_0 : i32, i32
  }
  func.func @transform_6(%arg0: i32, %arg1: i32) -> (i32, i32) {
    %c0_i32 = arith.constant 0 : i32
    %c0_i32_0 = arith.constant 0 : i32
    %c0_i32_1 = arith.constant 0 : i32
    return %c0_i32, %c0_i32_0 : i32, i32
  }
  func.func @transform_7(%arg0: i32, %arg1: i32) -> (i32, i32, i32) {
    %c0_i32 = arith.constant 0 : i32
    %c0_i32_0 = arith.constant 0 : i32
    %c0_i32_1 = arith.constant 0 : i32
    return %arg0, %c0_i32, %c0_i32_0 : i32, i32, i32
  }
  func.func @transform_8(%arg0: i32, %arg1: i32) -> (i32, i32, i32, i32) {
    %c0_i32 = arith.constant 0 : i32
    %c0_i32_0 = arith.constant 0 : i32
    %c0_i32_1 = arith.constant 0 : i32
    return %arg0, %arg1, %c0_i32, %c0_i32_0 : i32, i32, i32, i32
  }
}

</mosaic_0001>

<llo_original>
// kernel: tpu_custom_call.1
$region0: #{tpu_custom_call.1}
  #allocation0 [shape = 'u32[]', space=smem, size = 0x4, offset = 0x4, fixed_abs, tag = 'smem constant byte address 0x4 - core index']
  #allocation1 [shape = 'u32[144,128]{1,0:T(1,128)}', space=vmem, size = 0x12000, scoped, tag = 'internal scratch']
  %s0 = inlined_call_operand.hbm [shape: f32[2,128,256], index: 0, kind: input, shape index: {}]
  %s1 = inlined_call_operand.hbm [shape: f32[2,256,384], index: 1, kind: input, shape index: {}]
  %s2 = inlined_call_operand.hbm [shape: f32[2,1,384], index: 2, kind: input, shape index: {}]
  %s3 = inlined_call_operand.hbm [shape: f32[1,256,256], index: 3, kind: input, shape index: {}]
  %s4 = inlined_call_operand.vmem [shape: f32[1,256], index: 4, kind: input, shape index: {}]
  %s5 = inlined_call_operand.hbm [shape: f32[128,128], index: 5, kind: input, shape index: {}]
  %s6 = inlined_call_operand.hbm [shape: f32[128,128], index: 6, kind: input, shape index: {}]
  %s7 = inlined_call_operand.hbm [shape: f32[2,128,256], index: 7, kind: output, shape index: {0}]
  %s8 = inlined_call_operand.hbm [shape: f32[2,2,128,128], index: 8, kind: output, shape index: {1}]
  %9 = xla_tuple %s7, %s8
  %s10 = sld [smem:[#allocation0]]
  $region101: #{tpu_custom_call.1} parent=0
    _
  %s12 = ssub.s32 1, %s10
  %s13 = scalar_select 0, %s12, %s10
  $region1: #{tpu_custom_call.1} parent=0
    #allocation2 [shape = 'u8[262144]{0}', space=vmem, size = 0x40000, scoped, tag = 'input window, operand 0']
    #allocation3 [shape = 's32[2]{0}', space=sflag, size = 0x8, scoped, tag = 'scoped memory for tpu_custom_call.1']
    #allocation4 [shape = 's32[2]{0}', space=sflag, size = 0x8, scoped, tag = 'scoped memory for tpu_custom_call.1']
    #allocation5 [shape = 'u8[786432]{0}', space=vmem, size = 0xc0000, scoped, tag = 'input window, operand 1, single buffered']
    #allocation6 [shape = 's32[1]{0}', space=sflag, size = 0x4, scoped, tag = 'scoped memory for tpu_custom_call.1']
    #allocation7 [shape = 'u8[3072]{0}', space=vmem, size = 0xc00, scoped, tag = 'input window, operand 2, single buffered']
    #allocation8 [shape = 'u8[262144]{0}', space=vmem, size = 0x40000, scoped, tag = 'input window, operand 3, single buffered']
    #allocation9 [shape = 's32[1]{0}', space=sflag, size = 0x4, scoped, tag = 'scoped memory for tpu_custom_call.1']
    #allocation10 [shape = 'u8[65536]{0}', space=vmem, size = 0x10000, scoped, tag = 'input window, operand 5, single buffered']
    #allocation11 [shape = 'u8[65536]{0}', space=vmem, size = 0x10000, scoped, tag = 'input window, operand 6, single buffered']
    #allocation12 [shape = 's32[1]{0}', space=sflag, size = 0x4, scoped, tag = 'scoped memory for tpu_custom_call.1']
    #allocation13 [shape = 'u8[262144]{0}', space=vmem, size = 0x40000, scoped, tag = 'output window, operand 0']
    #allocation14 [shape = 'u8[262144]{0}', space=vmem, size = 0x40000, scoped, tag = 'output window, operand 1']
    #allocation15 [shape = 's32[2]{0}', space=sflag, size = 0x8, scoped, tag = 'scoped memory for tpu_custom_call.1']
    %14 = vsyncpa [#allocation3], 0
    %s15 = scalar_lea.sflag [#allocation3], 1
    %16 = vsyncpa %s15, 0
    %17 = vsyncpa [#allocation6], 0
    %18 = vsyncpa [#allocation9], 0
    %19 = vsyncpa [#allocation12], 0
    %20 = vsyncpa [#allocation4], 0
    %s21 = scalar_lea.sflag [#allocation4], 1
    %22 = vsyncpa %s21, 0
    %23 = vsyncpa [#allocation15], 0
    %s24 = scalar_lea.sflag [#allocation15], 1
    %25 = vsyncpa %s24, 0
    loop: start=0, step=1, limit=4
    $region2: #{tpu_custom_call.1} parent=1 // loop_pre_header
      _
    $region3: #{tpu_custom_call.1} parent=1 // loop_header
      %s27 = sphi 0, %s31
      %p28 = scmp.ge.s32.totalorder %s27, 4
      %s34 = sphi 0, %s46
      %s35 = sphi 0, %s42
      %s36 = sphi 0, %s34
      %s37 = sphi 0, %s35
      %s38 = sphi 0, %s36
      %s39 = sphi 0, %s37
      %s49 = sphi 0, %s51
      %s52 = sphi 0, %s49
      %s53 = sphi 0, %s52
      %s69 = sphi 0, %s53
      %s75 = sphi 0, %s77
      %s78 = sphi 0, %s75
      %s79 = sphi 0, %s78
      %s95 = sphi 0, %s79
      %s101 = sphi 0, %s103
      %s104 = sphi 0, %s101
      %s105 = sphi 0, %s104
      %s121 = sphi 0, %s105
      %s127 = sphi 0, %s129
      %s130 = sphi 0, %s127
      %s131 = sphi 0, %s130
      %s147 = sphi 0, %s131
      %s151 = sphi 0, %s151
      %s153 = sphi 0, %s151
      %s154 = sphi 0, %s153
      %s168 = sphi 0, %s154
      %s172 = sphi 0, %s172
      %s174 = sphi 0, %s172
      %s175 = sphi 0, %s174
      %s189 = sphi 0, %s175
      %s193 = sphi 0, %s193
      %s195 = sphi 0, %s193
      %s196 = sphi 0, %s195
      %s210 = sphi 0, %s196
      %s216 = sphi 0, %s218
      %s219 = sphi 0, %s216
      %s220 = sphi 0, %s219
      %s236 = sphi 0, %s220
      %s244 = sphi 0, %s246
      %s247 = sphi 0, %s244
      %s248 = sphi 0, %s247
      %s264 = sphi 0, %s248
    $region4: #{tpu_custom_call.1} parent=1 // loop_header_branch
      %30 = sbr.rel (%p28) target = $region8
    $region5: #{tpu_custom_call.1} parent=1 // loop_body
      %s32 = ssub.s32 %s27, 1
      %s33 = ssub.s32 %s27, 2
      %s40 = sadd.s32 1, %s35
      %p41 = scmp.ge.s32.totalorder %s40, 1
      %s42 = scalar_select %p41, 0, %s40
      %s43 = sadd.s32 1, %s34
      %s44 = scalar_select %p41, %s43, %s34
      %p45 = scmp.ge.s32.totalorder %s44, 2
      %s46 = scalar_select %p45, 0, %s44
      %s47 = ssub.s32 %s34, %s46
      %p48 = scmp.eq.s32.totalorder %s47, 0
      %s50 = sadd.s32 %s49, 1
      %s51 = scalar_select %p48, %s49, %s50
      %p54 = pneg %p48
      %p55 = scmp.eq.s32.totalorder %s27, 1
      %p56 = por %p54, %p55
      %p57 = scmp.ne.s32.totalorder %s49, %s52
      %p58 = scmp.eq.s32.totalorder %s27, 0
      %p59 = por %p57, %p58
      %p60 = scmp.ne.s32.totalorder %s49, %s52
      %p61 = scmp.eq.s32.totalorder %s32, 1
      %p62 = por %p60, %p61
      %p63 = scmp.ne.s32.totalorder %s52, %s53
      %p64 = scmp.eq.s32.totalorder %s32, 0
      %p65 = por %p63, %p64
      %p66 = scmp.ne.s32.totalorder %s52, %s53
      %p67 = scmp.eq.s32.totalorder %s33, 1
      %p68 = por %p66, %p67
      %p70 = scmp.ne.s32.totalorder %s53, %s69
      %p71 = scmp.eq.s32.totalorder %s33, 0
      %p72 = por %p70, %p71
      %s73 = ssub.s32 %s35, %s42
      %p74 = scmp.eq.s32.totalorder %s73, 0
      %s76 = sadd.s32 %s75, 1
      %s77 = scalar_select %p74, %s75, %s76
      %p80 = pneg %p74
      %p81 = scmp.eq.s32.totalorder %s27, 1
      %p82 = por %p80, %p81
      %p83 = scmp.ne.s32.totalorder %s75, %s78
      %p84 = scmp.eq.s32.totalorder %s27, 0
      %p85 = por %p83, %p84
      %p86 = scmp.ne.s32.totalorder %s75, %s78
      %p87 = scmp.eq.s32.totalorder %s32, 1
      %p88 = por %p86, %p87
      %p89 = scmp.ne.s32.totalorder %s78, %s79
      %p90 = scmp.eq.s32.totalorder %s32, 0
      %p91 = por %p89, %p90
      %p92 = scmp.ne.s32.totalorder %s78, %s79
      %p93 = scmp.eq.s32.totalorder %s33, 1
      %p94 = por %p92, %p93
      %p96 = scmp.ne.s32.totalorder %s79, %s95
      %p97 = scmp.eq.s32.totalorder %s33, 0
      %p98 = por %p96, %p97
      %s99 = ssub.s32 %s35, %s42
      %p100 = scmp.eq.s32.totalorder %s99, 0
      %s102 = sadd.s32 %s101, 1
      %s103 = scalar_select %p100, %s101, %s102
      %p106 = pneg %p100
      %p107 = scmp.eq.s32.totalorder %s27, 1
      %p108 = por %p106, %p107
      %p109 = scmp.ne.s32.totalorder %s101, %s104
      %p110 = scmp.eq.s32.totalorder %s27, 0
      %p111 = por %p109, %p110
      %p112 = scmp.ne.s32.totalorder %s101, %s104
      %p113 = scmp.eq.s32.totalorder %s32, 1
      %p114 = por %p112, %p113
      %p115 = scmp.ne.s32.totalorder %s104, %s105
      %p116 = scmp.eq.s32.totalorder %s32, 0
      %p117 = por %p115, %p116
      %p118 = scmp.ne.s32.totalorder %s104, %s105
      %p119 = scmp.eq.s32.totalorder %s33, 1
      %p120 = por %p118, %p119
      %p122 = scmp.ne.s32.totalorder %s105, %s121
      %p123 = scmp.eq.s32.totalorder %s33, 0
      %p124 = por %p122, %p123
      %s125 = ssub.s32 %s35, %s42
      %p126 = scmp.eq.s32.totalorder %s125, 0
      %s128 = sadd.s32 %s127, 1
      %s129 = scalar_select %p126, %s127, %s128
      %p132 = pneg %p126
      %p133 = scmp.eq.s32.totalorder %s27, 1
      %p134 = por %p132, %p133
      %p135 = scmp.ne.s32.totalorder %s127, %s130
      %p136 = scmp.eq.s32.totalorder %s27, 0
      %p137 = por %p135, %p136
      %p138 = scmp.ne.s32.totalorder %s127, %s130
      %p139 = scmp.eq.s32.totalorder %s32, 1
      %p140 = por %p138, %p139
      %p141 = scmp.ne.s32.totalorder %s130, %s131
      %p142 = scmp.eq.s32.totalorder %s32, 0
      %p143 = por %p141, %p142
      %p144 = scmp.ne.s32.totalorder %s130, %s131
      %p145 = scmp.eq.s32.totalorder %s33, 1
      %p146 = por %p144, %p145
      %p148 = scmp.ne.s32.totalorder %s131, %s147
      %p149 = scmp.eq.s32.totalorder %s33, 0
      %p150 = por %p148, %p149
      %s152 = sadd.s32 %s151, 1
      %p155 = scmp.eq.s32.totalorder %s27, 1
      %p156 = scmp.ne.s32.totalorder %s151, %s153
      %p157 = scmp.eq.s32.totalorder %s27, 0
      %p158 = por %p156, %p157
      %p159 = scmp.ne.s32.totalorder %s151, %s153
      %p160 = scmp.eq.s32.totalorder %s32, 1
      %p161 = por %p159, %p160
      %p162 = scmp.ne.s32.totalorder %s153, %s154
      %p163 = scmp.eq.s32.totalorder %s32, 0
      %p164 = por %p162, %p163
      %p165 = scmp.ne.s32.totalorder %s153, %s154
      %p166 = scmp.eq.s32.totalorder %s33, 1
      %p167 = por %p165, %p166
      %p169 = scmp.ne.s32.totalorder %s154, %s168
      %p170 = scmp.eq.s32.totalorder %s33, 0
      %p171 = por %p169, %p170
      %s173 = sadd.s32 %s172, 1
      %p176 = scmp.eq.s32.totalorder %s27, 1
      %p177 = scmp.ne.s32.totalorder %s172, %s174
      %p178 = scmp.eq.s32.totalorder %s27, 0
      %p179 = por %p177, %p178
      %p180 = scmp.ne.s32.totalorder %s172, %s174
      %p181 = scmp.eq.s32.totalorder %s32, 1
      %p182 = por %p180, %p181
      %p183 = scmp.ne.s32.totalorder %s174, %s175
      %p184 = scmp.eq.s32.totalorder %s32, 0
      %p185 = por %p183, %p184
      %p186 = scmp.ne.s32.totalorder %s174, %s175
      %p187 = scmp.eq.s32.totalorder %s33, 1
      %p188 = por %p186, %p187
      %p190 = scmp.ne.s32.totalorder %s175, %s189
      %p191 = scmp.eq.s32.totalorder %s33, 0
      %p192 = por %p190, %p191
      %s194 = sadd.s32 %s193, 1
      %p197 = scmp.eq.s32.totalorder %s27, 1
      %p198 = scmp.ne.s32.totalorder %s193, %s195
      %p199 = scmp.eq.s32.totalorder %s27, 0
      %p200 = por %p198, %p199
      %p201 = scmp.ne.s32.totalorder %s193, %s195
      %p202 = scmp.eq.s32.totalorder %s32, 1
      %p203 = por %p201, %p202
      %p204 = scmp.ne.s32.totalorder %s195, %s196
      %p205 = scmp.eq.s32.totalorder %s32, 0
      %p206 = por %p204, %p205
      %p207 = scmp.ne.s32.totalorder %s195, %s196
      %p208 = scmp.eq.s32.totalorder %s33, 1
      %p209 = por %p207, %p208
      %p211 = scmp.ne.s32.totalorder %s196, %s210
      %p212 = scmp.eq.s32.totalorder %s33, 0
      %p213 = por %p211, %p212
      %s214 = ssub.s32 %s34, %s46
      %p215 = scmp.eq.s32.totalorder %s214, 0
      %s217 = sadd.s32 %s216, 1
      %s218 = scalar_select %p215, %s216, %s217
      %p221 = pneg %p215
      %p222 = scmp.eq.s32.totalorder %s27, 1
      %p223 = por %p221, %p222
      %p224 = scmp.ne.s32.totalorder %s216, %s219
      %p225 = scmp.eq.s32.totalorder %s27, 0
      %p226 = por %p224, %p225
      %p227 = scmp.ne.s32.totalorder %s216, %s219
      %p228 = scmp.eq.s32.totalorder %s32, 1
      %p229 = por %p227, %p228
      %p230 = scmp.ne.s32.totalorder %s219, %s220
      %p231 = scmp.eq.s32.totalorder %s32, 0
      %p232 = por %p230, %p231
      %p233 = scmp.ne.s32.totalorder %s219, %s220
      %p234 = scmp.eq.s32.totalorder %s33, 1
      %p235 = por %p233, %p234
      %p237 = scmp.ne.s32.totalorder %s220, %s236
      %p238 = scmp.eq.s32.totalorder %s33, 0
      %p239 = por %p237, %p238
      %s240 = ssub.s32 %s34, %s46
      %s241 = ssub.s32 %s35, %s42
      %s242 = sor.u32 %s240, %s241
      %p243 = scmp.eq.s32.totalorder %s242, 0
      %s245 = sadd.s32 %s244, 1
      %s246 = scalar_select %p243, %s244, %s245
      %p249 = pneg %p243
      %p250 = scmp.eq.s32.totalorder %s27, 1
      %p251 = por %p249, %p250
      %p252 = scmp.ne.s32.totalorder %s244, %s247
      %p253 = scmp.eq.s32.totalorder %s27, 0
      %p254 = por %p252, %p253
      %p255 = scmp.ne.s32.totalorder %s244, %s247
      %p256 = scmp.eq.s32.totalorder %s32, 1
      %p257 = por %p255, %p256
      %p258 = scmp.ne.s32.totalorder %s247, %s248
      %p259 = scmp.eq.s32.totalorder %s32, 0
      %p260 = por %p258, %p259
      %p261 = scmp.ne.s32.totalorder %s247, %s248
      %p262 = scmp.eq.s32.totalorder %s33, 1
      %p263 = por %p261, %p262
      %p265 = scmp.ne.s32.totalorder %s248, %s264
      %p266 = scmp.eq.s32.totalorder %s33, 0
      %p267 = por %p265, %p266
      %p268 = scmp.le.s32.totalorder 1, %s27
      %p269 = scmp.lt.s32.totalorder %s27, 3
      %p270 = pnand %p268, %p269
      %p271 = pneg %p270
      // Predicated region
      $region9: #{tpu_custom_call.1} parent=5 // pred_check
        _
      $region10: #{tpu_custom_call.1} parent=5 // pred_check_branch
        %273 = sbr.rel (%p270) target = $region12
      $region11: #{tpu_custom_call.1} parent=5 // pred_region
        %s274 = ssub.s32 %s27, 1
        // Predicated region
        $region13: #{tpu_custom_call.1} parent=11 // pred_check
          %p275 = pneg %p91
        $region14: #{tpu_custom_call.1} parent=11 // pred_check_branch
          %277 = sbr.rel (%p275) target = $region16
        $region15: #{tpu_custom_call.1} parent=11 // pred_region
          %s278 = smul.u32 2, %s37
          %s280 = ssub.s32 24576, 24576
          %281 = vsyncadd [#allocation6], %s280
          %s282 = smul.addr %s278, 96
          %s283 = smul.addr %s282, 128
          %s284 = scalar_lea.hbm %s1, %s283
          %s285 = sshll.u32 [#allocation5], 4
          %s286 = int_to_ptr.vmem [resolvable:$true] %s285
          %291 = dma.hbm_to_vmem [thread:$0]  %s284, 24576, %s286, [#allocation6], 384, 384, 24
        $region16: #{tpu_custom_call.1} parent=11 // pred_fallthru
          _
        // Predicated region
        $region17: #{tpu_custom_call.1} parent=11 // pred_check
          %p292 = pneg %p117
        $region18: #{tpu_custom_call.1} parent=11 // pred_check_branch
          %294 = sbr.rel (%p292) target = $region20
        $region19: #{tpu_custom_call.1} parent=11 // pred_region
          %s295 = smul.u32 2, %s37
          %s297 = ssub.s32 96, 96
          %298 = vsyncadd [#allocation6], %s297
          %s299 = smul.addr %s295, 3
          %s300 = smul.addr %s299, 16
          %s301 = scalar_lea.hbm %s2, %s300
          %s302 = sshll.u32 [#allocation7], 4
          %s303 = int_to_ptr.vmem [resolvable:$true] %s302
          %308 = dma.hbm_to_vmem [thread:$0]  %s301, 96, %s303, [#allocation6], 48, 48, 3
        $region20: #{tpu_custom_call.1} parent=11 // pred_fallthru
          _
        // Predicated region
        $region21: #{tpu_custom_call.1} parent=11 // pred_check
          %p309 = pneg %p143
        $region22: #{tpu_custom_call.1} parent=11 // pred_check_branch
          %311 = sbr.rel (%p309) target = $region24
        $region23: #{tpu_custom_call.1} parent=11 // pred_region
          %s313 = ssub.s32 8192, 8192
          %314 = vsyncadd [#allocation9], %s313
          %s315 = smul.addr %s37, 64
          %s316 = smul.addr %s315, 128
          %s317 = scalar_lea.hbm %s3, %s316
          %s318 = sshll.u32 [#allocation8], 4
          %s319 = int_to_ptr.vmem [resolvable:$true] %s318
          %324 = dma.hbm_to_vmem [thread:$0]  %s317, 8192, %s319, [#allocation9], 256, 256, 16
        $region24: #{tpu_custom_call.1} parent=11 // pred_fallthru
          _
        // Predicated region
        $region25: #{tpu_custom_call.1} parent=11 // pred_check
          %p325 = pneg %p164
        $region26: #{tpu_custom_call.1} parent=11 // pred_check_branch
          %327 = sbr.rel (%p325) target = $region28
        $region27: #{tpu_custom_call.1} parent=11 // pred_region
          _
        $region28: #{tpu_custom_call.1} parent=11 // pred_fallthru
          _
        // Predicated region
        $region29: #{tpu_custom_call.1} parent=11 // pred_check
          %p328 = pneg %p185
        $region30: #{tpu_custom_call.1} parent=11 // pred_check_branch
          %330 = sbr.rel (%p328) target = $region32
        $region31: #{tpu_custom_call.1} parent=11 // pred_region
          %s332 = ssub.s32 2048, 2048
          %333 = vsyncadd [#allocation9], %s332
          %s334 = sshll.u32 [#allocation10], 4
          %s335 = int_to_ptr.vmem [resolvable:$true] %s334
          %340 = dma.hbm_to_vmem [thread:$0]  %s5, 2048, %s335, [#allocation9], 128, 128, 8
        $region32: #{tpu_custom_call.1} parent=11 // pred_fallthru
          _
        // Predicated region
        $region33: #{tpu_custom_call.1} parent=11 // pred_check
          %p341 = pneg %p206
        $region34: #{tpu_custom_call.1} parent=11 // pred_check_branch
          %343 = sbr.rel (%p341) target = $region36
        $region35: #{tpu_custom_call.1} parent=11 // pred_region
          %s345 = ssub.s32 2048, 2048
          %346 = vsyncadd [#allocation12], %s345
          %s347 = sshll.u32 [#allocation11], 4
          %s348 = int_to_ptr.vmem [resolvable:$true] %s347
          %353 = dma.hbm_to_vmem [thread:$0]  %s6, 2048, %s348, [#allocation12], 128, 128, 8
        $region36: #{tpu_custom_call.1} parent=11 // pred_fallthru
          _
      $region12: #{tpu_custom_call.1} parent=5 // pred_fallthru
        _
      %p354 = scmp.lt.s32.totalorder %s27, 2
      // Predicated region
      $region37: #{tpu_custom_call.1} parent=5 // pred_check
        %p355 = pneg %p354
      $region38: #{tpu_custom_call.1} parent=5 // pred_check_branch
        %357 = sbr.rel (%p355) target = $region40
      $region39: #{tpu_custom_call.1} parent=5 // pred_region
        // Predicated region
        $region41: #{tpu_custom_call.1} parent=39 // pred_check
          %p358 = pneg %p59
        $region42: #{tpu_custom_call.1} parent=39 // pred_check_branch
          %360 = sbr.rel (%p358) target = $region44
        $region43: #{tpu_custom_call.1} parent=39 // pred_region
          %s361 = sand.u32 %s49, 1
          %s362 = scalar_lea.sflag [#allocation3], %s361
          %s363 = sand.u32 %s49, 1
          %s364 = smul.addr %s363, 256
          %s365 = scalar_lea.vmem [#allocation2], %s364
          %s367 = ssub.s32 4096, 4096
          %368 = vsyncadd %s362, %s367
          %s369 = smul.addr %s34, 32
          %s370 = smul.addr %s369, 128
          %s371 = scalar_lea.hbm %s0, %s370
          %s372 = sshll.u32 %s365, 4
          %s373 = int_to_ptr.vmem [resolvable:$true] %s372
          %378 = dma.hbm_to_vmem [thread:$0]  %s371, 4096, %s373, %s362, 256, 256, 16
        $region44: #{tpu_custom_call.1} parent=39 // pred_fallthru
          _
      $region40: #{tpu_custom_call.1} parent=5 // pred_fallthru
        _
      %p379 = scmp.le.s32.totalorder 1, %s27
      %p380 = scmp.lt.s32.totalorder %s27, 3
      %p381 = pnand %p379, %p380
      %p382 = pneg %p381
      // Predicated region
      $region45: #{tpu_custom_call.1} parent=5 // pred_check
        _
      $region46: #{tpu_custom_call.1} parent=5 // pred_check_branch
        %384 = sbr.rel (%p381) target = $region48
      $region47: #{tpu_custom_call.1} parent=5 // pred_region
        %s385 = ssub.s32 %s27, 1
        %s386 = sand.u32 %s52, 1
        %s387 = scalar_lea.sflag [#allocation3], %s386
        %s388 = sand.u32 %s52, 1
        %s389 = smul.addr %s388, 256
        %s390 = scalar_lea.vmem [#allocation2], %s389
        // Predicated region
        $region49: #{tpu_custom_call.1} parent=47 // pred_check
          %p391 = pneg %p65
        $region50: #{tpu_custom_call.1} parent=47 // pred_check_branch
          %393 = sbr.rel (%p391) target = $region52
        $region51: #{tpu_custom_call.1} parent=47 // pred_region
          %394 = dma.done %s387, 4096
        $region52: #{tpu_custom_call.1} parent=47 // pred_fallthru
          _
        // Predicated region
        $region53: #{tpu_custom_call.1} parent=47 // pred_check
          %p395 = pneg %p91
        $region54: #{tpu_custom_call.1} parent=47 // pred_check_branch
          %397 = sbr.rel (%p395) target = $region56
        $region55: #{tpu_custom_call.1} parent=47 // pred_region
          %398 = dma.done [#allocation6], 24576
        $region56: #{tpu_custom_call.1} parent=47 // pred_fallthru
          _
        // Predicated region
        $region57: #{tpu_custom_call.1} parent=47 // pred_check
          %p399 = pneg %p117
        $region58: #{tpu_custom_call.1} parent=47 // pred_check_branch
          %401 = sbr.rel (%p399) target = $region60
        $region59: #{tpu_custom_call.1} parent=47 // pred_region
          %402 = dma.done [#allocation6], 96
        $region60: #{tpu_custom_call.1} parent=47 // pred_fallthru
          _
        // Predicated region
        $region61: #{tpu_custom_call.1} parent=47 // pred_check
          %p403 = pneg %p143
        $region62: #{tpu_custom_call.1} parent=47 // pred_check_branch
          %405 = sbr.rel (%p403) target = $region64
        $region63: #{tpu_custom_call.1} parent=47 // pred_region
          %406 = dma.done [#allocation9], 8192
        $region64: #{tpu_custom_call.1} parent=47 // pred_fallthru
          _
        // Predicated region
        $region65: #{tpu_custom_call.1} parent=47 // pred_check
          %p407 = pneg %p185
        $region66: #{tpu_custom_call.1} parent=47 // pred_check_branch
          %409 = sbr.rel (%p407) target = $region68
        $region67: #{tpu_custom_call.1} parent=47 // pred_region
          %410 = dma.done [#allocation9], 2048
        $region68: #{tpu_custom_call.1} parent=47 // pred_fallthru
          _
        // Predicated region
        $region69: #{tpu_custom_call.1} parent=47 // pred_check
          %p411 = pneg %p206
        $region70: #{tpu_custom_call.1} parent=47 // pred_check_branch
          %413 = sbr.rel (%p411) target = $region72
        $region71: #{tpu_custom_call.1} parent=47 // pred_region
          %414 = dma.done [#allocation12], 2048
        $region72: #{tpu_custom_call.1} parent=47 // pred_fallthru
          _
        %s415 = sand.u32 %s52, 1
        %s416 = scalar_lea.sflag [#allocation3], %s415
        %s417 = sand.u32 %s52, 1
        %s418 = smul.addr %s417, 256
        %s419 = scalar_lea.vmem [#allocation2], %s418
        %p420 = pneg %p65
        %p421 = pneg %p62
        %p422 = pneg %p91
        %p423 = pneg %p88
        %p424 = pneg %p117
        %p425 = pneg %p114
        %p426 = pneg %p143
        %p427 = pneg %p140
        %p428 = pneg %p164
        %p429 = pneg %p161
        %p430 = pneg %p185
        %p431 = pneg %p182
        %p432 = pneg %p206
        %p433 = pneg %p203
        %p434 = pneg %p232
        %p435 = pneg %p229
        %s436 = sand.u32 %s219, 1
        %s437 = scalar_lea.sflag [#allocation4], %s436
        %s438 = sand.u32 %s219, 1
        %s439 = smul.addr %s438, 256
        %s440 = scalar_lea.vmem [#allocation13], %s439
        %p441 = pneg %p260
        %p442 = pneg %p257
        %s443 = sand.u32 %s247, 1
        %s444 = scalar_lea.sflag [#allocation15], %s443
        %s445 = sand.u32 %s247, 1
        %s446 = smul.addr %s445, 256
        %s447 = scalar_lea.vmem [#allocation14], %s446
        %s448 = smul.u32 2, %s37
        %s449 = smul.u32 2, %s37
        %s450 = smul.u32 2, %s37
        %v451 = vld [vmem:[%s390] sm:$0xff]
        %v452 = vld [vmem:[%s390 + $0x8] sm:$0xff]
        %v453 = vld [vmem:[%s390 + $0x10] sm:$0xff]
        %v454 = vld [vmem:[%s390 + $0x18] sm:$0xff]
        %v455 = vld [vmem:[%s390 + $0x20] sm:$0xff]
        %v456 = vld [vmem:[%s390 + $0x28] sm:$0xff]
        %v457 = vld [vmem:[%s390 + $0x30] sm:$0xff]
        %v458 = vld [vmem:[%s390 + $0x38] sm:$0xff]
        %v459 = vld [vmem:[%s390 + $0x40] sm:$0xff]
        %v460 = vld [vmem:[%s390 + $0x48] sm:$0xff]
        %v461 = vld [vmem:[%s390 + $0x50] sm:$0xff]
        %v462 = vld [vmem:[%s390 + $0x58] sm:$0xff]
        %v463 = vld [vmem:[%s390 + $0x60] sm:$0xff]
        %v464 = vld [vmem:[%s390 + $0x68] sm:$0xff]
        %v465 = vld [vmem:[%s390 + $0x70] sm:$0xff]
        %v466 = vld [vmem:[%s390 + $0x78] sm:$0xff]
        %v467 = vld [vmem:[%s390 + $0x80] sm:$0xff]
        %v468 = vld [vmem:[%s390 + $0x88] sm:$0xff]
        %v469 = vld [vmem:[%s390 + $0x90] sm:$0xff]
        %v470 = vld [vmem:[%s390 + $0x98] sm:$0xff]
        %v471 = vld [vmem:[%s390 + $0xa0] sm:$0xff]
        %v472 = vld [vmem:[%s390 + $0xa8] sm:$0xff]
        %v473 = vld [vmem:[%s390 + $0xb0] sm:$0xff]
        %v474 = vld [vmem:[%s390 + $0xb8] sm:$0xff]
        %v475 = vld [vmem:[%s390 + $0xc0] sm:$0xff]
        %v476 = vld [vmem:[%s390 + $0xc8] sm:$0xff]
        %v477 = vld [vmem:[%s390 + $0xd0] sm:$0xff]
        %v478 = vld [vmem:[%s390 + $0xd8] sm:$0xff]
        %v479 = vld [vmem:[%s390 + $0xe0] sm:$0xff]
        %v480 = vld [vmem:[%s390 + $0xe8] sm:$0xff]
        %v481 = vld [vmem:[%s390 + $0xf0] sm:$0xff]
        %v482 = vld [vmem:[%s390 + $0xf8] sm:$0xff]
        %v483 = vld [vmem:[#allocation10] sm:$0xff]
        %v484 = vld [vmem:[#allocation10 + $0x8] sm:$0xff]
        %v485 = vld [vmem:[#allocation10 + $0x10] sm:$0xff]
        %v486 = vld [vmem:[#allocation10 + $0x18] sm:$0xff]
        %v487 = vld [vmem:[#allocation10 + $0x20] sm:$0xff]
        %v488 = vld [vmem:[#allocation10 + $0x28] sm:$0xff]
        %v489 = vld [vmem:[#allocation10 + $0x30] sm:$0xff]
        %v490 = vld [vmem:[#allocation10 + $0x38] sm:$0xff]
        %v491 = vld [vmem:[#allocation10 + $0x40] sm:$0xff]
        %v492 = vld [vmem:[#allocation10 + $0x48] sm:$0xff]
        %v493 = vld [vmem:[#allocation10 + $0x50] sm:$0xff]
        %v494 = vld [vmem:[#allocation10 + $0x58] sm:$0xff]
        %v495 = vld [vmem:[#allocation10 + $0x60] sm:$0xff]
        %v496 = vld [vmem:[#allocation10 + $0x68] sm:$0xff]
        %v497 = vld [vmem:[#allocation10 + $0x70] sm:$0xff]
        %v498 = vld [vmem:[#allocation10 + $0x78] sm:$0xff]
        %v499 = vld [vmem:[#allocation11] sm:$0xff]
        %v500 = vld [vmem:[#allocation11 + $0x8] sm:$0xff]
        %v501 = vld [vmem:[#allocation11 + $0x10] sm:$0xff]
        %v502 = vld [vmem:[#allocation11 + $0x18] sm:$0xff]
        %v503 = vld [vmem:[#allocation11 + $0x20] sm:$0xff]
        %v504 = vld [vmem:[#allocation11 + $0x28] sm:$0xff]
        %v505 = vld [vmem:[#allocation11 + $0x30] sm:$0xff]
        %v506 = vld [vmem:[#allocation11 + $0x38] sm:$0xff]
        %v507 = vld [vmem:[#allocation11 + $0x40] sm:$0xff]
        %v508 = vld [vmem:[#allocation11 + $0x48] sm:$0xff]
        %v509 = vld [vmem:[#allocation11 + $0x50] sm:$0xff]
        %v510 = vld [vmem:[#allocation11 + $0x58] sm:$0xff]
        %v511 = vld [vmem:[#allocation11 + $0x60] sm:$0xff]
        %v512 = vld [vmem:[#allocation11 + $0x68] sm:$0xff]
        %v513 = vld [vmem:[#allocation11 + $0x70] sm:$0xff]
        %v514 = vld [vmem:[#allocation11 + $0x78] sm:$0xff]
        %v515 = vlaneseq
        %v516 = vshrl.u32 %v515, 7
        %v517 = vadd.s32 %v516, 8
        %v518 = vadd.s32 %v516, 16
        %v519 = vadd.s32 %v516, 24
        %v520 = vadd.s32 %v516, 32
        %v521 = vadd.s32 %v516, 40
        %v522 = vadd.s32 %v516, 48
        %v523 = vadd.s32 %v516, 56
        %v524 = vadd.s32 %v516, 64
        %v525 = vadd.s32 %v516, 72
        %v526 = vadd.s32 %v516, 80
        %v527 = vadd.s32 %v516, 88
        %v528 = vadd.s32 %v516, 96
        %v529 = vadd.s32 %v516, 104
        %v530 = vadd.s32 %v516, 112
        %v531 = vadd.s32 %v516, 120
        %v532 = vlaneseq
        %v533 = vand.u32 %v532, 127
        %vm534 = vcmp.ge.s32.totalorder %v516, %v533
        %vm535 = vcmp.ge.s32.totalorder %v517, %v533
        %vm536 = vcmp.ge.s32.totalorder %v518, %v533
        %vm537 = vcmp.ge.s32.totalorder %v519, %v533
        %vm538 = vcmp.ge.s32.totalorder %v520, %v533
        %vm539 = vcmp.ge.s32.totalorder %v521, %v533
        %vm540 = vcmp.ge.s32.totalorder %v522, %v533
        %vm541 = vcmp.ge.s32.totalorder %v523, %v533
        %vm542 = vcmp.ge.s32.totalorder %v524, %v533
        %vm543 = vcmp.ge.s32.totalorder %v525, %v533
        %vm544 = vcmp.ge.s32.totalorder %v526, %v533
        %vm545 = vcmp.ge.s32.totalorder %v527, %v533
        %vm546 = vcmp.ge.s32.totalorder %v528, %v533
        %vm547 = vcmp.ge.s32.totalorder %v529, %v533
        %vm548 = vcmp.ge.s32.totalorder %v530, %v533
        %vm549 = vcmp.ge.s32.totalorder %v531, %v533
        %v550 = vld [vmem:[#allocation5] sm:$0xff]
        %v551 = vld [vmem:[#allocation5 + $0x8] sm:$0xff]
        %v552 = vld [vmem:[#allocation5 + $0x10] sm:$0xff]
        %v553 = vld [vmem:[#allocation5 + $0x18] sm:$0xff]
        %v554 = vld [vmem:[#allocation5 + $0x20] sm:$0xff]
        %v555 = vld [vmem:[#allocation5 + $0x28] sm:$0xff]
        %v556 = vld [vmem:[#allocation5 + $0x30] sm:$0xff]
        %v557 = vld [vmem:[#allocation5 + $0x38] sm:$0xff]
        %v558 = vld [vmem:[#allocation5 + $0x40] sm:$0xff]
        %v559 = vld [vmem:[#allocation5 + $0x48] sm:$0xff]
        %v560 = vld [vmem:[#allocation5 + $0x50] sm:$0xff]
        %v561 = vld [vmem:[#allocation5 + $0x58] sm:$0xff]
        %v562 = vld [vmem:[#allocation5 + $0x60] sm:$0xff]
        %v563 = vld [vmem:[#allocation5 + $0x68] sm:$0xff]
        %v564 = vld [vmem:[#allocation5 + $0x70] sm:$0xff]
        %v565 = vld [vmem:[#allocation5 + $0x78] sm:$0xff]
        %v566 = vld [vmem:[#allocation5 + $0x80] sm:$0xff]
        %v567 = vld [vmem:[#allocation5 + $0x88] sm:$0xff]
        %v568 = vld [vmem:[#allocation5 + $0x90] sm:$0xff]
        %v569 = vld [vmem:[#allocation5 + $0x98] sm:$0xff]
        %v570 = vld [vmem:[#allocation5 + $0xa0] sm:$0xff]
        %v571 = vld [vmem:[#allocation5 + $0xa8] sm:$0xff]
        %v572 = vld [vmem:[#allocation5 + $0xb0] sm:$0xff]
        %v573 = vld [vmem:[#allocation5 + $0xb8] sm:$0xff]
        %v574 = vld [vmem:[#allocation5 + $0xc0] sm:$0xff]
        %v575 = vld [vmem:[#allocation5 + $0xc8] sm:$0xff]
        %v576 = vld [vmem:[#allocation5 + $0xd0] sm:$0xff]
        %v577 = vld [vmem:[#allocation5 + $0xd8] sm:$0xff]
        %v578 = vld [vmem:[#allocation5 + $0xe0] sm:$0xff]
        %v579 = vld [vmem:[#allocation5 + $0xe8] sm:$0xff]
        %v580 = vld [vmem:[#allocation5 + $0xf0] sm:$0xff]
        %v581 = vld [vmem:[#allocation5 + $0xf8] sm:$0xff]
        %v582 = vld [vmem:[#allocation5 + $0x100] sm:$0xff]
        %v583 = vld [vmem:[#allocation5 + $0x108] sm:$0xff]
        %v584 = vld [vmem:[#allocation5 + $0x110] sm:$0xff]
        %v585 = vld [vmem:[#allocation5 + $0x118] sm:$0xff]
        %v586 = vld [vmem:[#allocation5 + $0x120] sm:$0xff]
        %v587 = vld [vmem:[#allocation5 + $0x128] sm:$0xff]
        %v588 = vld [vmem:[#allocation5 + $0x130] sm:$0xff]
        %v589 = vld [vmem:[#allocation5 + $0x138] sm:$0xff]
        %v590 = vld [vmem:[#allocation5 + $0x140] sm:$0xff]
        %v591 = vld [vmem:[#allocation5 + $0x148] sm:$0xff]
        %v592 = vld [vmem:[#allocation5 + $0x150] sm:$0xff]
        %v593 = vld [vmem:[#allocation5 + $0x158] sm:$0xff]
        %v594 = vld [vmem:[#allocation5 + $0x160] sm:$0xff]
        %v595 = vld [vmem:[#allocation5 + $0x168] sm:$0xff]
        %v596 = vld [vmem:[#allocation5 + $0x170] sm:$0xff]
        %v597 = vld [vmem:[#allocation5 + $0x178] sm:$0xff]
        %v598 = vld [vmem:[#allocation5 + $0x180] sm:$0xff]
        %v599 = vld [vmem:[#allocation5 + $0x188] sm:$0xff]
        %v600 = vld [vmem:[#allocation5 + $0x190] sm:$0xff]
        %v601 = vld [vmem:[#allocation5 + $0x198] sm:$0xff]
        %v602 = vld [vmem:[#allocation5 + $0x1a0] sm:$0xff]
        %v603 = vld [vmem:[#allocation5 + $0x1a8] sm:$0xff]
        %v604 = vld [vmem:[#allocation5 + $0x1b0] sm:$0xff]
        %v605 = vld [vmem:[#allocation5 + $0x1b8] sm:$0xff]
        %v606 = vld [vmem:[#allocation5 + $0x1c0] sm:$0xff]
        %v607 = vld [vmem:[#allocation5 + $0x1c8] sm:$0xff]
        %v608 = vld [vmem:[#allocation5 + $0x1d0] sm:$0xff]
        %v609 = vld [vmem:[#allocation5 + $0x1d8] sm:$0xff]
        %v610 = vld [vmem:[#allocation5 + $0x1e0] sm:$0xff]
        %v611 = vld [vmem:[#allocation5 + $0x1e8] sm:$0xff]
        %v612 = vld [vmem:[#allocation5 + $0x1f0] sm:$0xff]
        %v613 = vld [vmem:[#allocation5 + $0x1f8] sm:$0xff]
        %v614 = vld [vmem:[#allocation5 + $0x200] sm:$0xff]
        %v615 = vld [vmem:[#allocation5 + $0x208] sm:$0xff]
        %v616 = vld [vmem:[#allocation5 + $0x210] sm:$0xff]
        %v617 = vld [vmem:[#allocation5 + $0x218] sm:$0xff]
        %v618 = vld [vmem:[#allocation5 + $0x220] sm:$0xff]
        %v619 = vld [vmem:[#allocation5 + $0x228] sm:$0xff]
        %v620 = vld [vmem:[#allocation5 + $0x230] sm:$0xff]
        %v621 = vld [vmem:[#allocation5 + $0x238] sm:$0xff]
        %v622 = vld [vmem:[#allocation5 + $0x240] sm:$0xff]
        %v623 = vld [vmem:[#allocation5 + $0x248] sm:$0xff]
        %v624 = vld [vmem:[#allocation5 + $0x250] sm:$0xff]
        %v625 = vld [vmem:[#allocation5 + $0x258] sm:$0xff]
        %v626 = vld [vmem:[#allocation5 + $0x260] sm:$0xff]
        %v627 = vld [vmem:[#allocation5 + $0x268] sm:$0xff]
        %v628 = vld [vmem:[#allocation5 + $0x270] sm:$0xff]
        %v629 = vld [vmem:[#allocation5 + $0x278] sm:$0xff]
        %v630 = vld [vmem:[#allocation5 + $0x280] sm:$0xff]
        %v631 = vld [vmem:[#allocation5 + $0x288] sm:$0xff]
        %v632 = vld [vmem:[#allocation5 + $0x290] sm:$0xff]
        %v633 = vld [vmem:[#allocation5 + $0x298] sm:$0xff]
        %v634 = vld [vmem:[#allocation5 + $0x2a0] sm:$0xff]
        %v635 = vld [vmem:[#allocation5 + $0x2a8] sm:$0xff]
        %v636 = vld [vmem:[#allocation5 + $0x2b0] sm:$0xff]
        %v637 = vld [vmem:[#allocation5 + $0x2b8] sm:$0xff]
        %v638 = vld [vmem:[#allocation5 + $0x2c0] sm:$0xff]
        %v639 = vld [vmem:[#allocation5 + $0x2c8] sm:$0xff]
        %v640 = vld [vmem:[#allocation5 + $0x2d0] sm:$0xff]
        %v641 = vld [vmem:[#allocation5 + $0x2d8] sm:$0xff]
        %v642 = vld [vmem:[#allocation5 + $0x2e0] sm:$0xff]
        %v643 = vld [vmem:[#allocation5 + $0x2e8] sm:$0xff]
        %v644 = vld [vmem:[#allocation5 + $0x2f0] sm:$0xff]
        %v645 = vld [vmem:[#allocation5 + $0x2f8] sm:$0xff]
        %v646 = vld [vmem:[#allocation7] sm:$0x7]
        %v648 = vlaneseq
        %v649 = vshrl.u32 %v648, 7
        %v650 = vsub.s32 0, %v649
        %v651 = vrot.slane %v646, %v650
        %v652 = vlaneseq
        %v653 = vshrl.u32 %v652, 7
        %v654 = vsub.s32 1, %v653
        %v655 = vrot.slane %v646, %v654
        %v656 = vlaneseq
        %v657 = vshrl.u32 %v656, 7
        %v658 = vsub.s32 2, %v657
        %v659 = vrot.slane %v646, %v658
        %663 = vmatprep.subr.mxu0 %v596
        %664 = vmatpush1.msra.mxu0 %v595
        %665 = vmatprep.subr.mxu0 %v593
        %666 = vmatpush1.msra.mxu0 %v592
        %667 = vmatprep.subr.mxu0 %v590
        %668 = vmatpush1.msra.mxu0 %v589
        %669 = vmatprep.subr.mxu0 %v587
        %670 = vmatpush1.msra.mxu0 %v586
        %671 = vmatprep.subr.mxu0 %v584
        %672 = vmatpush1.msra.mxu0 %v583
        %673 = vmatprep.subr.mxu0 %v581
        %674 = vmatpush1.msra.mxu0 %v580
        %675 = vmatprep.subr.mxu0 %v578
        %676 = vmatpush1.msra.mxu0 %v577
        %677 = vmatprep.subr.mxu0 %v575
        %678 = vmatpush1.msra.mxu0 %v574
        %679 = vmatprep.subr.mxu0 %v572
        %680 = vmatpush1.msra.mxu0 %v571
        %681 = vmatprep.subr.mxu0 %v569
        %682 = vmatpush1.msra.mxu0 %v568
        %683 = vmatprep.subr.mxu0 %v566
        %684 = vmatpush1.msra.mxu0 %v565
        %685 = vmatprep.subr.mxu0 %v563
        %686 = vmatpush1.msra.mxu0 %v562
        %687 = vmatprep.subr.mxu0 %v560
        %688 = vmatpush1.msra.mxu0 %v559
        %689 = vmatprep.subr.mxu0 %v557
        %690 = vmatpush1.msra.mxu0 %v556
        %691 = vmatprep.subr.mxu0 %v554
        %692 = vmatpush1.msra.mxu0 %v553
        %693 = vmatprep.subr.mxu0 %v551
        %694 = vmatpush1.msra.mxu0 %v550
        %695 = vmatprep.subr.mxu0 %v644
        %696 = vmatpush2.msra.mxu0 %v643
        %697 = vmatprep.subr.mxu0 %v641
        %698 = vmatpush2.msra.mxu0 %v640
        %699 = vmatprep.subr.mxu0 %v638
        %700 = vmatpush2.msra.mxu0 %v637
        %701 = vmatprep.subr.mxu0 %v635
        %702 = vmatpush2.msra.mxu0 %v634
        %703 = vmatprep.subr.mxu0 %v632
        %704 = vmatpush2.msra.mxu0 %v631
        %705 = vmatprep.subr.mxu0 %v629
        %706 = vmatpush2.msra.mxu0 %v628
        %707 = vmatprep.subr.mxu0 %v626
        %708 = vmatpush2.msra.mxu0 %v625
        %709 = vmatprep.subr.mxu0 %v623
        %710 = vmatpush2.msra.mxu0 %v622
        %711 = vmatprep.subr.mxu0 %v620
        %712 = vmatpush2.msra.mxu0 %v619
        %713 = vmatprep.subr.mxu0 %v617
        %714 = vmatpush2.msra.mxu0 %v616
        %715 = vmatprep.subr.mxu0 %v614
        %716 = vmatpush2.msra.mxu0 %v613
        %717 = vmatprep.subr.mxu0 %v611
        %718 = vmatpush2.msra.mxu0 %v610
        %719 = vmatprep.subr.mxu0 %v608
        %720 = vmatpush2.msra.mxu0 %v607
        %721 = vmatprep.subr.mxu0 %v605
        %722 = vmatpush2.msra.mxu0 %v604
        %723 = vmatprep.subr.mxu0 %v602
        %724 = vmatpush2.msra.mxu0 %v601
        %725 = vmatprep.subr.mxu0 %v599
        %726 = vmatpush2.msra.mxu0 %v598
        %727 = vmatprep.mubr.f32.mxu0 %v452
        %728 = vmatmul.mubr.f32.gmra.mxu0 %v451
        %v729 = vpop.f32.mrf.mxu0
        %v730 = vadd.f32 %v651, %v729
        %v731 = vpop.f32.mrf.mxu0
        %v732 = vadd.f32 %v655, %v731
        %733 = vmatprep.mubr.f32.mxu0 %v454
        %734 = vmatmul.mubr.f32.gmra.mxu0 %v453
        %v735 = vpop.f32.mrf.mxu0
        %v736 = vadd.f32 %v651, %v735
        %v737 = vpop.f32.mrf.mxu0
        %v738 = vadd.f32 %v655, %v737
        %739 = vmatprep.mubr.f32.mxu0 %v456
        %740 = vmatmul.mubr.f32.gmra.mxu0 %v455
        %v741 = vpop.f32.mrf.mxu0
        %v742 = vadd.f32 %v651, %v741
        %v743 = vpop.f32.mrf.mxu0
        %v744 = vadd.f32 %v655, %v743
        %745 = vmatprep.mubr.f32.mxu0 %v458
        %746 = vmatmul.mubr.f32.gmra.mxu0 %v457
        %v747 = vpop.f32.mrf.mxu0
        %v748 = vadd.f32 %v651, %v747
        %v749 = vpop.f32.mrf.mxu0
        %v750 = vadd.f32 %v655, %v749
        %751 = vmatprep.mubr.f32.mxu0 %v460
        %752 = vmatmul.mubr.f32.gmra.mxu0 %v459
        %v753 = vpop.f32.mrf.mxu0
        %v754 = vadd.f32 %v651, %v753
        %v755 = vpop.f32.mrf.mxu0
        %v756 = vadd.f32 %v655, %v755
        %757 = vmatprep.mubr.f32.mxu0 %v462
        %758 = vmatmul.mubr.f32.gmra.mxu0 %v461
        %v759 = vpop.f32.mrf.mxu0
        %v760 = vadd.f32 %v651, %v759
        %v761 = vpop.f32.mrf.mxu0
        %v762 = vadd.f32 %v655, %v761
        %763 = vmatprep.mubr.f32.mxu0 %v464
        %764 = vmatmul.mubr.f32.gmra.mxu0 %v463
        %v765 = vpop.f32.mrf.mxu0
        %v766 = vadd.f32 %v651, %v765
        %v767 = vpop.f32.mrf.mxu0
        %v768 = vadd.f32 %v655, %v767
        %769 = vmatprep.mubr.f32.mxu0 %v466
        %770 = vmatmul.mubr.f32.gmra.mxu0 %v465
        %v771 = vpop.f32.mrf.mxu0
        %v772 = vadd.f32 %v651, %v771
        %v773 = vpop.f32.mrf.mxu0
        %v774 = vadd.f32 %v655, %v773
        %775 = vmatprep.mubr.f32.mxu0 %v468
        %776 = vmatmul.mubr.f32.gmra.mxu0 %v467
        %v777 = vpop.f32.mrf.mxu0
        %v778 = vadd.f32 %v651, %v777
        %v779 = vpop.f32.mrf.mxu0
        %v780 = vadd.f32 %v655, %v779
        %781 = vmatprep.mubr.f32.mxu0 %v470
        %782 = vmatmul.mubr.f32.gmra.mxu0 %v469
        %v783 = vpop.f32.mrf.mxu0
        %v784 = vadd.f32 %v651, %v783
        %v785 = vpop.f32.mrf.mxu0
        %v786 = vadd.f32 %v655, %v785
        %787 = vmatprep.mubr.f32.mxu0 %v472
        %788 = vmatmul.mubr.f32.gmra.mxu0 %v471
        %v789 = vpop.f32.mrf.mxu0
        %v790 = vadd.f32 %v651, %v789
        %v791 = vpop.f32.mrf.mxu0
        %v792 = vadd.f32 %v655, %v791
        %793 = vmatprep.mubr.f32.mxu0 %v474
        %794 = vmatmul.mubr.f32.gmra.mxu0 %v473
        %v795 = vpop.f32.mrf.mxu0
        %v796 = vadd.f32 %v651, %v795
        %v797 = vpop.f32.mrf.mxu0
        %v798 = vadd.f32 %v655, %v797
        %799 = vmatprep.mubr.f32.mxu0 %v476
        %800 = vmatmul.mubr.f32.gmra.mxu0 %v475
        %v801 = vpop.f32.mrf.mxu0
        %v802 = vadd.f32 %v651, %v801
        %v803 = vpop.f32.mrf.mxu0
        %v804 = vadd.f32 %v655, %v803
        %805 = vmatprep.mubr.f32.mxu0 %v478
        %806 = vmatmul.mubr.f32.gmra.mxu0 %v477
        %v807 = vpop.f32.mrf.mxu0
        %v808 = vadd.f32 %v651, %v807
        %v809 = vpop.f32.mrf.mxu0
        %v810 = vadd.f32 %v655, %v809
        %811 = vmatprep.mubr.f32.mxu0 %v480
        %812 = vmatmul.mubr.f32.gmra.mxu0 %v479
        %v813 = vpop.f32.mrf.mxu0
        %v814 = vadd.f32 %v651, %v813
        %v815 = vpop.f32.mrf.mxu0
        %v816 = vadd.f32 %v655, %v815
        %817 = vmatprep.mubr.f32.mxu0 %v482
        %818 = vmatmul.mubr.f32.gmra.mxu0 %v481
        %v819 = vpop.f32.mrf.mxu0
        %v820 = vadd.f32 %v651, %v819
        %v821 = vpop.f32.mrf.mxu0
        %v822 = vadd.f32 %v655, %v821
        %823 = vdwg.mxu0
        %824 = vmatprep.subr.mxu0 0.0
        %825 = vmatpush1.msra.mxu0 %v597
        %826 = vmatprep.subr.mxu0 0.0
        %827 = vmatpush1.msra.mxu0 %v594
        %828 = vmatprep.subr.mxu0 0.0
        %829 = vmatpush1.msra.mxu0 %v591
        %830 = vmatprep.subr.mxu0 0.0
        %831 = vmatpush1.msra.mxu0 %v588
        %832 = vmatprep.subr.mxu0 0.0
        %833 = vmatpush1.msra.mxu0 %v585
        %834 = vmatprep.subr.mxu0 0.0
        %835 = vmatpush1.msra.mxu0 %v582
        %836 = vmatprep.subr.mxu0 0.0
        %837 = vmatpush1.msra.mxu0 %v579
        %838 = vmatprep.subr.mxu0 0.0
        %839 = vmatpush1.msra.mxu0 %v576
        %840 = vmatprep.subr.mxu0 0.0
        %841 = vmatpush1.msra.mxu0 %v573
        %842 = vmatprep.subr.mxu0 0.0
        %843 = vmatpush1.msra.mxu0 %v570
        %844 = vmatprep.subr.mxu0 0.0
        %845 = vmatpush1.msra.mxu0 %v567
        %846 = vmatprep.subr.mxu0 0.0
        %847 = vmatpush1.msra.mxu0 %v564
        %848 = vmatprep.subr.mxu0 0.0
        %849 = vmatpush1.msra.mxu0 %v561
        %850 = vmatprep.subr.mxu0 0.0
        %851 = vmatpush1.msra.mxu0 %v558
        %852 = vmatprep.subr.mxu0 0.0
        %853 = vmatpush1.msra.mxu0 %v555
        %854 = vmatprep.subr.mxu0 0.0
        %855 = vmatpush1.msra.mxu0 %v552
        %856 = vmatprep.subr.mxu0 0.0
        %857 = vmatpush2.msra.mxu0 %v645
        %858 = vmatprep.subr.mxu0 0.0
        %859 = vmatpush2.msra.mxu0 %v642
        %860 = vmatprep.subr.mxu0 0.0
        %861 = vmatpush2.msra.mxu0 %v639
        %862 = vmatprep.subr.mxu0 0.0
        %863 = vmatpush2.msra.mxu0 %v636
        %864 = vmatprep.subr.mxu0 0.0
        %865 = vmatpush2.msra.mxu0 %v633
        %866 = vmatprep.subr.mxu0 0.0
        %867 = vmatpush2.msra.mxu0 %v630
        %868 = vmatprep.subr.mxu0 0.0
        %869 = vmatpush2.msra.mxu0 %v627
        %870 = vmatprep.subr.mxu0 0.0
        %871 = vmatpush2.msra.mxu0 %v624
        %872 = vmatprep.subr.mxu0 0.0
        %873 = vmatpush2.msra.mxu0 %v621
        %874 = vmatprep.subr.mxu0 0.0
        %875 = vmatpush2.msra.mxu0 %v618
        %876 = vmatprep.subr.mxu0 0.0
        %877 = vmatpush2.msra.mxu0 %v615
        %878 = vmatprep.subr.mxu0 0.0
        %879 = vmatpush2.msra.mxu0 %v612
        %880 = vmatprep.subr.mxu0 0.0
        %881 = vmatpush2.msra.mxu0 %v609
        %882 = vmatprep.subr.mxu0 0.0
        %883 = vmatpush2.msra.mxu0 %v606
        %884 = vmatprep.subr.mxu0 0.0
        %885 = vmatpush2.msra.mxu0 %v603
        %886 = vmatprep.subr.mxu0 0.0
        %887 = vmatpush2.msra.mxu0 %v600
        %888 = vmatprep.mubr.f32.mxu0 %v452
        %889 = vmatmul.mubr.f32.gmra.mxu0 %v451
        %v890 = vpop.f32.mrf.mxu0
        %v891 = vadd.f32 %v659, %v890
        %v892 = vpop.f32.mrf.mxu0
        %893 = vmatprep.mubr.f32.mxu0 %v454
        %894 = vmatmul.mubr.f32.gmra.mxu0 %v453
        %v895 = vpop.f32.mrf.mxu0
        %v896 = vadd.f32 %v659, %v895
        %v897 = vpop.f32.mrf.mxu0
        %898 = vmatprep.mubr.f32.mxu0 %v456
        %899 = vmatmul.mubr.f32.gmra.mxu0 %v455
        %v900 = vpop.f32.mrf.mxu0
        %v901 = vadd.f32 %v659, %v900
        %v902 = vpop.f32.mrf.mxu0
        %903 = vmatprep.mubr.f32.mxu0 %v458
        %904 = vmatmul.mubr.f32.gmra.mxu0 %v457
        %v905 = vpop.f32.mrf.mxu0
        %v906 = vadd.f32 %v659, %v905
        %v907 = vpop.f32.mrf.mxu0
        %908 = vmatprep.mubr.f32.mxu0 %v460
        %909 = vmatmul.mubr.f32.gmra.mxu0 %v459
        %v910 = vpop.f32.mrf.mxu0
        %v911 = vadd.f32 %v659, %v910
        %v912 = vpop.f32.mrf.mxu0
        %913 = vmatprep.mubr.f32.mxu0 %v462
        %914 = vmatmul.mubr.f32.gmra.mxu0 %v461
        %v915 = vpop.f32.mrf.mxu0
        %v916 = vadd.f32 %v659, %v915
        %v917 = vpop.f32.mrf.mxu0
        %918 = vmatprep.mubr.f32.mxu0 %v464
        %919 = vmatmul.mubr.f32.gmra.mxu0 %v463
        %v920 = vpop.f32.mrf.mxu0
        %v921 = vadd.f32 %v659, %v920
        %v922 = vpop.f32.mrf.mxu0
        %923 = vmatprep.mubr.f32.mxu0 %v466
        %924 = vmatmul.mubr.f32.gmra.mxu0 %v465
        %v925 = vpop.f32.mrf.mxu0
        %v926 = vadd.f32 %v659, %v925
        %v927 = vpop.f32.mrf.mxu0
        %928 = vmatprep.mubr.f32.mxu0 %v468
        %929 = vmatmul.mubr.f32.gmra.mxu0 %v467
        %v930 = vpop.f32.mrf.mxu0
        %v931 = vadd.f32 %v659, %v930
        %v932 = vpop.f32.mrf.mxu0
        %933 = vmatprep.mubr.f32.mxu0 %v470
        %934 = vmatmul.mubr.f32.gmra.mxu0 %v469
        %v935 = vpop.f32.mrf.mxu0
        %v936 = vadd.f32 %v659, %v935
        %v937 = vpop.f32.mrf.mxu0
        %938 = vmatprep.mubr.f32.mxu0 %v472
        %939 = vmatmul.mubr.f32.gmra.mxu0 %v471
        %v940 = vpop.f32.mrf.mxu0
        %v941 = vadd.f32 %v659, %v940
        %v942 = vpop.f32.mrf.mxu0
        %943 = vmatprep.mubr.f32.mxu0 %v474
        %944 = vmatmul.mubr.f32.gmra.mxu0 %v473
        %v945 = vpop.f32.mrf.mxu0
        %v946 = vadd.f32 %v659, %v945
        %v947 = vpop.f32.mrf.mxu0
        %948 = vmatprep.mubr.f32.mxu0 %v476
        %949 = vmatmul.mubr.f32.gmra.mxu0 %v475
        %v950 = vpop.f32.mrf.mxu0
        %v951 = vadd.f32 %v659, %v950
        %v952 = vpop.f32.mrf.mxu0
        %953 = vmatprep.mubr.f32.mxu0 %v478
        %954 = vmatmul.mubr.f32.gmra.mxu0 %v477
        %v955 = vpop.f32.mrf.mxu0
        %v956 = vadd.f32 %v659, %v955
        %v957 = vpop.f32.mrf.mxu0
        %958 = vmatprep.mubr.f32.mxu0 %v480
        %959 = vmatmul.mubr.f32.gmra.mxu0 %v479
        %v960 = vpop.f32.mrf.mxu0
        %v961 = vadd.f32 %v659, %v960
        %v962 = vpop.f32.mrf.mxu0
        %963 = vmatprep.mubr.f32.mxu0 %v482
        %964 = vmatmul.mubr.f32.gmra.mxu0 %v481
        %v965 = vpop.f32.mrf.mxu0
        %v966 = vadd.f32 %v659, %v965
        %v967 = vpop.f32.mrf.mxu0
        %968 = vdwg.mxu0
        %v969 = vmul.f32 %v730, %v483
        %v970 = vmul.f32 %v736, %v484
        %v971 = vmul.f32 %v742, %v485
        %v972 = vmul.f32 %v748, %v486
        %v973 = vmul.f32 %v754, %v487
        %v974 = vmul.f32 %v760, %v488
        %v975 = vmul.f32 %v766, %v489
        %v976 = vmul.f32 %v772, %v490
        %v977 = vmul.f32 %v778, %v491
        %v978 = vmul.f32 %v784, %v492
        %v979 = vmul.f32 %v790, %v493
        %v980 = vmul.f32 %v796, %v494
        %v981 = vmul.f32 %v802, %v495
        %v982 = vmul.f32 %v808, %v496
        %v983 = vmul.f32 %v814, %v497
        %v984 = vmul.f32 %v820, %v498
        %985 = vrot.lane.b32.xlu0 %v730, 64
        %v986 = vpop.permute.xlu0 %985
        %987 = vrot.lane.b32.xlu0 %v736, 64
        %v988 = vpop.permute.xlu0 %987
        %989 = vrot.lane.b32.xlu0 %v742, 64
        %v990 = vpop.permute.xlu0 %989
        %991 = vrot.lane.b32.xlu0 %v748, 64
        %v992 = vpop.permute.xlu0 %991
        %993 = vrot.lane.b32.xlu0 %v754, 64
        %v994 = vpop.permute.xlu0 %993
        %995 = vrot.lane.b32.xlu0 %v760, 64
        %v996 = vpop.permute.xlu0 %995
        %997 = vrot.lane.b32.xlu0 %v766, 64
        %v998 = vpop.permute.xlu0 %997
        %999 = vrot.lane.b32.xlu0 %v772, 64
        %v1000 = vpop.permute.xlu0 %999
        %1001 = vrot.lane.b32.xlu0 %v778, 64
        %v1002 = vpop.permute.xlu0 %1001
        %1003 = vrot.lane.b32.xlu0 %v784, 64
        %v1004 = vpop.permute.xlu0 %1003
        %1005 = vrot.lane.b32.xlu0 %v790, 64
        %v1006 = vpop.permute.xlu0 %1005
        %1007 = vrot.lane.b32.xlu0 %v796, 64
        %v1008 = vpop.permute.xlu0 %1007
        %1009 = vrot.lane.b32.xlu0 %v802, 64
        %v1010 = vpop.permute.xlu0 %1009
        %1011 = vrot.lane.b32.xlu0 %v808, 64
        %v1012 = vpop.permute.xlu0 %1011
        %1013 = vrot.lane.b32.xlu0 %v814, 64
        %v1014 = vpop.permute.xlu0 %1013
        %1015 = vrot.lane.b32.xlu0 %v820, 64
        %v1016 = vpop.permute.xlu0 %1015
        %v1017 = vmul.f32 %v986, %v499
        %v1018 = vmul.f32 %v988, %v500
        %v1019 = vmul.f32 %v990, %v501
        %v1020 = vmul.f32 %v992, %v502
        %v1021 = vmul.f32 %v994, %v503
        %v1022 = vmul.f32 %v996, %v504
        %v1023 = vmul.f32 %v998, %v505
        %v1024 = vmul.f32 %v1000, %v506
        %v1025 = vmul.f32 %v1002, %v507
        %v1026 = vmul.f32 %v1004, %v508
        %v1027 = vmul.f32 %v1006, %v509
        %v1028 = vmul.f32 %v1008, %v510
        %v1029 = vmul.f32 %v1010, %v511
        %v1030 = vmul.f32 %v1012, %v512
        %v1031 = vmul.f32 %v1014, %v513
        %v1032 = vmul.f32 %v1016, %v514
        %v1033 = vadd.f32 %v969, %v1017
        %v1034 = vadd.f32 %v970, %v1018
        %v1035 = vadd.f32 %v971, %v1019
        %v1036 = vadd.f32 %v972, %v1020
        %v1037 = vadd.f32 %v973, %v1021
        %v1038 = vadd.f32 %v974, %v1022
        %v1039 = vadd.f32 %v975, %v1023
        %v1040 = vadd.f32 %v976, %v1024
        %v1041 = vadd.f32 %v977, %v1025
        %v1042 = vadd.f32 %v978, %v1026
        %v1043 = vadd.f32 %v979, %v1027
        %v1044 = vadd.f32 %v980, %v1028
        %v1045 = vadd.f32 %v981, %v1029
        %v1046 = vadd.f32 %v982, %v1030
        %v1047 = vadd.f32 %v983, %v1031
        %v1048 = vadd.f32 %v984, %v1032
        %v1049 = vmul.f32 %v732, %v483
        %v1050 = vmul.f32 %v738, %v484
        %v1051 = vmul.f32 %v744, %v485
        %v1052 = vmul.f32 %v750, %v486
        %v1053 = vmul.f32 %v756, %v487
        %v1054 = vmul.f32 %v762, %v488
        %v1055 = vmul.f32 %v768, %v489
        %v1056 = vmul.f32 %v774, %v490
        %v1057 = vmul.f32 %v780, %v491
        %v1058 = vmul.f32 %v786, %v492
        %v1059 = vmul.f32 %v792, %v493
        %v1060 = vmul.f32 %v798, %v494
        %v1061 = vmul.f32 %v804, %v495
        %v1062 = vmul.f32 %v810, %v496
        %v1063 = vmul.f32 %v816, %v497
        %v1064 = vmul.f32 %v822, %v498
        %1065 = vrot.lane.b32.xlu0 %v732, 64
        %v1066 = vpop.permute.xlu0 %1065
        %1067 = vrot.lane.b32.xlu0 %v738, 64
        %v1068 = vpop.permute.xlu0 %1067
        %1069 = vrot.lane.b32.xlu0 %v744, 64
        %v1070 = vpop.permute.xlu0 %1069
        %1071 = vrot.lane.b32.xlu0 %v750, 64
        %v1072 = vpop.permute.xlu0 %1071
        %1073 = vrot.lane.b32.xlu0 %v756, 64
        %v1074 = vpop.permute.xlu0 %1073
        %1075 = vrot.lane.b32.xlu0 %v762, 64
        %v1076 = vpop.permute.xlu0 %1075
        %1077 = vrot.lane.b32.xlu0 %v768, 64
        %v1078 = vpop.permute.xlu0 %1077
        %1079 = vrot.lane.b32.xlu0 %v774, 64
        %v1080 = vpop.permute.xlu0 %1079
        %1081 = vrot.lane.b32.xlu0 %v780, 64
        %v1082 = vpop.permute.xlu0 %1081
        %1083 = vrot.lane.b32.xlu0 %v786, 64
        %v1084 = vpop.permute.xlu0 %1083
        %1085 = vrot.lane.b32.xlu0 %v792, 64
        %v1086 = vpop.permute.xlu0 %1085
        %1087 = vrot.lane.b32.xlu0 %v798, 64
        %v1088 = vpop.permute.xlu0 %1087
        %1089 = vrot.lane.b32.xlu0 %v804, 64
        %v1090 = vpop.permute.xlu0 %1089
        %1091 = vrot.lane.b32.xlu0 %v810, 64
        %v1092 = vpop.permute.xlu0 %1091
        %1093 = vrot.lane.b32.xlu0 %v816, 64
        %v1094 = vpop.permute.xlu0 %1093
        %1095 = vrot.lane.b32.xlu0 %v822, 64
        %v1096 = vpop.permute.xlu0 %1095
        %v1097 = vmul.f32 %v1066, %v499
        %v1098 = vmul.f32 %v1068, %v500
        %v1099 = vmul.f32 %v1070, %v501
        %v1100 = vmul.f32 %v1072, %v502
        %v1101 = vmul.f32 %v1074, %v503
        %v1102 = vmul.f32 %v1076, %v504
        %v1103 = vmul.f32 %v1078, %v505
        %v1104 = vmul.f32 %v1080, %v506
        %v1105 = vmul.f32 %v1082, %v507
        %v1106 = vmul.f32 %v1084, %v508
        %v1107 = vmul.f32 %v1086, %v509
        %v1108 = vmul.f32 %v1088, %v510
        %v1109 = vmul.f32 %v1090, %v511
        %v1110 = vmul.f32 %v1092, %v512
        %v1111 = vmul.f32 %v1094, %v513
        %v1112 = vmul.f32 %v1096, %v514
        %v1113 = vadd.f32 %v1049, %v1097
        %v1114 = vadd.f32 %v1050, %v1098
        %v1115 = vadd.f32 %v1051, %v1099
        %v1116 = vadd.f32 %v1052, %v1100
        %v1117 = vadd.f32 %v1053, %v1101
        %v1118 = vadd.f32 %v1054, %v1102
        %v1119 = vadd.f32 %v1055, %v1103
        %v1120 = vadd.f32 %v1056, %v1104
        %v1121 = vadd.f32 %v1057, %v1105
        %v1122 = vadd.f32 %v1058, %v1106
        %v1123 = vadd.f32 %v1059, %v1107
        %v1124 = vadd.f32 %v1060, %v1108
        %v1125 = vadd.f32 %v1061, %v1109
        %v1126 = vadd.f32 %v1062, %v1110
        %v1127 = vadd.f32 %v1063, %v1111
        %v1128 = vadd.f32 %v1064, %v1112
        %1129 = vmatprep.subr.mxu0 0.0
        %1130 = vmatpush1.xpose.msra.mxu0 %v1128
        %1131 = vmatprep.subr.mxu0 0.0
        %1132 = vmatpush1.xpose.msra.mxu0 %v1127
        %1133 = vmatprep.subr.mxu0 0.0
        %1134 = vmatpush1.xpose.msra.mxu0 %v1126
        %1135 = vmatprep.subr.mxu0 0.0
        %1136 = vmatpush1.xpose.msra.mxu0 %v1125
        %1137 = vmatprep.subr.mxu0 0.0
        %1138 = vmatpush1.xpose.msra.mxu0 %v1124
        %1139 = vmatprep.subr.mxu0 0.0
        %1140 = vmatpush1.xpose.msra.mxu0 %v1123
        %1141 = vmatprep.subr.mxu0 0.0
        %1142 = vmatpush1.xpose.msra.mxu0 %v1122
        %1143 = vmatprep.subr.mxu0 0.0
        %1144 = vmatpush1.xpose.msra.mxu0 %v1121
        %1145 = vmatprep.subr.mxu0 0.0
        %1146 = vmatpush1.xpose.msra.mxu0 %v1120
        %1147 = vmatprep.subr.mxu0 0.0
        %1148 = vmatpush1.xpose.msra.mxu0 %v1119
        %1149 = vmatprep.subr.mxu0 0.0
        %1150 = vmatpush1.xpose.msra.mxu0 %v1118
        %1151 = vmatprep.subr.mxu0 0.0
        %1152 = vmatpush1.xpose.msra.mxu0 %v1117
        %1153 = vmatprep.subr.mxu0 0.0
        %1154 = vmatpush1.xpose.msra.mxu0 %v1116
        %1155 = vmatprep.subr.mxu0 0.0
        %1156 = vmatpush1.xpose.msra.mxu0 %v1115
        %1157 = vmatprep.subr.mxu0 0.0
        %1158 = vmatpush1.xpose.msra.mxu0 %v1114
        %1159 = vmatprep.subr.mxu0 0.0
        %1160 = vmatpush1.xpose.msra.mxu0 %v1113
        %1161 = vmatprep.subr.mxu0 0.0
        %1162 = vmatpush2.xpose.msra.mxu0 0.0
        %1163 = vmatprep.subr.mxu0 0.0
        %1164 = vmatpush2.xpose.msra.mxu0 0.0
        %1165 = vmatprep.subr.mxu0 0.0
        %1166 = vmatpush2.xpose.msra.mxu0 0.0
        %1167 = vmatprep.subr.mxu0 0.0
        %1168 = vmatpush2.xpose.msra.mxu0 0.0
        %1169 = vmatprep.subr.mxu0 0.0
        %1170 = vmatpush2.xpose.msra.mxu0 0.0
        %1171 = vmatprep.subr.mxu0 0.0
        %1172 = vmatpush2.xpose.msra.mxu0 0.0
        %1173 = vmatprep.subr.mxu0 0.0
        %1174 = vmatpush2.xpose.msra.mxu0 0.0
        %1175 = vmatprep.subr.mxu0 0.0
        %1176 = vmatpush2.xpose.msra.mxu0 0.0
        %1177 = vmatprep.subr.mxu0 0.0
        %1178 = vmatpush2.xpose.msra.mxu0 0.0
        %1179 = vmatprep.subr.mxu0 0.0
        %1180 = vmatpush2.xpose.msra.mxu0 0.0
        %1181 = vmatprep.subr.mxu0 0.0
        %1182 = vmatpush2.xpose.msra.mxu0 0.0
        %1183 = vmatprep.subr.mxu0 0.0
        %1184 = vmatpush2.xpose.msra.mxu0 0.0
        %1185 = vmatprep.subr.mxu0 0.0
        %1186 = vmatpush2.xpose.msra.mxu0 0.0
        %1187 = vmatprep.subr.mxu0 0.0
        %1188 = vmatpush2.xpose.msra.mxu0 0.0
        %1189 = vmatprep.subr.mxu0 0.0
        %1190 = vmatpush2.xpose.msra.mxu0 0.0
        %1191 = vmatprep.subr.mxu0 0.0
        %1192 = vmatpush2.xpose.msra.mxu0 0.0
        %1193 = vmatprep.mubr.f32.mxu0 0.0
        %1194 = vmatmul.mubr.f32.gmra.mxu0 %v1033
        %v1195 = vpop.f32.mrf.mxu0
        %v1196 = vadd.f32 0.0, %v1195
        %v1197 = vpop.f32.mrf.mxu0
        %1198 = vmatprep.mubr.f32.mxu0 0.0
        %1199 = vmatmul.mubr.f32.gmra.mxu0 %v1034
        %v1200 = vpop.f32.mrf.mxu0
        %v1201 = vadd.f32 0.0, %v1200
        %v1202 = vpop.f32.mrf.mxu0
        %1203 = vmatprep.mubr.f32.mxu0 0.0
        %1204 = vmatmul.mubr.f32.gmra.mxu0 %v1035
        %v1205 = vpop.f32.mrf.mxu0
        %v1206 = vadd.f32 0.0, %v1205
        %v1207 = vpop.f32.mrf.mxu0
        %1208 = vmatprep.mubr.f32.mxu0 0.0
        %1209 = vmatmul.mubr.f32.gmra.mxu0 %v1036
        %v1210 = vpop.f32.mrf.mxu0
        %v1211 = vadd.f32 0.0, %v1210
        %v1212 = vpop.f32.mrf.mxu0
        %1213 = vmatprep.mubr.f32.mxu0 0.0
        %1214 = vmatmul.mubr.f32.gmra.mxu0 %v1037
        %v1215 = vpop.f32.mrf.mxu0
        %v1216 = vadd.f32 0.0, %v1215
        %v1217 = vpop.f32.mrf.mxu0
        %1218 = vmatprep.mubr.f32.mxu0 0.0
        %1219 = vmatmul.mubr.f32.gmra.mxu0 %v1038
        %v1220 = vpop.f32.mrf.mxu0
        %v1221 = vadd.f32 0.0, %v1220
        %v1222 = vpop.f32.mrf.mxu0
        %1223 = vmatprep.mubr.f32.mxu0 0.0
        %1224 = vmatmul.mubr.f32.gmra.mxu0 %v1039
        %v1225 = vpop.f32.mrf.mxu0
        %v1226 = vadd.f32 0.0, %v1225
        %v1227 = vpop.f32.mrf.mxu0
        %1228 = vmatprep.mubr.f32.mxu0 0.0
        %1229 = vmatmul.mubr.f32.gmra.mxu0 %v1040
        %v1230 = vpop.f32.mrf.mxu0
        %v1231 = vadd.f32 0.0, %v1230
        %v1232 = vpop.f32.mrf.mxu0
        %1233 = vmatprep.mubr.f32.mxu0 0.0
        %1234 = vmatmul.mubr.f32.gmra.mxu0 %v1041
        %v1235 = vpop.f32.mrf.mxu0
        %v1236 = vadd.f32 0.0, %v1235
        %v1237 = vpop.f32.mrf.mxu0
        %1238 = vmatprep.mubr.f32.mxu0 0.0
        %1239 = vmatmul.mubr.f32.gmra.mxu0 %v1042
        %v1240 = vpop.f32.mrf.mxu0
        %v1241 = vadd.f32 0.0, %v1240
        %v1242 = vpop.f32.mrf.mxu0
        %1243 = vmatprep.mubr.f32.mxu0 0.0
        %1244 = vmatmul.mubr.f32.gmra.mxu0 %v1043
        %v1245 = vpop.f32.mrf.mxu0
        %v1246 = vadd.f32 0.0, %v1245
        %v1247 = vpop.f32.mrf.mxu0
        %1248 = vmatprep.mubr.f32.mxu0 0.0
        %1249 = vmatmul.mubr.f32.gmra.mxu0 %v1044
        %v1250 = vpop.f32.mrf.mxu0
        %v1251 = vadd.f32 0.0, %v1250
        %v1252 = vpop.f32.mrf.mxu0
        %1253 = vmatprep.mubr.f32.mxu0 0.0
        %1254 = vmatmul.mubr.f32.gmra.mxu0 %v1045
        %v1255 = vpop.f32.mrf.mxu0
        %v1256 = vadd.f32 0.0, %v1255
        %v1257 = vpop.f32.mrf.mxu0
        %1258 = vmatprep.mubr.f32.mxu0 0.0
        %1259 = vmatmul.mubr.f32.gmra.mxu0 %v1046
        %v1260 = vpop.f32.mrf.mxu0
        %v1261 = vadd.f32 0.0, %v1260
        %v1262 = vpop.f32.mrf.mxu0
        %1263 = vmatprep.mubr.f32.mxu0 0.0
        %1264 = vmatmul.mubr.f32.gmra.mxu0 %v1047
        %v1265 = vpop.f32.mrf.mxu0
        %v1266 = vadd.f32 0.0, %v1265
        %v1267 = vpop.f32.mrf.mxu0
        %1268 = vmatprep.mubr.f32.mxu0 0.0
        %1269 = vmatmul.mubr.f32.gmra.mxu0 %v1048
        %v1270 = vpop.f32.mrf.mxu0
        %v1271 = vadd.f32 0.0, %v1270
        %v1272 = vpop.f32.mrf.mxu0
        %1273 = vdwg.mxu0
        %v1274 = vsel %vm534, %v1196, -1e+09
        %v1275 = vsel %vm535, %v1201, -1e+09
        %v1276 = vsel %vm536, %v1206, -1e+09
        %v1277 = vsel %vm537, %v1211, -1e+09
        %v1278 = vsel %vm538, %v1216, -1e+09
        %v1279 = vsel %vm539, %v1221, -1e+09
        %v1280 = vsel %vm540, %v1226, -1e+09
        %v1281 = vsel %vm541, %v1231, -1e+09
        %v1282 = vsel %vm542, %v1236, -1e+09
        %v1283 = vsel %vm543, %v1241, -1e+09
        %v1284 = vsel %vm544, %v1246, -1e+09
        %v1285 = vsel %vm545, %v1251, -1e+09
        %v1286 = vsel %vm546, %v1256, -1e+09
        %v1287 = vsel %vm547, %v1261, -1e+09
        %v1288 = vsel %vm548, %v1266, -1e+09
        %v1289 = vsel %vm549, %v1271, -1e+09
        %1290 = vmax.xlane.f32.xlu0 %v1274
        %v1291 = vpop.xlane.xlu0 %1290
        %1292 = vmax.xlane.f32.xlu0 %v1275
        %v1293 = vpop.xlane.xlu0 %1292
        %1294 = vmax.xlane.f32.xlu0 %v1276
        %v1295 = vpop.xlane.xlu0 %1294
        %1296 = vmax.xlane.f32.xlu0 %v1277
        %v1297 = vpop.xlane.xlu0 %1296
        %1298 = vmax.xlane.f32.xlu0 %v1278
        %v1299 = vpop.xlane.xlu0 %1298
        %1300 = vmax.xlane.f32.xlu0 %v1279
        %v1301 = vpop.xlane.xlu0 %1300
        %1302 = vmax.xlane.f32.xlu0 %v1280
        %v1303 = vpop.xlane.xlu0 %1302
        %1304 = vmax.xlane.f32.xlu0 %v1281
        %v1305 = vpop.xlane.xlu0 %1304
        %1306 = vmax.xlane.f32.xlu0 %v1282
        %v1307 = vpop.xlane.xlu0 %1306
        %1308 = vmax.xlane.f32.xlu0 %v1283
        %v1309 = vpop.xlane.xlu0 %1308
        %1310 = vmax.xlane.f32.xlu0 %v1284
        %v1311 = vpop.xlane.xlu0 %1310
        %1312 = vmax.xlane.f32.xlu0 %v1285
        %v1313 = vpop.xlane.xlu0 %1312
        %1314 = vmax.xlane.f32.xlu0 %v1286
        %v1315 = vpop.xlane.xlu0 %1314
        %1316 = vmax.xlane.f32.xlu0 %v1287
        %v1317 = vpop.xlane.xlu0 %1316
        %1318 = vmax.xlane.f32.xlu0 %v1288
        %v1319 = vpop.xlane.xlu0 %1318
        %1320 = vmax.xlane.f32.xlu0 %v1289
        %v1321 = vpop.xlane.xlu0 %1320
        %v1322 = vsub.f32 %v1274, %v1291
        %v1323 = vsub.f32 %v1275, %v1293
        %v1324 = vsub.f32 %v1276, %v1295
        %v1325 = vsub.f32 %v1277, %v1297
        %v1326 = vsub.f32 %v1278, %v1299
        %v1327 = vsub.f32 %v1279, %v1301
        %v1328 = vsub.f32 %v1280, %v1303
        %v1329 = vsub.f32 %v1281, %v1305
        %v1330 = vsub.f32 %v1282, %v1307
        %v1331 = vsub.f32 %v1283, %v1309
        %v1332 = vsub.f32 %v1284, %v1311
        %v1333 = vsub.f32 %v1285, %v1313
        %v1334 = vsub.f32 %v1286, %v1315
        %v1335 = vsub.f32 %v1287, %v1317
        %v1336 = vsub.f32 %v1288, %v1319
        %v1337 = vsub.f32 %v1289, %v1321
        %v1338 = vmul.f32 %v1322, 1.442695
        %v1339 = vpow.pop %v1338
        %v1340 = vmul.f32 %v1323, 1.442695
        %v1341 = vpow.pop %v1340
        %v1342 = vmul.f32 %v1324, 1.442695
        %v1343 = vpow.pop %v1342
        %v1344 = vmul.f32 %v1325, 1.442695
        %v1345 = vpow.pop %v1344
        %v1346 = vmul.f32 %v1326, 1.442695
        %v1347 = vpow.pop %v1346
        %v1348 = vmul.f32 %v1327, 1.442695
        %v1349 = vpow.pop %v1348
        %v1350 = vmul.f32 %v1328, 1.442695
        %v1351 = vpow.pop %v1350
        %v1352 = vmul.f32 %v1329, 1.442695
        %v1353 = vpow.pop %v1352
        %v1354 = vmul.f32 %v1330, 1.442695
        %v1355 = vpow.pop %v1354
        %v1356 = vmul.f32 %v1331, 1.442695
        %v1357 = vpow.pop %v1356
        %v1358 = vmul.f32 %v1332, 1.442695
        %v1359 = vpow.pop %v1358
        %v1360 = vmul.f32 %v1333, 1.442695
        %v1361 = vpow.pop %v1360
        %v1362 = vmul.f32 %v1334, 1.442695
        %v1363 = vpow.pop %v1362
        %v1364 = vmul.f32 %v1335, 1.442695
        %v1365 = vpow.pop %v1364
        %v1366 = vmul.f32 %v1336, 1.442695
        %v1367 = vpow.pop %v1366
        %v1368 = vmul.f32 %v1337, 1.442695
        %v1369 = vpow.pop %v1368
        %1370 = vadd.xlane.f32.xlu0 %v1339
        %v1371 = vpop.xlane.xlu0 %1370
        %1372 = vadd.xlane.f32.xlu0 %v1341
        %v1373 = vpop.xlane.xlu0 %1372
        %1374 = vadd.xlane.f32.xlu0 %v1343
        %v1375 = vpop.xlane.xlu0 %1374
        %1376 = vadd.xlane.f32.xlu0 %v1345
        %v1377 = vpop.xlane.xlu0 %1376
        %1378 = vadd.xlane.f32.xlu0 %v1347
        %v1379 = vpop.xlane.xlu0 %1378
        %1380 = vadd.xlane.f32.xlu0 %v1349
        %v1381 = vpop.xlane.xlu0 %1380
        %1382 = vadd.xlane.f32.xlu0 %v1351
        %v1383 = vpop.xlane.xlu0 %1382
        %1384 = vadd.xlane.f32.xlu0 %v1353
        %v1385 = vpop.xlane.xlu0 %1384
        %1386 = vadd.xlane.f32.xlu0 %v1355
        %v1387 = vpop.xlane.xlu0 %1386
        %1388 = vadd.xlane.f32.xlu0 %v1357
        %v1389 = vpop.xlane.xlu0 %1388
        %1390 = vadd.xlane.f32.xlu0 %v1359
        %v1391 = vpop.xlane.xlu0 %1390
        %1392 = vadd.xlane.f32.xlu0 %v1361
        %v1393 = vpop.xlane.xlu0 %1392
        %1394 = vadd.xlane.f32.xlu0 %v1363
        %v1395 = vpop.xlane.xlu0 %1394
        %1396 = vadd.xlane.f32.xlu0 %v1365
        %v1397 = vpop.xlane.xlu0 %1396
        %1398 = vadd.xlane.f32.xlu0 %v1367
        %v1399 = vpop.xlane.xlu0 %1398
        %1400 = vadd.xlane.f32.xlu0 %v1369
        %v1401 = vpop.xlane.xlu0 %1400
        %v1402 = vrcp.pop %v1371
        %v1403 = vmul.f32 1.0, %v1402
        %v1404 = vrcp.pop %v1373
        %v1405 = vmul.f32 1.0, %v1404
        %v1406 = vrcp.pop %v1375
        %v1407 = vmul.f32 1.0, %v1406
        %v1408 = vrcp.pop %v1377
        %v1409 = vmul.f32 1.0, %v1408
        %v1410 = vrcp.pop %v1379
        %v1411 = vmul.f32 1.0, %v1410
        %v1412 = vrcp.pop %v1381
        %v1413 = vmul.f32 1.0, %v1412
        %v1414 = vrcp.pop %v1383
        %v1415 = vmul.f32 1.0, %v1414
        %v1416 = vrcp.pop %v1385
        %v1417 = vmul.f32 1.0, %v1416
        %v1418 = vrcp.pop %v1387
        %v1419 = vmul.f32 1.0, %v1418
        %v1420 = vrcp.pop %v1389
        %v1421 = vmul.f32 1.0, %v1420
        %v1422 = vrcp.pop %v1391
        %v1423 = vmul.f32 1.0, %v1422
        %v1424 = vrcp.pop %v1393
        %v1425 = vmul.f32 1.0, %v1424
        %v1426 = vrcp.pop %v1395
        %v1427 = vmul.f32 1.0, %v1426
        %v1428 = vrcp.pop %v1397
        %v1429 = vmul.f32 1.0, %v1428
        %v1430 = vrcp.pop %v1399
        %v1431 = vmul.f32 1.0, %v1430
        %v1432 = vrcp.pop %v1401
        %v1433 = vmul.f32 1.0, %v1432
        %v1434 = vmul.f32 %v1339, %v1403
        %v1435 = vmul.f32 %v1341, %v1405
        %v1436 = vmul.f32 %v1343, %v1407
        %v1437 = vmul.f32 %v1345, %v1409
        %v1438 = vmul.f32 %v1347, %v1411
        %v1439 = vmul.f32 %v1349, %v1413
        %v1440 = vmul.f32 %v1351, %v1415
        %v1441 = vmul.f32 %v1353, %v1417
        %v1442 = vmul.f32 %v1355, %v1419
        %v1443 = vmul.f32 %v1357, %v1421
        %v1444 = vmul.f32 %v1359, %v1423
        %v1445 = vmul.f32 %v1361, %v1425
        %v1446 = vmul.f32 %v1363, %v1427
        %v1447 = vmul.f32 %v1365, %v1429
        %v1448 = vmul.f32 %v1367, %v1431
        %v1449 = vmul.f32 %v1369, %v1433
        %1450 = vst [vmem:[%s447] sm:$0xff] %v1434
        %1451 = vst [vmem:[%s447 + $0x8] sm:$0xff] %v1435
        %1452 = vst [vmem:[%s447 + $0x10] sm:$0xff] %v1436
        %1453 = vst [vmem:[%s447 + $0x18] sm:$0xff] %v1437
        %1454 = vst [vmem:[%s447 + $0x20] sm:$0xff] %v1438
        %1455 = vst [vmem:[%s447 + $0x28] sm:$0xff] %v1439
        %1456 = vst [vmem:[%s447 + $0x30] sm:$0xff] %v1440
        %1457 = vst [vmem:[%s447 + $0x38] sm:$0xff] %v1441
        %1458 = vst [vmem:[%s447 + $0x40] sm:$0xff] %v1442
        %1459 = vst [vmem:[%s447 + $0x48] sm:$0xff] %v1443
        %1460 = vst [vmem:[%s447 + $0x50] sm:$0xff] %v1444
        %1461 = vst [vmem:[%s447 + $0x58] sm:$0xff] %v1445
        %1462 = vst [vmem:[%s447 + $0x60] sm:$0xff] %v1446
        %1463 = vst [vmem:[%s447 + $0x68] sm:$0xff] %v1447
        %1464 = vst [vmem:[%s447 + $0x70] sm:$0xff] %v1448
        %1465 = vst [vmem:[%s447 + $0x78] sm:$0xff] %v1449
        %1466 = vmatprep.subr.mxu0 0.0
        %1467 = vmatpush1.msra.mxu0 %v966
        %1468 = vmatprep.subr.mxu0 0.0
        %1469 = vmatpush1.msra.mxu0 %v961
        %1470 = vmatprep.subr.mxu0 0.0
        %1471 = vmatpush1.msra.mxu0 %v956
        %1472 = vmatprep.subr.mxu0 0.0
        %1473 = vmatpush1.msra.mxu0 %v951
        %1474 = vmatprep.subr.mxu0 0.0
        %1475 = vmatpush1.msra.mxu0 %v946
        %1476 = vmatprep.subr.mxu0 0.0
        %1477 = vmatpush1.msra.mxu0 %v941
        %1478 = vmatprep.subr.mxu0 0.0
        %1479 = vmatpush1.msra.mxu0 %v936
        %1480 = vmatprep.subr.mxu0 0.0
        %1481 = vmatpush1.msra.mxu0 %v931
        %1482 = vmatprep.subr.mxu0 0.0
        %1483 = vmatpush1.msra.mxu0 %v926
        %1484 = vmatprep.subr.mxu0 0.0
        %1485 = vmatpush1.msra.mxu0 %v921
        %1486 = vmatprep.subr.mxu0 0.0
        %1487 = vmatpush1.msra.mxu0 %v916
        %1488 = vmatprep.subr.mxu0 0.0
        %1489 = vmatpush1.msra.mxu0 %v911
        %1490 = vmatprep.subr.mxu0 0.0
        %1491 = vmatpush1.msra.mxu0 %v906
        %1492 = vmatprep.subr.mxu0 0.0
        %1493 = vmatpush1.msra.mxu0 %v901
        %1494 = vmatprep.subr.mxu0 0.0
        %1495 = vmatpush1.msra.mxu0 %v896
        %1496 = vmatprep.subr.mxu0 0.0
        %1497 = vmatpush1.msra.mxu0 %v891
        %1498 = vmatprep.subr.mxu0 0.0
        %1499 = vmatpush2.msra.mxu0 0.0
        %1500 = vmatprep.subr.mxu0 0.0
        %1501 = vmatpush2.msra.mxu0 0.0
        %1502 = vmatprep.subr.mxu0 0.0
        %1503 = vmatpush2.msra.mxu0 0.0
        %1504 = vmatprep.subr.mxu0 0.0
        %1505 = vmatpush2.msra.mxu0 0.0
        %1506 = vmatprep.subr.mxu0 0.0
        %1507 = vmatpush2.msra.mxu0 0.0
        %1508 = vmatprep.subr.mxu0 0.0
        %1509 = vmatpush2.msra.mxu0 0.0
        %1510 = vmatprep.subr.mxu0 0.0
        %1511 = vmatpush2.msra.mxu0 0.0
        %1512 = vmatprep.subr.mxu0 0.0
        %1513 = vmatpush2.msra.mxu0 0.0
        %1514 = vmatprep.subr.mxu0 0.0
        %1515 = vmatpush2.msra.mxu0 0.0
        %1516 = vmatprep.subr.mxu0 0.0
        %1517 = vmatpush2.msra.mxu0 0.0
        %1518 = vmatprep.subr.mxu0 0.0
        %1519 = vmatpush2.msra.mxu0 0.0
        %1520 = vmatprep.subr.mxu0 0.0
        %1521 = vmatpush2.msra.mxu0 0.0
        %1522 = vmatprep.subr.mxu0 0.0
        %1523 = vmatpush2.msra.mxu0 0.0
        %1524 = vmatprep.subr.mxu0 0.0
        %1525 = vmatpush2.msra.mxu0 0.0
        %1526 = vmatprep.subr.mxu0 0.0
        %1527 = vmatpush2.msra.mxu0 0.0
        %1528 = vmatprep.subr.mxu0 0.0
        %1529 = vmatpush2.msra.mxu0 0.0
        %1530 = vmatprep.mubr.f32.mxu0 0.0
        %1531 = vmatmul.mubr.f32.gmra.mxu0 %v1434
        %v1532 = vpop.f32.mrf.mxu0
        %v1533 = vadd.f32 0.0, %v1532
        %v1534 = vpop.f32.mrf.mxu0
        %1535 = vmatprep.mubr.f32.mxu0 0.0
        %1536 = vmatmul.mubr.f32.gmra.mxu0 %v1435
        %v1537 = vpop.f32.mrf.mxu0
        %v1538 = vadd.f32 0.0, %v1537
        %v1539 = vpop.f32.mrf.mxu0
        %1540 = vmatprep.mubr.f32.mxu0 0.0
        %1541 = vmatmul.mubr.f32.gmra.mxu0 %v1436
        %v1542 = vpop.f32.mrf.mxu0
        %v1543 = vadd.f32 0.0, %v1542
        %v1544 = vpop.f32.mrf.mxu0
        %1545 = vmatprep.mubr.f32.mxu0 0.0
        %1546 = vmatmul.mubr.f32.gmra.mxu0 %v1437
        %v1547 = vpop.f32.mrf.mxu0
        %v1548 = vadd.f32 0.0, %v1547
        %v1549 = vpop.f32.mrf.mxu0
        %1550 = vmatprep.mubr.f32.mxu0 0.0
        %1551 = vmatmul.mubr.f32.gmra.mxu0 %v1438
        %v1552 = vpop.f32.mrf.mxu0
        %v1553 = vadd.f32 0.0, %v1552
        %v1554 = vpop.f32.mrf.mxu0
        %1555 = vmatprep.mubr.f32.mxu0 0.0
        %1556 = vmatmul.mubr.f32.gmra.mxu0 %v1439
        %v1557 = vpop.f32.mrf.mxu0
        %v1558 = vadd.f32 0.0, %v1557
        %v1559 = vpop.f32.mrf.mxu0
        %1560 = vmatprep.mubr.f32.mxu0 0.0
        %1561 = vmatmul.mubr.f32.gmra.mxu0 %v1440
        %v1562 = vpop.f32.mrf.mxu0
        %v1563 = vadd.f32 0.0, %v1562
        %v1564 = vpop.f32.mrf.mxu0
        %1565 = vmatprep.mubr.f32.mxu0 0.0
        %1566 = vmatmul.mubr.f32.gmra.mxu0 %v1441
        %v1567 = vpop.f32.mrf.mxu0
        %v1568 = vadd.f32 0.0, %v1567
        %v1569 = vpop.f32.mrf.mxu0
        %1570 = vmatprep.mubr.f32.mxu0 0.0
        %1571 = vmatmul.mubr.f32.gmra.mxu0 %v1442
        %v1572 = vpop.f32.mrf.mxu0
        %v1573 = vadd.f32 0.0, %v1572
        %v1574 = vpop.f32.mrf.mxu0
        %1575 = vmatprep.mubr.f32.mxu0 0.0
        %1576 = vmatmul.mubr.f32.gmra.mxu0 %v1443
        %v1577 = vpop.f32.mrf.mxu0
        %v1578 = vadd.f32 0.0, %v1577
        %v1579 = vpop.f32.mrf.mxu0
        %1580 = vmatprep.mubr.f32.mxu0 0.0
        %1581 = vmatmul.mubr.f32.gmra.mxu0 %v1444
        %v1582 = vpop.f32.mrf.mxu0
        %v1583 = vadd.f32 0.0, %v1582
        %v1584 = vpop.f32.mrf.mxu0
        %1585 = vmatprep.mubr.f32.mxu0 0.0
        %1586 = vmatmul.mubr.f32.gmra.mxu0 %v1445
        %v1587 = vpop.f32.mrf.mxu0
        %v1588 = vadd.f32 0.0, %v1587
        %v1589 = vpop.f32.mrf.mxu0
        %1590 = vmatprep.mubr.f32.mxu0 0.0
        %1591 = vmatmul.mubr.f32.gmra.mxu0 %v1446
        %v1592 = vpop.f32.mrf.mxu0
        %v1593 = vadd.f32 0.0, %v1592
        %v1594 = vpop.f32.mrf.mxu0
        %1595 = vmatprep.mubr.f32.mxu0 0.0
        %1596 = vmatmul.mubr.f32.gmra.mxu0 %v1447
        %v1597 = vpop.f32.mrf.mxu0
        %v1598 = vadd.f32 0.0, %v1597
        %v1599 = vpop.f32.mrf.mxu0
        %1600 = vmatprep.mubr.f32.mxu0 0.0
        %1601 = vmatmul.mubr.f32.gmra.mxu0 %v1448
        %v1602 = vpop.f32.mrf.mxu0
        %v1603 = vadd.f32 0.0, %v1602
        %v1604 = vpop.f32.mrf.mxu0
        %1605 = vmatprep.mubr.f32.mxu0 0.0
        %1606 = vmatmul.mubr.f32.gmra.mxu0 %v1449
        %v1607 = vpop.f32.mrf.mxu0
        %v1608 = vadd.f32 0.0, %v1607
        %v1609 = vpop.f32.mrf.mxu0
        %1610 = vdwg.mxu0
        %s1611 = scalar_lea.vmem [#allocation5], 768
        %v1612 = vld [vmem:[%s1611] sm:$0xff]
        %v1613 = vld [vmem:[%s1611 + $0x8] sm:$0xff]
        %v1614 = vld [vmem:[%s1611 + $0x10] sm:$0xff]
        %v1615 = vld [vmem:[%s1611 + $0x18] sm:$0xff]
        %v1616 = vld [vmem:[%s1611 + $0x20] sm:$0xff]
        %v1617 = vld [vmem:[%s1611 + $0x28] sm:$0xff]
        %v1618 = vld [vmem:[%s1611 + $0x30] sm:$0xff]
        %v1619 = vld [vmem:[%s1611 + $0x38] sm:$0xff]
        %v1620 = vld [vmem:[%s1611 + $0x40] sm:$0xff]
        %v1621 = vld [vmem:[%s1611 + $0x48] sm:$0xff]
        %v1622 = vld [vmem:[%s1611 + $0x50] sm:$0xff]
        %v1623 = vld [vmem:[%s1611 + $0x58] sm:$0xff]
        %v1624 = vld [vmem:[%s1611 + $0x60] sm:$0xff]
        %v1625 = vld [vmem:[%s1611 + $0x68] sm:$0xff]
        %v1626 = vld [vmem:[%s1611 + $0x70] sm:$0xff]
        %v1627 = vld [vmem:[%s1611 + $0x78] sm:$0xff]
        %v1628 = vld [vmem:[%s1611 + $0x80] sm:$0xff]
        %v1629 = vld [vmem:[%s1611 + $0x88] sm:$0xff]
        %v1630 = vld [vmem:[%s1611 + $0x90] sm:$0xff]
        %v1631 = vld [vmem:[%s1611 + $0x98] sm:$0xff]
        %v1632 = vld [vmem:[%s1611 + $0xa0] sm:$0xff]
        %v1633 = vld [vmem:[%s1611 + $0xa8] sm:$0xff]
        %v1634 = vld [vmem:[%s1611 + $0xb0] sm:$0xff]
        %v1635 = vld [vmem:[%s1611 + $0xb8] sm:$0xff]
        %v1636 = vld [vmem:[%s1611 + $0xc0] sm:$0xff]
        %v1637 = vld [vmem:[%s1611 + $0xc8] sm:$0xff]
        %v1638 = vld [vmem:[%s1611 + $0xd0] sm:$0xff]
        %v1639 = vld [vmem:[%s1611 + $0xd8] sm:$0xff]
        %v1640 = vld [vmem:[%s1611 + $0xe0] sm:$0xff]
        %v1641 = vld [vmem:[%s1611 + $0xe8] sm:$0xff]
        %v1642 = vld [vmem:[%s1611 + $0xf0] sm:$0xff]
        %v1643 = vld [vmem:[%s1611 + $0xf8] sm:$0xff]
        %v1644 = vld [vmem:[%s1611 + $0x100] sm:$0xff]
        %v1645 = vld [vmem:[%s1611 + $0x108] sm:$0xff]
        %v1646 = vld [vmem:[%s1611 + $0x110] sm:$0xff]
        %v1647 = vld [vmem:[%s1611 + $0x118] sm:$0xff]
        %v1648 = vld [vmem:[%s1611 + $0x120] sm:$0xff]
        %v1649 = vld [vmem:[%s1611 + $0x128] sm:$0xff]
        %v1650 = vld [vmem:[%s1611 + $0x130] sm:$0xff]
        %v1651 = vld [vmem:[%s1611 + $0x138] sm:$0xff]
        %v1652 = vld [vmem:[%s1611 + $0x140] sm:$0xff]
        %v1653 = vld [vmem:[%s1611 + $0x148] sm:$0xff]
        %v1654 = vld [vmem:[%s1611 + $0x150] sm:$0xff]
        %v1655 = vld [vmem:[%s1611 + $0x158] sm:$0xff]
        %v1656 = vld [vmem:[%s1611 + $0x160] sm:$0xff]
        %v1657 = vld [vmem:[%s1611 + $0x168] sm:$0xff]
        %v1658 = vld [vmem:[%s1611 + $0x170] sm:$0xff]
        %v1659 = vld [vmem:[%s1611 + $0x178] sm:$0xff]
        %v1660 = vld [vmem:[%s1611 + $0x180] sm:$0xff]
        %v1661 = vld [vmem:[%s1611 + $0x188] sm:$0xff]
        %v1662 = vld [vmem:[%s1611 + $0x190] sm:$0xff]
        %v1663 = vld [vmem:[%s1611 + $0x198] sm:$0xff]
        %v1664 = vld [vmem:[%s1611 + $0x1a0] sm:$0xff]
        %v1665 = vld [vmem:[%s1611 + $0x1a8] sm:$0xff]
        %v1666 = vld [vmem:[%s1611 + $0x1b0] sm:$0xff]
        %v1667 = vld [vmem:[%s1611 + $0x1b8] sm:$0xff]
        %v1668 = vld [vmem:[%s1611 + $0x1c0] sm:$0xff]
        %v1669 = vld [vmem:[%s1611 + $0x1c8] sm:$0xff]
        %v1670 = vld [vmem:[%s1611 + $0x1d0] sm:$0xff]
        %v1671 = vld [vmem:[%s1611 + $0x1d8] sm:$0xff]
        %v1672 = vld [vmem:[%s1611 + $0x1e0] sm:$0xff]
        %v1673 = vld [vmem:[%s1611 + $0x1e8] sm:$0xff]
        %v1674 = vld [vmem:[%s1611 + $0x1f0] sm:$0xff]
        %v1675 = vld [vmem:[%s1611 + $0x1f8] sm:$0xff]
        %v1676 = vld [vmem:[%s1611 + $0x200] sm:$0xff]
        %v1677 = vld [vmem:[%s1611 + $0x208] sm:$0xff]
        %v1678 = vld [vmem:[%s1611 + $0x210] sm:$0xff]
        %v1679 = vld [vmem:[%s1611 + $0x218] sm:$0xff]
        %v1680 = vld [vmem:[%s1611 + $0x220] sm:$0xff]
        %v1681 = vld [vmem:[%s1611 + $0x228] sm:$0xff]
        %v1682 = vld [vmem:[%s1611 + $0x230] sm:$0xff]
        %v1683 = vld [vmem:[%s1611 + $0x238] sm:$0xff]
        %v1684 = vld [vmem:[%s1611 + $0x240] sm:$0xff]
        %v1685 = vld [vmem:[%s1611 + $0x248] sm:$0xff]
        %v1686 = vld [vmem:[%s1611 + $0x250] sm:$0xff]
        %v1687 = vld [vmem:[%s1611 + $0x258] sm:$0xff]
        %v1688 = vld [vmem:[%s1611 + $0x260] sm:$0xff]
        %v1689 = vld [vmem:[%s1611 + $0x268] sm:$0xff]
        %v1690 = vld [vmem:[%s1611 + $0x270] sm:$0xff]
        %v1691 = vld [vmem:[%s1611 + $0x278] sm:$0xff]
        %v1692 = vld [vmem:[%s1611 + $0x280] sm:$0xff]
        %v1693 = vld [vmem:[%s1611 + $0x288] sm:$0xff]
        %v1694 = vld [vmem:[%s1611 + $0x290] sm:$0xff]
        %v1695 = vld [vmem:[%s1611 + $0x298] sm:$0xff]
        %v1696 = vld [vmem:[%s1611 + $0x2a0] sm:$0xff]
        %v1697 = vld [vmem:[%s1611 + $0x2a8] sm:$0xff]
        %v1698 = vld [vmem:[%s1611 + $0x2b0] sm:$0xff]
        %v1699 = vld [vmem:[%s1611 + $0x2b8] sm:$0xff]
        %v1700 = vld [vmem:[%s1611 + $0x2c0] sm:$0xff]
        %v1701 = vld [vmem:[%s1611 + $0x2c8] sm:$0xff]
        %v1702 = vld [vmem:[%s1611 + $0x2d0] sm:$0xff]
        %v1703 = vld [vmem:[%s1611 + $0x2d8] sm:$0xff]
        %v1704 = vld [vmem:[%s1611 + $0x2e0] sm:$0xff]
        %v1705 = vld [vmem:[%s1611 + $0x2e8] sm:$0xff]
        %v1706 = vld [vmem:[%s1611 + $0x2f0] sm:$0xff]
        %v1707 = vld [vmem:[%s1611 + $0x2f8] sm:$0xff]
        %s1708 = scalar_lea.vmem [#allocation7], 3
        %v1709 = vld [vmem:[%s1708] sm:$0x7]
        %v1711 = vlaneseq
        %v1712 = vshrl.u32 %v1711, 7
        %v1713 = vsub.s32 0, %v1712
        %v1714 = vrot.slane %v1709, %v1713
        %v1715 = vlaneseq
        %v1716 = vshrl.u32 %v1715, 7
        %v1717 = vsub.s32 1, %v1716
        %v1718 = vrot.slane %v1709, %v1717
        %v1719 = vlaneseq
        %v1720 = vshrl.u32 %v1719, 7
        %v1721 = vsub.s32 2, %v1720
        %v1722 = vrot.slane %v1709, %v1721
        %1726 = vmatprep.subr.mxu0 %v1658
        %1727 = vmatpush1.msra.mxu0 %v1657
        %1728 = vmatprep.subr.mxu0 %v1655
        %1729 = vmatpush1.msra.mxu0 %v1654
        %1730 = vmatprep.subr.mxu0 %v1652
        %1731 = vmatpush1.msra.mxu0 %v1651
        %1732 = vmatprep.subr.mxu0 %v1649
        %1733 = vmatpush1.msra.mxu0 %v1648
        %1734 = vmatprep.subr.mxu0 %v1646
        %1735 = vmatpush1.msra.mxu0 %v1645
        %1736 = vmatprep.subr.mxu0 %v1643
        %1737 = vmatpush1.msra.mxu0 %v1642
        %1738 = vmatprep.subr.mxu0 %v1640
        %1739 = vmatpush1.msra.mxu0 %v1639
        %1740 = vmatprep.subr.mxu0 %v1637
        %1741 = vmatpush1.msra.mxu0 %v1636
        %1742 = vmatprep.subr.mxu0 %v1634
        %1743 = vmatpush1.msra.mxu0 %v1633
        %1744 = vmatprep.subr.mxu0 %v1631
        %1745 = vmatpush1.msra.mxu0 %v1630
        %1746 = vmatprep.subr.mxu0 %v1628
        %1747 = vmatpush1.msra.mxu0 %v1627
        %1748 = vmatprep.subr.mxu0 %v1625
        %1749 = vmatpush1.msra.mxu0 %v1624
        %1750 = vmatprep.subr.mxu0 %v1622
        %1751 = vmatpush1.msra.mxu0 %v1621
        %1752 = vmatprep.subr.mxu0 %v1619
        %1753 = vmatpush1.msra.mxu0 %v1618
        %1754 = vmatprep.subr.mxu0 %v1616
        %1755 = vmatpush1.msra.mxu0 %v1615
        %1756 = vmatprep.subr.mxu0 %v1613
        %1757 = vmatpush1.msra.mxu0 %v1612
        %1758 = vmatprep.subr.mxu0 %v1706
        %1759 = vmatpush2.msra.mxu0 %v1705
        %1760 = vmatprep.subr.mxu0 %v1703
        %1761 = vmatpush2.msra.mxu0 %v1702
        %1762 = vmatprep.subr.mxu0 %v1700
        %1763 = vmatpush2.msra.mxu0 %v1699
        %1764 = vmatprep.subr.mxu0 %v1697
        %1765 = vmatpush2.msra.mxu0 %v1696
        %1766 = vmatprep.subr.mxu0 %v1694
        %1767 = vmatpush2.msra.mxu0 %v1693
        %1768 = vmatprep.subr.mxu0 %v1691
        %1769 = vmatpush2.msra.mxu0 %v1690
        %1770 = vmatprep.subr.mxu0 %v1688
        %1771 = vmatpush2.msra.mxu0 %v1687
        %1772 = vmatprep.subr.mxu0 %v1685
        %1773 = vmatpush2.msra.mxu0 %v1684
        %1774 = vmatprep.subr.mxu0 %v1682
        %1775 = vmatpush2.msra.mxu0 %v1681
        %1776 = vmatprep.subr.mxu0 %v1679
        %1777 = vmatpush2.msra.mxu0 %v1678
        %1778 = vmatprep.subr.mxu0 %v1676
        %1779 = vmatpush2.msra.mxu0 %v1675
        %1780 = vmatprep.subr.mxu0 %v1673
        %1781 = vmatpush2.msra.mxu0 %v1672
        %1782 = vmatprep.subr.mxu0 %v1670
        %1783 = vmatpush2.msra.mxu0 %v1669
        %1784 = vmatprep.subr.mxu0 %v1667
        %1785 = vmatpush2.msra.mxu0 %v1666
        %1786 = vmatprep.subr.mxu0 %v1664
        %1787 = vmatpush2.msra.mxu0 %v1663
        %1788 = vmatprep.subr.mxu0 %v1661
        %1789 = vmatpush2.msra.mxu0 %v1660
        %1790 = vmatprep.mubr.f32.mxu0 %v452
        %1791 = vmatmul.mubr.f32.gmra.mxu0 %v451
        %v1792 = vpop.f32.mrf.mxu0
        %v1793 = vadd.f32 %v1714, %v1792
        %v1794 = vpop.f32.mrf.mxu0
        %v1795 = vadd.f32 %v1718, %v1794
        %1796 = vmatprep.mubr.f32.mxu0 %v454
        %1797 = vmatmul.mubr.f32.gmra.mxu0 %v453
        %v1798 = vpop.f32.mrf.mxu0
        %v1799 = vadd.f32 %v1714, %v1798
        %v1800 = vpop.f32.mrf.mxu0
        %v1801 = vadd.f32 %v1718, %v1800
        %1802 = vmatprep.mubr.f32.mxu0 %v456
        %1803 = vmatmul.mubr.f32.gmra.mxu0 %v455
        %v1804 = vpop.f32.mrf.mxu0
        %v1805 = vadd.f32 %v1714, %v1804
        %v1806 = vpop.f32.mrf.mxu0
        %v1807 = vadd.f32 %v1718, %v1806
        %1808 = vmatprep.mubr.f32.mxu0 %v458
        %1809 = vmatmul.mubr.f32.gmra.mxu0 %v457
        %v1810 = vpop.f32.mrf.mxu0
        %v1811 = vadd.f32 %v1714, %v1810
        %v1812 = vpop.f32.mrf.mxu0
        %v1813 = vadd.f32 %v1718, %v1812
        %1814 = vmatprep.mubr.f32.mxu0 %v460
        %1815 = vmatmul.mubr.f32.gmra.mxu0 %v459
        %v1816 = vpop.f32.mrf.mxu0
        %v1817 = vadd.f32 %v1714, %v1816
        %v1818 = vpop.f32.mrf.mxu0
        %v1819 = vadd.f32 %v1718, %v1818
        %1820 = vmatprep.mubr.f32.mxu0 %v462
        %1821 = vmatmul.mubr.f32.gmra.mxu0 %v461
        %v1822 = vpop.f32.mrf.mxu0
        %v1823 = vadd.f32 %v1714, %v1822
        %v1824 = vpop.f32.mrf.mxu0
        %v1825 = vadd.f32 %v1718, %v1824
        %1826 = vmatprep.mubr.f32.mxu0 %v464
        %1827 = vmatmul.mubr.f32.gmra.mxu0 %v463
        %v1828 = vpop.f32.mrf.mxu0
        %v1829 = vadd.f32 %v1714, %v1828
        %v1830 = vpop.f32.mrf.mxu0
        %v1831 = vadd.f32 %v1718, %v1830
        %1832 = vmatprep.mubr.f32.mxu0 %v466
        %1833 = vmatmul.mubr.f32.gmra.mxu0 %v465
        %v1834 = vpop.f32.mrf.mxu0
        %v1835 = vadd.f32 %v1714, %v1834
        %v1836 = vpop.f32.mrf.mxu0
        %v1837 = vadd.f32 %v1718, %v1836
        %1838 = vmatprep.mubr.f32.mxu0 %v468
        %1839 = vmatmul.mubr.f32.gmra.mxu0 %v467
        %v1840 = vpop.f32.mrf.mxu0
        %v1841 = vadd.f32 %v1714, %v1840
        %v1842 = vpop.f32.mrf.mxu0
        %v1843 = vadd.f32 %v1718, %v1842
        %1844 = vmatprep.mubr.f32.mxu0 %v470
        %1845 = vmatmul.mubr.f32.gmra.mxu0 %v469
        %v1846 = vpop.f32.mrf.mxu0
        %v1847 = vadd.f32 %v1714, %v1846
        %v1848 = vpop.f32.mrf.mxu0
        %v1849 = vadd.f32 %v1718, %v1848
        %1850 = vmatprep.mubr.f32.mxu0 %v472
        %1851 = vmatmul.mubr.f32.gmra.mxu0 %v471
        %v1852 = vpop.f32.mrf.mxu0
        %v1853 = vadd.f32 %v1714, %v1852
        %v1854 = vpop.f32.mrf.mxu0
        %v1855 = vadd.f32 %v1718, %v1854
        %1856 = vmatprep.mubr.f32.mxu0 %v474
        %1857 = vmatmul.mubr.f32.gmra.mxu0 %v473
        %v1858 = vpop.f32.mrf.mxu0
        %v1859 = vadd.f32 %v1714, %v1858
        %v1860 = vpop.f32.mrf.mxu0
        %v1861 = vadd.f32 %v1718, %v1860
        %1862 = vmatprep.mubr.f32.mxu0 %v476
        %1863 = vmatmul.mubr.f32.gmra.mxu0 %v475
        %v1864 = vpop.f32.mrf.mxu0
        %v1865 = vadd.f32 %v1714, %v1864
        %v1866 = vpop.f32.mrf.mxu0
        %v1867 = vadd.f32 %v1718, %v1866
        %1868 = vmatprep.mubr.f32.mxu0 %v478
        %1869 = vmatmul.mubr.f32.gmra.mxu0 %v477
        %v1870 = vpop.f32.mrf.mxu0
        %v1871 = vadd.f32 %v1714, %v1870
        %v1872 = vpop.f32.mrf.mxu0
        %v1873 = vadd.f32 %v1718, %v1872
        %1874 = vmatprep.mubr.f32.mxu0 %v480
        %1875 = vmatmul.mubr.f32.gmra.mxu0 %v479
        %v1876 = vpop.f32.mrf.mxu0
        %v1877 = vadd.f32 %v1714, %v1876
        %v1878 = vpop.f32.mrf.mxu0
        %v1879 = vadd.f32 %v1718, %v1878
        %1880 = vmatprep.mubr.f32.mxu0 %v482
        %1881 = vmatmul.mubr.f32.gmra.mxu0 %v481
        %v1882 = vpop.f32.mrf.mxu0
        %v1883 = vadd.f32 %v1714, %v1882
        %v1884 = vpop.f32.mrf.mxu0
        %v1885 = vadd.f32 %v1718, %v1884
        %1886 = vdwg.mxu0
        %1887 = vmatprep.subr.mxu0 0.0
        %1888 = vmatpush1.msra.mxu0 %v1659
        %1889 = vmatprep.subr.mxu0 0.0
        %1890 = vmatpush1.msra.mxu0 %v1656
        %1891 = vmatprep.subr.mxu0 0.0
        %1892 = vmatpush1.msra.mxu0 %v1653
        %1893 = vmatprep.subr.mxu0 0.0
        %1894 = vmatpush1.msra.mxu0 %v1650
        %1895 = vmatprep.subr.mxu0 0.0
        %1896 = vmatpush1.msra.mxu0 %v1647
        %1897 = vmatprep.subr.mxu0 0.0
        %1898 = vmatpush1.msra.mxu0 %v1644
        %1899 = vmatprep.subr.mxu0 0.0
        %1900 = vmatpush1.msra.mxu0 %v1641
        %1901 = vmatprep.subr.mxu0 0.0
        %1902 = vmatpush1.msra.mxu0 %v1638
        %1903 = vmatprep.subr.mxu0 0.0
        %1904 = vmatpush1.msra.mxu0 %v1635
        %1905 = vmatprep.subr.mxu0 0.0
        %1906 = vmatpush1.msra.mxu0 %v1632
        %1907 = vmatprep.subr.mxu0 0.0
        %1908 = vmatpush1.msra.mxu0 %v1629
        %1909 = vmatprep.subr.mxu0 0.0
        %1910 = vmatpush1.msra.mxu0 %v1626
        %1911 = vmatprep.subr.mxu0 0.0
        %1912 = vmatpush1.msra.mxu0 %v1623
        %1913 = vmatprep.subr.mxu0 0.0
        %1914 = vmatpush1.msra.mxu0 %v1620
        %1915 = vmatprep.subr.mxu0 0.0
        %1916 = vmatpush1.msra.mxu0 %v1617
        %1917 = vmatprep.subr.mxu0 0.0
        %1918 = vmatpush1.msra.mxu0 %v1614
        %1919 = vmatprep.subr.mxu0 0.0
        %1920 = vmatpush2.msra.mxu0 %v1707
        %1921 = vmatprep.subr.mxu0 0.0
        %1922 = vmatpush2.msra.mxu0 %v1704
        %1923 = vmatprep.subr.mxu0 0.0
        %1924 = vmatpush2.msra.mxu0 %v1701
        %1925 = vmatprep.subr.mxu0 0.0
        %1926 = vmatpush2.msra.mxu0 %v1698
        %1927 = vmatprep.subr.mxu0 0.0
        %1928 = vmatpush2.msra.mxu0 %v1695
        %1929 = vmatprep.subr.mxu0 0.0
        %1930 = vmatpush2.msra.mxu0 %v1692
        %1931 = vmatprep.subr.mxu0 0.0
        %1932 = vmatpush2.msra.mxu0 %v1689
        %1933 = vmatprep.subr.mxu0 0.0
        %1934 = vmatpush2.msra.mxu0 %v1686
        %1935 = vmatprep.subr.mxu0 0.0
        %1936 = vmatpush2.msra.mxu0 %v1683
        %1937 = vmatprep.subr.mxu0 0.0
        %1938 = vmatpush2.msra.mxu0 %v1680
        %1939 = vmatprep.subr.mxu0 0.0
        %1940 = vmatpush2.msra.mxu0 %v1677
        %1941 = vmatprep.subr.mxu0 0.0
        %1942 = vmatpush2.msra.mxu0 %v1674
        %1943 = vmatprep.subr.mxu0 0.0
        %1944 = vmatpush2.msra.mxu0 %v1671
        %1945 = vmatprep.subr.mxu0 0.0
        %1946 = vmatpush2.msra.mxu0 %v1668
        %1947 = vmatprep.subr.mxu0 0.0
        %1948 = vmatpush2.msra.mxu0 %v1665
        %1949 = vmatprep.subr.mxu0 0.0
        %1950 = vmatpush2.msra.mxu0 %v1662
        %1951 = vmatprep.mubr.f32.mxu0 %v452
        %1952 = vmatmul.mubr.f32.gmra.mxu0 %v451
        %v1953 = vpop.f32.mrf.mxu0
        %v1954 = vadd.f32 %v1722, %v1953
        %v1955 = vpop.f32.mrf.mxu0
        %1956 = vmatprep.mubr.f32.mxu0 %v454
        %1957 = vmatmul.mubr.f32.gmra.mxu0 %v453
        %v1958 = vpop.f32.mrf.mxu0
        %v1959 = vadd.f32 %v1722, %v1958
        %v1960 = vpop.f32.mrf.mxu0
        %1961 = vmatprep.mubr.f32.mxu0 %v456
        %1962 = vmatmul.mubr.f32.gmra.mxu0 %v455
        %v1963 = vpop.f32.mrf.mxu0
        %v1964 = vadd.f32 %v1722, %v1963
        %v1965 = vpop.f32.mrf.mxu0
        %1966 = vmatprep.mubr.f32.mxu0 %v458
        %1967 = vmatmul.mubr.f32.gmra.mxu0 %v457
        %v1968 = vpop.f32.mrf.mxu0
        %v1969 = vadd.f32 %v1722, %v1968
        %v1970 = vpop.f32.mrf.mxu0
        %1971 = vmatprep.mubr.f32.mxu0 %v460
        %1972 = vmatmul.mubr.f32.gmra.mxu0 %v459
        %v1973 = vpop.f32.mrf.mxu0
        %v1974 = vadd.f32 %v1722, %v1973
        %v1975 = vpop.f32.mrf.mxu0
        %1976 = vmatprep.mubr.f32.mxu0 %v462
        %1977 = vmatmul.mubr.f32.gmra.mxu0 %v461
        %v1978 = vpop.f32.mrf.mxu0
        %v1979 = vadd.f32 %v1722, %v1978
        %v1980 = vpop.f32.mrf.mxu0
        %1981 = vmatprep.mubr.f32.mxu0 %v464
        %1982 = vmatmul.mubr.f32.gmra.mxu0 %v463
        %v1983 = vpop.f32.mrf.mxu0
        %v1984 = vadd.f32 %v1722, %v1983
        %v1985 = vpop.f32.mrf.mxu0
        %1986 = vmatprep.mubr.f32.mxu0 %v466
        %1987 = vmatmul.mubr.f32.gmra.mxu0 %v465
        %v1988 = vpop.f32.mrf.mxu0
        %v1989 = vadd.f32 %v1722, %v1988
        %v1990 = vpop.f32.mrf.mxu0
        %1991 = vmatprep.mubr.f32.mxu0 %v468
        %1992 = vmatmul.mubr.f32.gmra.mxu0 %v467
        %v1993 = vpop.f32.mrf.mxu0
        %v1994 = vadd.f32 %v1722, %v1993
        %v1995 = vpop.f32.mrf.mxu0
        %1996 = vmatprep.mubr.f32.mxu0 %v470
        %1997 = vmatmul.mubr.f32.gmra.mxu0 %v469
        %v1998 = vpop.f32.mrf.mxu0
        %v1999 = vadd.f32 %v1722, %v1998
        %v2000 = vpop.f32.mrf.mxu0
        %2001 = vmatprep.mubr.f32.mxu0 %v472
        %2002 = vmatmul.mubr.f32.gmra.mxu0 %v471
        %v2003 = vpop.f32.mrf.mxu0
        %v2004 = vadd.f32 %v1722, %v2003
        %v2005 = vpop.f32.mrf.mxu0
        %2006 = vmatprep.mubr.f32.mxu0 %v474
        %2007 = vmatmul.mubr.f32.gmra.mxu0 %v473
        %v2008 = vpop.f32.mrf.mxu0
        %v2009 = vadd.f32 %v1722, %v2008
        %v2010 = vpop.f32.mrf.mxu0
        %2011 = vmatprep.mubr.f32.mxu0 %v476
        %2012 = vmatmul.mubr.f32.gmra.mxu0 %v475
        %v2013 = vpop.f32.mrf.mxu0
        %v2014 = vadd.f32 %v1722, %v2013
        %v2015 = vpop.f32.mrf.mxu0
        %2016 = vmatprep.mubr.f32.mxu0 %v478
        %2017 = vmatmul.mubr.f32.gmra.mxu0 %v477
        %v2018 = vpop.f32.mrf.mxu0
        %v2019 = vadd.f32 %v1722, %v2018
        %v2020 = vpop.f32.mrf.mxu0
        %2021 = vmatprep.mubr.f32.mxu0 %v480
        %2022 = vmatmul.mubr.f32.gmra.mxu0 %v479
        %v2023 = vpop.f32.mrf.mxu0
        %v2024 = vadd.f32 %v1722, %v2023
        %v2025 = vpop.f32.mrf.mxu0
        %2026 = vmatprep.mubr.f32.mxu0 %v482
        %2027 = vmatmul.mubr.f32.gmra.mxu0 %v481
        %v2028 = vpop.f32.mrf.mxu0
        %v2029 = vadd.f32 %v1722, %v2028
        %v2030 = vpop.f32.mrf.mxu0
        %2031 = vdwg.mxu0
        %v2032 = vmul.f32 %v1793, %v483
        %v2033 = vmul.f32 %v1799, %v484
        %v2034 = vmul.f32 %v1805, %v485
        %v2035 = vmul.f32 %v1811, %v486
        %v2036 = vmul.f32 %v1817, %v487
        %v2037 = vmul.f32 %v1823, %v488
        %v2038 = vmul.f32 %v1829, %v489
        %v2039 = vmul.f32 %v1835, %v490
        %v2040 = vmul.f32 %v1841, %v491
        %v2041 = vmul.f32 %v1847, %v492
        %v2042 = vmul.f32 %v1853, %v493
        %v2043 = vmul.f32 %v1859, %v494
        %v2044 = vmul.f32 %v1865, %v495
        %v2045 = vmul.f32 %v1871, %v496
        %v2046 = vmul.f32 %v1877, %v497
        %v2047 = vmul.f32 %v1883, %v498
        %2048 = vrot.lane.b32.xlu0 %v1793, 64
        %v2049 = vpop.permute.xlu0 %2048
        %2050 = vrot.lane.b32.xlu0 %v1799, 64
        %v2051 = vpop.permute.xlu0 %2050
        %2052 = vrot.lane.b32.xlu0 %v1805, 64
        %v2053 = vpop.permute.xlu0 %2052
        %2054 = vrot.lane.b32.xlu0 %v1811, 64
        %v2055 = vpop.permute.xlu0 %2054
        %2056 = vrot.lane.b32.xlu0 %v1817, 64
        %v2057 = vpop.permute.xlu0 %2056
        %2058 = vrot.lane.b32.xlu0 %v1823, 64
        %v2059 = vpop.permute.xlu0 %2058
        %2060 = vrot.lane.b32.xlu0 %v1829, 64
        %v2061 = vpop.permute.xlu0 %2060
        %2062 = vrot.lane.b32.xlu0 %v1835, 64
        %v2063 = vpop.permute.xlu0 %2062
        %2064 = vrot.lane.b32.xlu0 %v1841, 64
        %v2065 = vpop.permute.xlu0 %2064
        %2066 = vrot.lane.b32.xlu0 %v1847, 64
        %v2067 = vpop.permute.xlu0 %2066
        %2068 = vrot.lane.b32.xlu0 %v1853, 64
        %v2069 = vpop.permute.xlu0 %2068
        %2070 = vrot.lane.b32.xlu0 %v1859, 64
        %v2071 = vpop.permute.xlu0 %2070
        %2072 = vrot.lane.b32.xlu0 %v1865, 64
        %v2073 = vpop.permute.xlu0 %2072
        %2074 = vrot.lane.b32.xlu0 %v1871, 64
        %v2075 = vpop.permute.xlu0 %2074
        %2076 = vrot.lane.b32.xlu0 %v1877, 64
        %v2077 = vpop.permute.xlu0 %2076
        %2078 = vrot.lane.b32.xlu0 %v1883, 64
        %v2079 = vpop.permute.xlu0 %2078
        %v2080 = vmul.f32 %v2049, %v499
        %v2081 = vmul.f32 %v2051, %v500
        %v2082 = vmul.f32 %v2053, %v501
        %v2083 = vmul.f32 %v2055, %v502
        %v2084 = vmul.f32 %v2057, %v503
        %v2085 = vmul.f32 %v2059, %v504
        %v2086 = vmul.f32 %v2061, %v505
        %v2087 = vmul.f32 %v2063, %v506
        %v2088 = vmul.f32 %v2065, %v507
        %v2089 = vmul.f32 %v2067, %v508
        %v2090 = vmul.f32 %v2069, %v509
        %v2091 = vmul.f32 %v2071, %v510
        %v2092 = vmul.f32 %v2073, %v511
        %v2093 = vmul.f32 %v2075, %v512
        %v2094 = vmul.f32 %v2077, %v513
        %v2095 = vmul.f32 %v2079, %v514
        %v2096 = vadd.f32 %v2032, %v2080
        %v2097 = vadd.f32 %v2033, %v2081
        %v2098 = vadd.f32 %v2034, %v2082
        %v2099 = vadd.f32 %v2035, %v2083
        %v2100 = vadd.f32 %v2036, %v2084
        %v2101 = vadd.f32 %v2037, %v2085
        %v2102 = vadd.f32 %v2038, %v2086
        %v2103 = vadd.f32 %v2039, %v2087
        %v2104 = vadd.f32 %v2040, %v2088
        %v2105 = vadd.f32 %v2041, %v2089
        %v2106 = vadd.f32 %v2042, %v2090
        %v2107 = vadd.f32 %v2043, %v2091
        %v2108 = vadd.f32 %v2044, %v2092
        %v2109 = vadd.f32 %v2045, %v2093
        %v2110 = vadd.f32 %v2046, %v2094
        %v2111 = vadd.f32 %v2047, %v2095
        %v2112 = vmul.f32 %v1795, %v483
        %v2113 = vmul.f32 %v1801, %v484
        %v2114 = vmul.f32 %v1807, %v485
        %v2115 = vmul.f32 %v1813, %v486
        %v2116 = vmul.f32 %v1819, %v487
        %v2117 = vmul.f32 %v1825, %v488
        %v2118 = vmul.f32 %v1831, %v489
        %v2119 = vmul.f32 %v1837, %v490
        %v2120 = vmul.f32 %v1843, %v491
        %v2121 = vmul.f32 %v1849, %v492
        %v2122 = vmul.f32 %v1855, %v493
        %v2123 = vmul.f32 %v1861, %v494
        %v2124 = vmul.f32 %v1867, %v495
        %v2125 = vmul.f32 %v1873, %v496
        %v2126 = vmul.f32 %v1879, %v497
        %v2127 = vmul.f32 %v1885, %v498
        %2128 = vrot.lane.b32.xlu0 %v1795, 64
        %v2129 = vpop.permute.xlu0 %2128
        %2130 = vrot.lane.b32.xlu0 %v1801, 64
        %v2131 = vpop.permute.xlu0 %2130
        %2132 = vrot.lane.b32.xlu0 %v1807, 64
        %v2133 = vpop.permute.xlu0 %2132
        %2134 = vrot.lane.b32.xlu0 %v1813, 64
        %v2135 = vpop.permute.xlu0 %2134
        %2136 = vrot.lane.b32.xlu0 %v1819, 64
        %v2137 = vpop.permute.xlu0 %2136
        %2138 = vrot.lane.b32.xlu0 %v1825, 64
        %v2139 = vpop.permute.xlu0 %2138
        %2140 = vrot.lane.b32.xlu0 %v1831, 64
        %v2141 = vpop.permute.xlu0 %2140
        %2142 = vrot.lane.b32.xlu0 %v1837, 64
        %v2143 = vpop.permute.xlu0 %2142
        %2144 = vrot.lane.b32.xlu0 %v1843, 64
        %v2145 = vpop.permute.xlu0 %2144
        %2146 = vrot.lane.b32.xlu0 %v1849, 64
        %v2147 = vpop.permute.xlu0 %2146
        %2148 = vrot.lane.b32.xlu0 %v1855, 64
        %v2149 = vpop.permute.xlu0 %2148
        %2150 = vrot.lane.b32.xlu0 %v1861, 64
        %v2151 = vpop.permute.xlu0 %2150
        %2152 = vrot.lane.b32.xlu0 %v1867, 64
        %v2153 = vpop.permute.xlu0 %2152
        %2154 = vrot.lane.b32.xlu0 %v1873, 64
        %v2155 = vpop.permute.xlu0 %2154
        %2156 = vrot.lane.b32.xlu0 %v1879, 64
        %v2157 = vpop.permute.xlu0 %2156
        %2158 = vrot.lane.b32.xlu0 %v1885, 64
        %v2159 = vpop.permute.xlu0 %2158
        %v2160 = vmul.f32 %v2129, %v499
        %v2161 = vmul.f32 %v2131, %v500
        %v2162 = vmul.f32 %v2133, %v501
        %v2163 = vmul.f32 %v2135, %v502
        %v2164 = vmul.f32 %v2137, %v503
        %v2165 = vmul.f32 %v2139, %v504
        %v2166 = vmul.f32 %v2141, %v505
        %v2167 = vmul.f32 %v2143, %v506
        %v2168 = vmul.f32 %v2145, %v507
        %v2169 = vmul.f32 %v2147, %v508
        %v2170 = vmul.f32 %v2149, %v509
        %v2171 = vmul.f32 %v2151, %v510
        %v2172 = vmul.f32 %v2153, %v511
        %v2173 = vmul.f32 %v2155, %v512
        %v2174 = vmul.f32 %v2157, %v513
        %v2175 = vmul.f32 %v2159, %v514
        %v2176 = vadd.f32 %v2112, %v2160
        %v2177 = vadd.f32 %v2113, %v2161
        %v2178 = vadd.f32 %v2114, %v2162
        %v2179 = vadd.f32 %v2115, %v2163
        %v2180 = vadd.f32 %v2116, %v2164
        %v2181 = vadd.f32 %v2117, %v2165
        %v2182 = vadd.f32 %v2118, %v2166
        %v2183 = vadd.f32 %v2119, %v2167
        %v2184 = vadd.f32 %v2120, %v2168
        %v2185 = vadd.f32 %v2121, %v2169
        %v2186 = vadd.f32 %v2122, %v2170
        %v2187 = vadd.f32 %v2123, %v2171
        %v2188 = vadd.f32 %v2124, %v2172
        %v2189 = vadd.f32 %v2125, %v2173
        %v2190 = vadd.f32 %v2126, %v2174
        %v2191 = vadd.f32 %v2127, %v2175
        %2192 = vmatprep.subr.mxu0 0.0
        %2193 = vmatpush1.xpose.msra.mxu0 %v2191
        %2194 = vmatprep.subr.mxu0 0.0
        %2195 = vmatpush1.xpose.msra.mxu0 %v2190
        %2196 = vmatprep.subr.mxu0 0.0
        %2197 = vmatpush1.xpose.msra.mxu0 %v2189
        %2198 = vmatprep.subr.mxu0 0.0
        %2199 = vmatpush1.xpose.msra.mxu0 %v2188
        %2200 = vmatprep.subr.mxu0 0.0
        %2201 = vmatpush1.xpose.msra.mxu0 %v2187
        %2202 = vmatprep.subr.mxu0 0.0
        %2203 = vmatpush1.xpose.msra.mxu0 %v2186
        %2204 = vmatprep.subr.mxu0 0.0
        %2205 = vmatpush1.xpose.msra.mxu0 %v2185
        %2206 = vmatprep.subr.mxu0 0.0
        %2207 = vmatpush1.xpose.msra.mxu0 %v2184
        %2208 = vmatprep.subr.mxu0 0.0
        %2209 = vmatpush1.xpose.msra.mxu0 %v2183
        %2210 = vmatprep.subr.mxu0 0.0
        %2211 = vmatpush1.xpose.msra.mxu0 %v2182
        %2212 = vmatprep.subr.mxu0 0.0
        %2213 = vmatpush1.xpose.msra.mxu0 %v2181
        %2214 = vmatprep.subr.mxu0 0.0
        %2215 = vmatpush1.xpose.msra.mxu0 %v2180
        %2216 = vmatprep.subr.mxu0 0.0
        %2217 = vmatpush1.xpose.msra.mxu0 %v2179
        %2218 = vmatprep.subr.mxu0 0.0
        %2219 = vmatpush1.xpose.msra.mxu0 %v2178
        %2220 = vmatprep.subr.mxu0 0.0
        %2221 = vmatpush1.xpose.msra.mxu0 %v2177
        %2222 = vmatprep.subr.mxu0 0.0
        %2223 = vmatpush1.xpose.msra.mxu0 %v2176
        %2224 = vmatprep.subr.mxu0 0.0
        %2225 = vmatpush2.xpose.msra.mxu0 0.0
        %2226 = vmatprep.subr.mxu0 0.0
        %2227 = vmatpush2.xpose.msra.mxu0 0.0
        %2228 = vmatprep.subr.mxu0 0.0
        %2229 = vmatpush2.xpose.msra.mxu0 0.0
        %2230 = vmatprep.subr.mxu0 0.0
        %2231 = vmatpush2.xpose.msra.mxu0 0.0
        %2232 = vmatprep.subr.mxu0 0.0
        %2233 = vmatpush2.xpose.msra.mxu0 0.0
        %2234 = vmatprep.subr.mxu0 0.0
        %2235 = vmatpush2.xpose.msra.mxu0 0.0
        %2236 = vmatprep.subr.mxu0 0.0
        %2237 = vmatpush2.xpose.msra.mxu0 0.0
        %2238 = vmatprep.subr.mxu0 0.0
        %2239 = vmatpush2.xpose.msra.mxu0 0.0
        %2240 = vmatprep.subr.mxu0 0.0
        %2241 = vmatpush2.xpose.msra.mxu0 0.0
        %2242 = vmatprep.subr.mxu0 0.0
        %2243 = vmatpush2.xpose.msra.mxu0 0.0
        %2244 = vmatprep.subr.mxu0 0.0
        %2245 = vmatpush2.xpose.msra.mxu0 0.0
        %2246 = vmatprep.subr.mxu0 0.0
        %2247 = vmatpush2.xpose.msra.mxu0 0.0
        %2248 = vmatprep.subr.mxu0 0.0
        %2249 = vmatpush2.xpose.msra.mxu0 0.0
        %2250 = vmatprep.subr.mxu0 0.0
        %2251 = vmatpush2.xpose.msra.mxu0 0.0
        %2252 = vmatprep.subr.mxu0 0.0
        %2253 = vmatpush2.xpose.msra.mxu0 0.0
        %2254 = vmatprep.subr.mxu0 0.0
        %2255 = vmatpush2.xpose.msra.mxu0 0.0
        %2256 = vmatprep.mubr.f32.mxu0 0.0
        %2257 = vmatmul.mubr.f32.gmra.mxu0 %v2096
        %v2258 = vpop.f32.mrf.mxu0
        %v2259 = vadd.f32 0.0, %v2258
        %v2260 = vpop.f32.mrf.mxu0
        %2261 = vmatprep.mubr.f32.mxu0 0.0
        %2262 = vmatmul.mubr.f32.gmra.mxu0 %v2097
        %v2263 = vpop.f32.mrf.mxu0
        %v2264 = vadd.f32 0.0, %v2263
        %v2265 = vpop.f32.mrf.mxu0
        %2266 = vmatprep.mubr.f32.mxu0 0.0
        %2267 = vmatmul.mubr.f32.gmra.mxu0 %v2098
        %v2268 = vpop.f32.mrf.mxu0
        %v2269 = vadd.f32 0.0, %v2268
        %v2270 = vpop.f32.mrf.mxu0
        %2271 = vmatprep.mubr.f32.mxu0 0.0
        %2272 = vmatmul.mubr.f32.gmra.mxu0 %v2099
        %v2273 = vpop.f32.mrf.mxu0
        %v2274 = vadd.f32 0.0, %v2273
        %v2275 = vpop.f32.mrf.mxu0
        %2276 = vmatprep.mubr.f32.mxu0 0.0
        %2277 = vmatmul.mubr.f32.gmra.mxu0 %v2100
        %v2278 = vpop.f32.mrf.mxu0
        %v2279 = vadd.f32 0.0, %v2278
        %v2280 = vpop.f32.mrf.mxu0
        %2281 = vmatprep.mubr.f32.mxu0 0.0
        %2282 = vmatmul.mubr.f32.gmra.mxu0 %v2101
        %v2283 = vpop.f32.mrf.mxu0
        %v2284 = vadd.f32 0.0, %v2283
        %v2285 = vpop.f32.mrf.mxu0
        %2286 = vmatprep.mubr.f32.mxu0 0.0
        %2287 = vmatmul.mubr.f32.gmra.mxu0 %v2102
        %v2288 = vpop.f32.mrf.mxu0
        %v2289 = vadd.f32 0.0, %v2288
        %v2290 = vpop.f32.mrf.mxu0
        %2291 = vmatprep.mubr.f32.mxu0 0.0
        %2292 = vmatmul.mubr.f32.gmra.mxu0 %v2103
        %v2293 = vpop.f32.mrf.mxu0
        %v2294 = vadd.f32 0.0, %v2293
        %v2295 = vpop.f32.mrf.mxu0
        %2296 = vmatprep.mubr.f32.mxu0 0.0
        %2297 = vmatmul.mubr.f32.gmra.mxu0 %v2104
        %v2298 = vpop.f32.mrf.mxu0
        %v2299 = vadd.f32 0.0, %v2298
        %v2300 = vpop.f32.mrf.mxu0
        %2301 = vmatprep.mubr.f32.mxu0 0.0
        %2302 = vmatmul.mubr.f32.gmra.mxu0 %v2105
        %v2303 = vpop.f32.mrf.mxu0
        %v2304 = vadd.f32 0.0, %v2303
        %v2305 = vpop.f32.mrf.mxu0
        %2306 = vmatprep.mubr.f32.mxu0 0.0
        %2307 = vmatmul.mubr.f32.gmra.mxu0 %v2106
        %v2308 = vpop.f32.mrf.mxu0
        %v2309 = vadd.f32 0.0, %v2308
        %v2310 = vpop.f32.mrf.mxu0
        %2311 = vmatprep.mubr.f32.mxu0 0.0
        %2312 = vmatmul.mubr.f32.gmra.mxu0 %v2107
        %v2313 = vpop.f32.mrf.mxu0
        %v2314 = vadd.f32 0.0, %v2313
        %v2315 = vpop.f32.mrf.mxu0
        %2316 = vmatprep.mubr.f32.mxu0 0.0
        %2317 = vmatmul.mubr.f32.gmra.mxu0 %v2108
        %v2318 = vpop.f32.mrf.mxu0
        %v2319 = vadd.f32 0.0, %v2318
        %v2320 = vpop.f32.mrf.mxu0
        %2321 = vmatprep.mubr.f32.mxu0 0.0
        %2322 = vmatmul.mubr.f32.gmra.mxu0 %v2109
        %v2323 = vpop.f32.mrf.mxu0
        %v2324 = vadd.f32 0.0, %v2323
        %v2325 = vpop.f32.mrf.mxu0
        %2326 = vmatprep.mubr.f32.mxu0 0.0
        %2327 = vmatmul.mubr.f32.gmra.mxu0 %v2110
        %v2328 = vpop.f32.mrf.mxu0
        %v2329 = vadd.f32 0.0, %v2328
        %v2330 = vpop.f32.mrf.mxu0
        %2331 = vmatprep.mubr.f32.mxu0 0.0
        %2332 = vmatmul.mubr.f32.gmra.mxu0 %v2111
        %v2333 = vpop.f32.mrf.mxu0
        %v2334 = vadd.f32 0.0, %v2333
        %v2335 = vpop.f32.mrf.mxu0
        %2336 = vdwg.mxu0
        %v2337 = vsel %vm534, %v2259, -1e+09
        %v2338 = vsel %vm535, %v2264, -1e+09
        %v2339 = vsel %vm536, %v2269, -1e+09
        %v2340 = vsel %vm537, %v2274, -1e+09
        %v2341 = vsel %vm538, %v2279, -1e+09
        %v2342 = vsel %vm539, %v2284, -1e+09
        %v2343 = vsel %vm540, %v2289, -1e+09
        %v2344 = vsel %vm541, %v2294, -1e+09
        %v2345 = vsel %vm542, %v2299, -1e+09
        %v2346 = vsel %vm543, %v2304, -1e+09
        %v2347 = vsel %vm544, %v2309, -1e+09
        %v2348 = vsel %vm545, %v2314, -1e+09
        %v2349 = vsel %vm546, %v2319, -1e+09
        %v2350 = vsel %vm547, %v2324, -1e+09
        %v2351 = vsel %vm548, %v2329, -1e+09
        %v2352 = vsel %vm549, %v2334, -1e+09
        %2353 = vmax.xlane.f32.xlu0 %v2337
        %v2354 = vpop.xlane.xlu0 %2353
        %2355 = vmax.xlane.f32.xlu0 %v2338
        %v2356 = vpop.xlane.xlu0 %2355
        %2357 = vmax.xlane.f32.xlu0 %v2339
        %v2358 = vpop.xlane.xlu0 %2357
        %2359 = vmax.xlane.f32.xlu0 %v2340
        %v2360 = vpop.xlane.xlu0 %2359
        %2361 = vmax.xlane.f32.xlu0 %v2341
        %v2362 = vpop.xlane.xlu0 %2361
        %2363 = vmax.xlane.f32.xlu0 %v2342
        %v2364 = vpop.xlane.xlu0 %2363
        %2365 = vmax.xlane.f32.xlu0 %v2343
        %v2366 = vpop.xlane.xlu0 %2365
        %2367 = vmax.xlane.f32.xlu0 %v2344
        %v2368 = vpop.xlane.xlu0 %2367
        %2369 = vmax.xlane.f32.xlu0 %v2345
        %v2370 = vpop.xlane.xlu0 %2369
        %2371 = vmax.xlane.f32.xlu0 %v2346
        %v2372 = vpop.xlane.xlu0 %2371
        %2373 = vmax.xlane.f32.xlu0 %v2347
        %v2374 = vpop.xlane.xlu0 %2373
        %2375 = vmax.xlane.f32.xlu0 %v2348
        %v2376 = vpop.xlane.xlu0 %2375
        %2377 = vmax.xlane.f32.xlu0 %v2349
        %v2378 = vpop.xlane.xlu0 %2377
        %2379 = vmax.xlane.f32.xlu0 %v2350
        %v2380 = vpop.xlane.xlu0 %2379
        %2381 = vmax.xlane.f32.xlu0 %v2351
        %v2382 = vpop.xlane.xlu0 %2381
        %2383 = vmax.xlane.f32.xlu0 %v2352
        %v2384 = vpop.xlane.xlu0 %2383
        %v2385 = vsub.f32 %v2337, %v2354
        %v2386 = vsub.f32 %v2338, %v2356
        %v2387 = vsub.f32 %v2339, %v2358
        %v2388 = vsub.f32 %v2340, %v2360
        %v2389 = vsub.f32 %v2341, %v2362
        %v2390 = vsub.f32 %v2342, %v2364
        %v2391 = vsub.f32 %v2343, %v2366
        %v2392 = vsub.f32 %v2344, %v2368
        %v2393 = vsub.f32 %v2345, %v2370
        %v2394 = vsub.f32 %v2346, %v2372
        %v2395 = vsub.f32 %v2347, %v2374
        %v2396 = vsub.f32 %v2348, %v2376
        %v2397 = vsub.f32 %v2349, %v2378
        %v2398 = vsub.f32 %v2350, %v2380
        %v2399 = vsub.f32 %v2351, %v2382
        %v2400 = vsub.f32 %v2352, %v2384
        %v2401 = vmul.f32 %v2385, 1.442695
        %v2402 = vpow.pop %v2401
        %v2403 = vmul.f32 %v2386, 1.442695
        %v2404 = vpow.pop %v2403
        %v2405 = vmul.f32 %v2387, 1.442695
        %v2406 = vpow.pop %v2405
        %v2407 = vmul.f32 %v2388, 1.442695
        %v2408 = vpow.pop %v2407
        %v2409 = vmul.f32 %v2389, 1.442695
        %v2410 = vpow.pop %v2409
        %v2411 = vmul.f32 %v2390, 1.442695
        %v2412 = vpow.pop %v2411
        %v2413 = vmul.f32 %v2391, 1.442695
        %v2414 = vpow.pop %v2413
        %v2415 = vmul.f32 %v2392, 1.442695
        %v2416 = vpow.pop %v2415
        %v2417 = vmul.f32 %v2393, 1.442695
        %v2418 = vpow.pop %v2417
        %v2419 = vmul.f32 %v2394, 1.442695
        %v2420 = vpow.pop %v2419
        %v2421 = vmul.f32 %v2395, 1.442695
        %v2422 = vpow.pop %v2421
        %v2423 = vmul.f32 %v2396, 1.442695
        %v2424 = vpow.pop %v2423
        %v2425 = vmul.f32 %v2397, 1.442695
        %v2426 = vpow.pop %v2425
        %v2427 = vmul.f32 %v2398, 1.442695
        %v2428 = vpow.pop %v2427
        %v2429 = vmul.f32 %v2399, 1.442695
        %v2430 = vpow.pop %v2429
        %v2431 = vmul.f32 %v2400, 1.442695
        %v2432 = vpow.pop %v2431
        %2433 = vadd.xlane.f32.xlu0 %v2402
        %v2434 = vpop.xlane.xlu0 %2433
        %2435 = vadd.xlane.f32.xlu0 %v2404
        %v2436 = vpop.xlane.xlu0 %2435
        %2437 = vadd.xlane.f32.xlu0 %v2406
        %v2438 = vpop.xlane.xlu0 %2437
        %2439 = vadd.xlane.f32.xlu0 %v2408
        %v2440 = vpop.xlane.xlu0 %2439
        %2441 = vadd.xlane.f32.xlu0 %v2410
        %v2442 = vpop.xlane.xlu0 %2441
        %2443 = vadd.xlane.f32.xlu0 %v2412
        %v2444 = vpop.xlane.xlu0 %2443
        %2445 = vadd.xlane.f32.xlu0 %v2414
        %v2446 = vpop.xlane.xlu0 %2445
        %2447 = vadd.xlane.f32.xlu0 %v2416
        %v2448 = vpop.xlane.xlu0 %2447
        %2449 = vadd.xlane.f32.xlu0 %v2418
        %v2450 = vpop.xlane.xlu0 %2449
        %2451 = vadd.xlane.f32.xlu0 %v2420
        %v2452 = vpop.xlane.xlu0 %2451
        %2453 = vadd.xlane.f32.xlu0 %v2422
        %v2454 = vpop.xlane.xlu0 %2453
        %2455 = vadd.xlane.f32.xlu0 %v2424
        %v2456 = vpop.xlane.xlu0 %2455
        %2457 = vadd.xlane.f32.xlu0 %v2426
        %v2458 = vpop.xlane.xlu0 %2457
        %2459 = vadd.xlane.f32.xlu0 %v2428
        %v2460 = vpop.xlane.xlu0 %2459
        %2461 = vadd.xlane.f32.xlu0 %v2430
        %v2462 = vpop.xlane.xlu0 %2461
        %2463 = vadd.xlane.f32.xlu0 %v2432
        %v2464 = vpop.xlane.xlu0 %2463
        %v2465 = vrcp.pop %v2434
        %v2466 = vmul.f32 1.0, %v2465
        %v2467 = vrcp.pop %v2436
        %v2468 = vmul.f32 1.0, %v2467
        %v2469 = vrcp.pop %v2438
        %v2470 = vmul.f32 1.0, %v2469
        %v2471 = vrcp.pop %v2440
        %v2472 = vmul.f32 1.0, %v2471
        %v2473 = vrcp.pop %v2442
        %v2474 = vmul.f32 1.0, %v2473
        %v2475 = vrcp.pop %v2444
        %v2476 = vmul.f32 1.0, %v2475
        %v2477 = vrcp.pop %v2446
        %v2478 = vmul.f32 1.0, %v2477
        %v2479 = vrcp.pop %v2448
        %v2480 = vmul.f32 1.0, %v2479
        %v2481 = vrcp.pop %v2450
        %v2482 = vmul.f32 1.0, %v2481
        %v2483 = vrcp.pop %v2452
        %v2484 = vmul.f32 1.0, %v2483
        %v2485 = vrcp.pop %v2454
        %v2486 = vmul.f32 1.0, %v2485
        %v2487 = vrcp.pop %v2456
        %v2488 = vmul.f32 1.0, %v2487
        %v2489 = vrcp.pop %v2458
        %v2490 = vmul.f32 1.0, %v2489
        %v2491 = vrcp.pop %v2460
        %v2492 = vmul.f32 1.0, %v2491
        %v2493 = vrcp.pop %v2462
        %v2494 = vmul.f32 1.0, %v2493
        %v2495 = vrcp.pop %v2464
        %v2496 = vmul.f32 1.0, %v2495
        %v2497 = vmul.f32 %v2402, %v2466
        %v2498 = vmul.f32 %v2404, %v2468
        %v2499 = vmul.f32 %v2406, %v2470
        %v2500 = vmul.f32 %v2408, %v2472
        %v2501 = vmul.f32 %v2410, %v2474
        %v2502 = vmul.f32 %v2412, %v2476
        %v2503 = vmul.f32 %v2414, %v2478
        %v2504 = vmul.f32 %v2416, %v2480
        %v2505 = vmul.f32 %v2418, %v2482
        %v2506 = vmul.f32 %v2420, %v2484
        %v2507 = vmul.f32 %v2422, %v2486
        %v2508 = vmul.f32 %v2424, %v2488
        %v2509 = vmul.f32 %v2426, %v2490
        %v2510 = vmul.f32 %v2428, %v2492
        %v2511 = vmul.f32 %v2430, %v2494
        %v2512 = vmul.f32 %v2432, %v2496
        %s2513 = scalar_lea.vmem %s447, 128 [#allocation14]
        %2514 = vst [vmem:[%s2513] sm:$0xff] %v2497
        %2515 = vst [vmem:[%s2513 + $0x8] sm:$0xff] %v2498
        %2516 = vst [vmem:[%s2513 + $0x10] sm:$0xff] %v2499
        %2517 = vst [vmem:[%s2513 + $0x18] sm:$0xff] %v2500
        %2518 = vst [vmem:[%s2513 + $0x20] sm:$0xff] %v2501
        %2519 = vst [vmem:[%s2513 + $0x28] sm:$0xff] %v2502
        %2520 = vst [vmem:[%s2513 + $0x30] sm:$0xff] %v2503
        %2521 = vst [vmem:[%s2513 + $0x38] sm:$0xff] %v2504
        %2522 = vst [vmem:[%s2513 + $0x40] sm:$0xff] %v2505
        %2523 = vst [vmem:[%s2513 + $0x48] sm:$0xff] %v2506
        %2524 = vst [vmem:[%s2513 + $0x50] sm:$0xff] %v2507
        %2525 = vst [vmem:[%s2513 + $0x58] sm:$0xff] %v2508
        %2526 = vst [vmem:[%s2513 + $0x60] sm:$0xff] %v2509
        %2527 = vst [vmem:[%s2513 + $0x68] sm:$0xff] %v2510
        %2528 = vst [vmem:[%s2513 + $0x70] sm:$0xff] %v2511
        %2529 = vst [vmem:[%s2513 + $0x78] sm:$0xff] %v2512
        %2530 = vmatprep.subr.mxu0 0.0
        %2531 = vmatpush1.msra.mxu0 %v2029
        %2532 = vmatprep.subr.mxu0 0.0
        %2533 = vmatpush1.msra.mxu0 %v2024
        %2534 = vmatprep.subr.mxu0 0.0
        %2535 = vmatpush1.msra.mxu0 %v2019
        %2536 = vmatprep.subr.mxu0 0.0
        %2537 = vmatpush1.msra.mxu0 %v2014
        %2538 = vmatprep.subr.mxu0 0.0
        %2539 = vmatpush1.msra.mxu0 %v2009
        %2540 = vmatprep.subr.mxu0 0.0
        %2541 = vmatpush1.msra.mxu0 %v2004
        %2542 = vmatprep.subr.mxu0 0.0
        %2543 = vmatpush1.msra.mxu0 %v1999
        %2544 = vmatprep.subr.mxu0 0.0
        %2545 = vmatpush1.msra.mxu0 %v1994
        %2546 = vmatprep.subr.mxu0 0.0
        %2547 = vmatpush1.msra.mxu0 %v1989
        %2548 = vmatprep.subr.mxu0 0.0
        %2549 = vmatpush1.msra.mxu0 %v1984
        %2550 = vmatprep.subr.mxu0 0.0
        %2551 = vmatpush1.msra.mxu0 %v1979
        %2552 = vmatprep.subr.mxu0 0.0
        %2553 = vmatpush1.msra.mxu0 %v1974
        %2554 = vmatprep.subr.mxu0 0.0
        %2555 = vmatpush1.msra.mxu0 %v1969
        %2556 = vmatprep.subr.mxu0 0.0
        %2557 = vmatpush1.msra.mxu0 %v1964
        %2558 = vmatprep.subr.mxu0 0.0
        %2559 = vmatpush1.msra.mxu0 %v1959
        %2560 = vmatprep.subr.mxu0 0.0
        %2561 = vmatpush1.msra.mxu0 %v1954
        %2562 = vmatprep.subr.mxu0 0.0
        %2563 = vmatpush2.msra.mxu0 0.0
        %2564 = vmatprep.subr.mxu0 0.0
        %2565 = vmatpush2.msra.mxu0 0.0
        %2566 = vmatprep.subr.mxu0 0.0
        %2567 = vmatpush2.msra.mxu0 0.0
        %2568 = vmatprep.subr.mxu0 0.0
        %2569 = vmatpush2.msra.mxu0 0.0
        %2570 = vmatprep.subr.mxu0 0.0
        %2571 = vmatpush2.msra.mxu0 0.0
        %2572 = vmatprep.subr.mxu0 0.0
        %2573 = vmatpush2.msra.mxu0 0.0
        %2574 = vmatprep.subr.mxu0 0.0
        %2575 = vmatpush2.msra.mxu0 0.0
        %2576 = vmatprep.subr.mxu0 0.0
        %2577 = vmatpush2.msra.mxu0 0.0
        %2578 = vmatprep.subr.mxu0 0.0
        %2579 = vmatpush2.msra.mxu0 0.0
        %2580 = vmatprep.subr.mxu0 0.0
        %2581 = vmatpush2.msra.mxu0 0.0
        %2582 = vmatprep.subr.mxu0 0.0
        %2583 = vmatpush2.msra.mxu0 0.0
        %2584 = vmatprep.subr.mxu0 0.0
        %2585 = vmatpush2.msra.mxu0 0.0
        %2586 = vmatprep.subr.mxu0 0.0
        %2587 = vmatpush2.msra.mxu0 0.0
        %2588 = vmatprep.subr.mxu0 0.0
        %2589 = vmatpush2.msra.mxu0 0.0
        %2590 = vmatprep.subr.mxu0 0.0
        %2591 = vmatpush2.msra.mxu0 0.0
        %2592 = vmatprep.subr.mxu0 0.0
        %2593 = vmatpush2.msra.mxu0 0.0
        %2594 = vmatprep.mubr.f32.mxu0 0.0
        %2595 = vmatmul.mubr.f32.gmra.mxu0 %v2497
        %v2596 = vpop.f32.mrf.mxu0
        %v2597 = vadd.f32 0.0, %v2596
        %v2598 = vpop.f32.mrf.mxu0
        %2599 = vmatprep.mubr.f32.mxu0 0.0
        %2600 = vmatmul.mubr.f32.gmra.mxu0 %v2498
        %v2601 = vpop.f32.mrf.mxu0
        %v2602 = vadd.f32 0.0, %v2601
        %v2603 = vpop.f32.mrf.mxu0
        %2604 = vmatprep.mubr.f32.mxu0 0.0
        %2605 = vmatmul.mubr.f32.gmra.mxu0 %v2499
        %v2606 = vpop.f32.mrf.mxu0
        %v2607 = vadd.f32 0.0, %v2606
        %v2608 = vpop.f32.mrf.mxu0
        %2609 = vmatprep.mubr.f32.mxu0 0.0
        %2610 = vmatmul.mubr.f32.gmra.mxu0 %v2500
        %v2611 = vpop.f32.mrf.mxu0
        %v2612 = vadd.f32 0.0, %v2611
        %v2613 = vpop.f32.mrf.mxu0
        %2614 = vmatprep.mubr.f32.mxu0 0.0
        %2615 = vmatmul.mubr.f32.gmra.mxu0 %v2501
        %v2616 = vpop.f32.mrf.mxu0
        %v2617 = vadd.f32 0.0, %v2616
        %v2618 = vpop.f32.mrf.mxu0
        %2619 = vmatprep.mubr.f32.mxu0 0.0
        %2620 = vmatmul.mubr.f32.gmra.mxu0 %v2502
        %v2621 = vpop.f32.mrf.mxu0
        %v2622 = vadd.f32 0.0, %v2621
        %v2623 = vpop.f32.mrf.mxu0
        %2624 = vmatprep.mubr.f32.mxu0 0.0
        %2625 = vmatmul.mubr.f32.gmra.mxu0 %v2503
        %v2626 = vpop.f32.mrf.mxu0
        %v2627 = vadd.f32 0.0, %v2626
        %v2628 = vpop.f32.mrf.mxu0
        %2629 = vmatprep.mubr.f32.mxu0 0.0
        %2630 = vmatmul.mubr.f32.gmra.mxu0 %v2504
        %v2631 = vpop.f32.mrf.mxu0
        %v2632 = vadd.f32 0.0, %v2631
        %v2633 = vpop.f32.mrf.mxu0
        %2634 = vmatprep.mubr.f32.mxu0 0.0
        %2635 = vmatmul.mubr.f32.gmra.mxu0 %v2505
        %v2636 = vpop.f32.mrf.mxu0
        %v2637 = vadd.f32 0.0, %v2636
        %v2638 = vpop.f32.mrf.mxu0
        %2639 = vmatprep.mubr.f32.mxu0 0.0
        %2640 = vmatmul.mubr.f32.gmra.mxu0 %v2506
        %v2641 = vpop.f32.mrf.mxu0
        %v2642 = vadd.f32 0.0, %v2641
        %v2643 = vpop.f32.mrf.mxu0
        %2644 = vmatprep.mubr.f32.mxu0 0.0
        %2645 = vmatmul.mubr.f32.gmra.mxu0 %v2507
        %v2646 = vpop.f32.mrf.mxu0
        %v2647 = vadd.f32 0.0, %v2646
        %v2648 = vpop.f32.mrf.mxu0
        %2649 = vmatprep.mubr.f32.mxu0 0.0
        %2650 = vmatmul.mubr.f32.gmra.mxu0 %v2508
        %v2651 = vpop.f32.mrf.mxu0
        %v2652 = vadd.f32 0.0, %v2651
        %v2653 = vpop.f32.mrf.mxu0
        %2654 = vmatprep.mubr.f32.mxu0 0.0
        %2655 = vmatmul.mubr.f32.gmra.mxu0 %v2509
        %v2656 = vpop.f32.mrf.mxu0
        %v2657 = vadd.f32 0.0, %v2656
        %v2658 = vpop.f32.mrf.mxu0
        %2659 = vmatprep.mubr.f32.mxu0 0.0
        %2660 = vmatmul.mubr.f32.gmra.mxu0 %v2510
        %v2661 = vpop.f32.mrf.mxu0
        %v2662 = vadd.f32 0.0, %v2661
        %v2663 = vpop.f32.mrf.mxu0
        %2664 = vmatprep.mubr.f32.mxu0 0.0
        %2665 = vmatmul.mubr.f32.gmra.mxu0 %v2511
        %v2666 = vpop.f32.mrf.mxu0
        %v2667 = vadd.f32 0.0, %v2666
        %v2668 = vpop.f32.mrf.mxu0
        %2669 = vmatprep.mubr.f32.mxu0 0.0
        %2670 = vmatmul.mubr.f32.gmra.mxu0 %v2512
        %v2671 = vpop.f32.mrf.mxu0
        %v2672 = vadd.f32 0.0, %v2671
        %v2673 = vpop.f32.mrf.mxu0
        %2674 = vdwg.mxu0
        %v2675 = vld [vmem:[#allocation8] sm:$0xff]
        %v2676 = vld [vmem:[#allocation8 + $0x8] sm:$0xff]
        %v2677 = vld [vmem:[#allocation8 + $0x10] sm:$0xff]
        %v2678 = vld [vmem:[#allocation8 + $0x18] sm:$0xff]
        %v2679 = vld [vmem:[#allocation8 + $0x20] sm:$0xff]
        %v2680 = vld [vmem:[#allocation8 + $0x28] sm:$0xff]
        %v2681 = vld [vmem:[#allocation8 + $0x30] sm:$0xff]
        %v2682 = vld [vmem:[#allocation8 + $0x38] sm:$0xff]
        %v2683 = vld [vmem:[#allocation8 + $0x40] sm:$0xff]
        %v2684 = vld [vmem:[#allocation8 + $0x48] sm:$0xff]
        %v2685 = vld [vmem:[#allocation8 + $0x50] sm:$0xff]
        %v2686 = vld [vmem:[#allocation8 + $0x58] sm:$0xff]
        %v2687 = vld [vmem:[#allocation8 + $0x60] sm:$0xff]
        %v2688 = vld [vmem:[#allocation8 + $0x68] sm:$0xff]
        %v2689 = vld [vmem:[#allocation8 + $0x70] sm:$0xff]
        %v2690 = vld [vmem:[#allocation8 + $0x78] sm:$0xff]
        %v2691 = vld [vmem:[#allocation8 + $0x80] sm:$0xff]
        %v2692 = vld [vmem:[#allocation8 + $0x88] sm:$0xff]
        %v2693 = vld [vmem:[#allocation8 + $0x90] sm:$0xff]
        %v2694 = vld [vmem:[#allocation8 + $0x98] sm:$0xff]
        %v2695 = vld [vmem:[#allocation8 + $0xa0] sm:$0xff]
        %v2696 = vld [vmem:[#allocation8 + $0xa8] sm:$0xff]
        %v2697 = vld [vmem:[#allocation8 + $0xb0] sm:$0xff]
        %v2698 = vld [vmem:[#allocation8 + $0xb8] sm:$0xff]
        %v2699 = vld [vmem:[#allocation8 + $0xc0] sm:$0xff]
        %v2700 = vld [vmem:[#allocation8 + $0xc8] sm:$0xff]
        %v2701 = vld [vmem:[#allocation8 + $0xd0] sm:$0xff]
        %v2702 = vld [vmem:[#allocation8 + $0xd8] sm:$0xff]
        %v2703 = vld [vmem:[#allocation8 + $0xe0] sm:$0xff]
        %v2704 = vld [vmem:[#allocation8 + $0xe8] sm:$0xff]
        %v2705 = vld [vmem:[#allocation8 + $0xf0] sm:$0xff]
        %v2706 = vld [vmem:[#allocation8 + $0xf8] sm:$0xff]
        %v2707 = vld [vmem:[#allocation8 + $0x100] sm:$0xff]
        %v2708 = vld [vmem:[#allocation8 + $0x108] sm:$0xff]
        %v2709 = vld [vmem:[#allocation8 + $0x110] sm:$0xff]
        %v2710 = vld [vmem:[#allocation8 + $0x118] sm:$0xff]
        %v2711 = vld [vmem:[#allocation8 + $0x120] sm:$0xff]
        %v2712 = vld [vmem:[#allocation8 + $0x128] sm:$0xff]
        %v2713 = vld [vmem:[#allocation8 + $0x130] sm:$0xff]
        %v2714 = vld [vmem:[#allocation8 + $0x138] sm:$0xff]
        %v2715 = vld [vmem:[#allocation8 + $0x140] sm:$0xff]
        %v2716 = vld [vmem:[#allocation8 + $0x148] sm:$0xff]
        %v2717 = vld [vmem:[#allocation8 + $0x150] sm:$0xff]
        %v2718 = vld [vmem:[#allocation8 + $0x158] sm:$0xff]
        %v2719 = vld [vmem:[#allocation8 + $0x160] sm:$0xff]
        %v2720 = vld [vmem:[#allocation8 + $0x168] sm:$0xff]
        %v2721 = vld [vmem:[#allocation8 + $0x170] sm:$0xff]
        %v2722 = vld [vmem:[#allocation8 + $0x178] sm:$0xff]
        %v2723 = vld [vmem:[#allocation8 + $0x180] sm:$0xff]
        %v2724 = vld [vmem:[#allocation8 + $0x188] sm:$0xff]
        %v2725 = vld [vmem:[#allocation8 + $0x190] sm:$0xff]
        %v2726 = vld [vmem:[#allocation8 + $0x198] sm:$0xff]
        %v2727 = vld [vmem:[#allocation8 + $0x1a0] sm:$0xff]
        %v2728 = vld [vmem:[#allocation8 + $0x1a8] sm:$0xff]
        %v2729 = vld [vmem:[#allocation8 + $0x1b0] sm:$0xff]
        %v2730 = vld [vmem:[#allocation8 + $0x1b8] sm:$0xff]
        %v2731 = vld [vmem:[#allocation8 + $0x1c0] sm:$0xff]
        %v2732 = vld [vmem:[#allocation8 + $0x1c8] sm:$0xff]
        %v2733 = vld [vmem:[#allocation8 + $0x1d0] sm:$0xff]
        %v2734 = vld [vmem:[#allocation8 + $0x1d8] sm:$0xff]
        %v2735 = vld [vmem:[#allocation8 + $0x1e0] sm:$0xff]
        %v2736 = vld [vmem:[#allocation8 + $0x1e8] sm:$0xff]
        %v2737 = vld [vmem:[#allocation8 + $0x1f0] sm:$0xff]
        %v2738 = vld [vmem:[#allocation8 + $0x1f8] sm:$0xff]
        %2739 = vmatprep.subr.mxu0 %v2706
        %2740 = vmatpush1.msra.mxu0 %v2705
        %2741 = vmatprep.subr.mxu0 %v2704
        %2742 = vmatpush1.msra.mxu0 %v2703
        %2743 = vmatprep.subr.mxu0 %v2702
        %2744 = vmatpush1.msra.mxu0 %v2701
        %2745 = vmatprep.subr.mxu0 %v2700
        %2746 = vmatpush1.msra.mxu0 %v2699
        %2747 = vmatprep.subr.mxu0 %v2698
        %2748 = vmatpush1.msra.mxu0 %v2697
        %2749 = vmatprep.subr.mxu0 %v2696
        %2750 = vmatpush1.msra.mxu0 %v2695
        %2751 = vmatprep.subr.mxu0 %v2694
        %2752 = vmatpush1.msra.mxu0 %v2693
        %2753 = vmatprep.subr.mxu0 %v2692
        %2754 = vmatpush1.msra.mxu0 %v2691
        %2755 = vmatprep.subr.mxu0 %v2690
        %2756 = vmatpush1.msra.mxu0 %v2689
        %2757 = vmatprep.subr.mxu0 %v2688
        %2758 = vmatpush1.msra.mxu0 %v2687
        %2759 = vmatprep.subr.mxu0 %v2686
        %2760 = vmatpush1.msra.mxu0 %v2685
        %2761 = vmatprep.subr.mxu0 %v2684
        %2762 = vmatpush1.msra.mxu0 %v2683
        %2763 = vmatprep.subr.mxu0 %v2682
        %2764 = vmatpush1.msra.mxu0 %v2681
        %2765 = vmatprep.subr.mxu0 %v2680
        %2766 = vmatpush1.msra.mxu0 %v2679
        %2767 = vmatprep.subr.mxu0 %v2678
        %2768 = vmatpush1.msra.mxu0 %v2677
        %2769 = vmatprep.subr.mxu0 %v2676
        %2770 = vmatpush1.msra.mxu0 %v2675
        %2771 = vmatprep.subr.mxu0 %v2738
        %2772 = vmatpush2.msra.mxu0 %v2737
        %2773 = vmatprep.subr.mxu0 %v2736
        %2774 = vmatpush2.msra.mxu0 %v2735
        %2775 = vmatprep.subr.mxu0 %v2734
        %2776 = vmatpush2.msra.mxu0 %v2733
        %2777 = vmatprep.subr.mxu0 %v2732
        %2778 = vmatpush2.msra.mxu0 %v2731
        %2779 = vmatprep.subr.mxu0 %v2730
        %2780 = vmatpush2.msra.mxu0 %v2729
        %2781 = vmatprep.subr.mxu0 %v2728
        %2782 = vmatpush2.msra.mxu0 %v2727
        %2783 = vmatprep.subr.mxu0 %v2726
        %2784 = vmatpush2.msra.mxu0 %v2725
        %2785 = vmatprep.subr.mxu0 %v2724
        %2786 = vmatpush2.msra.mxu0 %v2723
        %2787 = vmatprep.subr.mxu0 %v2722
        %2788 = vmatpush2.msra.mxu0 %v2721
        %2789 = vmatprep.subr.mxu0 %v2720
        %2790 = vmatpush2.msra.mxu0 %v2719
        %2791 = vmatprep.subr.mxu0 %v2718
        %2792 = vmatpush2.msra.mxu0 %v2717
        %2793 = vmatprep.subr.mxu0 %v2716
        %2794 = vmatpush2.msra.mxu0 %v2715
        %2795 = vmatprep.subr.mxu0 %v2714
        %2796 = vmatpush2.msra.mxu0 %v2713
        %2797 = vmatprep.subr.mxu0 %v2712
        %2798 = vmatpush2.msra.mxu0 %v2711
        %2799 = vmatprep.subr.mxu0 %v2710
        %2800 = vmatpush2.msra.mxu0 %v2709
        %2801 = vmatprep.subr.mxu0 %v2708
        %2802 = vmatpush2.msra.mxu0 %v2707
        %2803 = vmatprep.mubr.f32.mxu0 %v2597
        %2804 = vmatmul.mubr.f32.gmra.mxu0 %v1533
        %v2805 = vpop.f32.mrf.mxu0
        %v2806 = vadd.f32 0.0, %v2805
        %v2807 = vpop.f32.mrf.mxu0
        %v2808 = vadd.f32 0.0, %v2807
        %2809 = vmatprep.mubr.f32.mxu0 %v2602
        %2810 = vmatmul.mubr.f32.gmra.mxu0 %v1538
        %v2811 = vpop.f32.mrf.mxu0
        %v2812 = vadd.f32 0.0, %v2811
        %v2813 = vpop.f32.mrf.mxu0
        %v2814 = vadd.f32 0.0, %v2813
        %2815 = vmatprep.mubr.f32.mxu0 %v2607
        %2816 = vmatmul.mubr.f32.gmra.mxu0 %v1543
        %v2817 = vpop.f32.mrf.mxu0
        %v2818 = vadd.f32 0.0, %v2817
        %v2819 = vpop.f32.mrf.mxu0
        %v2820 = vadd.f32 0.0, %v2819
        %2821 = vmatprep.mubr.f32.mxu0 %v2612
        %2822 = vmatmul.mubr.f32.gmra.mxu0 %v1548
        %v2823 = vpop.f32.mrf.mxu0
        %v2824 = vadd.f32 0.0, %v2823
        %v2825 = vpop.f32.mrf.mxu0
        %v2826 = vadd.f32 0.0, %v2825
        %2827 = vmatprep.mubr.f32.mxu0 %v2617
        %2828 = vmatmul.mubr.f32.gmra.mxu0 %v1553
        %v2829 = vpop.f32.mrf.mxu0
        %v2830 = vadd.f32 0.0, %v2829
        %v2831 = vpop.f32.mrf.mxu0
        %v2832 = vadd.f32 0.0, %v2831
        %2833 = vmatprep.mubr.f32.mxu0 %v2622
        %2834 = vmatmul.mubr.f32.gmra.mxu0 %v1558
        %v2835 = vpop.f32.mrf.mxu0
        %v2836 = vadd.f32 0.0, %v2835
        %v2837 = vpop.f32.mrf.mxu0
        %v2838 = vadd.f32 0.0, %v2837
        %2839 = vmatprep.mubr.f32.mxu0 %v2627
        %2840 = vmatmul.mubr.f32.gmra.mxu0 %v1563
        %v2841 = vpop.f32.mrf.mxu0
        %v2842 = vadd.f32 0.0, %v2841
        %v2843 = vpop.f32.mrf.mxu0
        %v2844 = vadd.f32 0.0, %v2843
        %2845 = vmatprep.mubr.f32.mxu0 %v2632
        %2846 = vmatmul.mubr.f32.gmra.mxu0 %v1568
        %v2847 = vpop.f32.mrf.mxu0
        %v2848 = vadd.f32 0.0, %v2847
        %v2849 = vpop.f32.mrf.mxu0
        %v2850 = vadd.f32 0.0, %v2849
        %2851 = vmatprep.mubr.f32.mxu0 %v2637
        %2852 = vmatmul.mubr.f32.gmra.mxu0 %v1573
        %v2853 = vpop.f32.mrf.mxu0
        %v2854 = vadd.f32 0.0, %v2853
        %v2855 = vpop.f32.mrf.mxu0
        %v2856 = vadd.f32 0.0, %v2855
        %2857 = vmatprep.mubr.f32.mxu0 %v2642
        %2858 = vmatmul.mubr.f32.gmra.mxu0 %v1578
        %v2859 = vpop.f32.mrf.mxu0
        %v2860 = vadd.f32 0.0, %v2859
        %v2861 = vpop.f32.mrf.mxu0
        %v2862 = vadd.f32 0.0, %v2861
        %2863 = vmatprep.mubr.f32.mxu0 %v2647
        %2864 = vmatmul.mubr.f32.gmra.mxu0 %v1583
        %v2865 = vpop.f32.mrf.mxu0
        %v2866 = vadd.f32 0.0, %v2865
        %v2867 = vpop.f32.mrf.mxu0
        %v2868 = vadd.f32 0.0, %v2867
        %2869 = vmatprep.mubr.f32.mxu0 %v2652
        %2870 = vmatmul.mubr.f32.gmra.mxu0 %v1588
        %v2871 = vpop.f32.mrf.mxu0
        %v2872 = vadd.f32 0.0, %v2871
        %v2873 = vpop.f32.mrf.mxu0
        %v2874 = vadd.f32 0.0, %v2873
        %2875 = vmatprep.mubr.f32.mxu0 %v2657
        %2876 = vmatmul.mubr.f32.gmra.mxu0 %v1593
        %v2877 = vpop.f32.mrf.mxu0
        %v2878 = vadd.f32 0.0, %v2877
        %v2879 = vpop.f32.mrf.mxu0
        %v2880 = vadd.f32 0.0, %v2879
        %2881 = vmatprep.mubr.f32.mxu0 %v2662
        %2882 = vmatmul.mubr.f32.gmra.mxu0 %v1598
        %v2883 = vpop.f32.mrf.mxu0
        %v2884 = vadd.f32 0.0, %v2883
        %v2885 = vpop.f32.mrf.mxu0
        %v2886 = vadd.f32 0.0, %v2885
        %2887 = vmatprep.mubr.f32.mxu0 %v2667
        %2888 = vmatmul.mubr.f32.gmra.mxu0 %v1603
        %v2889 = vpop.f32.mrf.mxu0
        %v2890 = vadd.f32 0.0, %v2889
        %v2891 = vpop.f32.mrf.mxu0
        %v2892 = vadd.f32 0.0, %v2891
        %2893 = vmatprep.mubr.f32.mxu0 %v2672
        %2894 = vmatmul.mubr.f32.gmra.mxu0 %v1608
        %v2895 = vpop.f32.mrf.mxu0
        %v2896 = vadd.f32 0.0, %v2895
        %v2897 = vpop.f32.mrf.mxu0
        %v2898 = vadd.f32 0.0, %v2897
        %2899 = vdwg.mxu0
        %p2900 = scmp.eq.s32.totalorder %s37, 0
        // Predicated region
        $region73: #{tpu_custom_call.1} parent=47 // pred_check
          %p2901 = pneg %p2900
        $region74: #{tpu_custom_call.1} parent=47 // pred_check_branch
          %2903 = sbr.rel (%p2901) target = $region76
        $region75: #{tpu_custom_call.1} parent=47 // pred_region
          %v2904 = vld [vmem:[%s4] sm:$0x3]
          %v2906 = vlaneseq
          %v2907 = vshrl.u32 %v2906, 7
          %v2908 = vsub.s32 0, %v2907
          %v2909 = vrot.slane %v2904, %v2908
          %v2910 = vlaneseq
          %v2911 = vshrl.u32 %v2910, 7
          %v2912 = vsub.s32 1, %v2911
          %v2913 = vrot.slane %v2904, %v2912
          %v2916 = vadd.f32 %v2806, %v2909
          %v2917 = vadd.f32 %v2808, %v2913
          %v2918 = vadd.f32 %v2812, %v2909
          %v2919 = vadd.f32 %v2814, %v2913
          %v2920 = vadd.f32 %v2818, %v2909
          %v2921 = vadd.f32 %v2820, %v2913
          %v2922 = vadd.f32 %v2824, %v2909
          %v2923 = vadd.f32 %v2826, %v2913
          %v2924 = vadd.f32 %v2830, %v2909
          %v2925 = vadd.f32 %v2832, %v2913
          %v2926 = vadd.f32 %v2836, %v2909
          %v2927 = vadd.f32 %v2838, %v2913
          %v2928 = vadd.f32 %v2842, %v2909
          %v2929 = vadd.f32 %v2844, %v2913
          %v2930 = vadd.f32 %v2848, %v2909
          %v2931 = vadd.f32 %v2850, %v2913
          %v2932 = vadd.f32 %v2854, %v2909
          %v2933 = vadd.f32 %v2856, %v2913
          %v2934 = vadd.f32 %v2860, %v2909
          %v2935 = vadd.f32 %v2862, %v2913
          %v2936 = vadd.f32 %v2866, %v2909
          %v2937 = vadd.f32 %v2868, %v2913
          %v2938 = vadd.f32 %v2872, %v2909
          %v2939 = vadd.f32 %v2874, %v2913
          %v2940 = vadd.f32 %v2878, %v2909
          %v2941 = vadd.f32 %v2880, %v2913
          %v2942 = vadd.f32 %v2884, %v2909
          %v2943 = vadd.f32 %v2886, %v2913
          %v2944 = vadd.f32 %v2890, %v2909
          %v2945 = vadd.f32 %v2892, %v2913
          %v2946 = vadd.f32 %v2896, %v2909
          %v2947 = vadd.f32 %v2898, %v2913
          %2948 = vst [vmem:[%s440] sm:$0xff] %v2916
          %2949 = vst [vmem:[%s440 + $0x8] sm:$0xff] %v2917
          %2950 = vst [vmem:[%s440 + $0x10] sm:$0xff] %v2918
          %2951 = vst [vmem:[%s440 + $0x18] sm:$0xff] %v2919
          %2952 = vst [vmem:[%s440 + $0x20] sm:$0xff] %v2920
          %2953 = vst [vmem:[%s440 + $0x28] sm:$0xff] %v2921
          %2954 = vst [vmem:[%s440 + $0x30] sm:$0xff] %v2922
          %2955 = vst [vmem:[%s440 + $0x38] sm:$0xff] %v2923
          %2956 = vst [vmem:[%s440 + $0x40] sm:$0xff] %v2924
          %2957 = vst [vmem:[%s440 + $0x48] sm:$0xff] %v2925
          %2958 = vst [vmem:[%s440 + $0x50] sm:$0xff] %v2926
          %2959 = vst [vmem:[%s440 + $0x58] sm:$0xff] %v2927
          %2960 = vst [vmem:[%s440 + $0x60] sm:$0xff] %v2928
          %2961 = vst [vmem:[%s440 + $0x68] sm:$0xff] %v2929
          %2962 = vst [vmem:[%s440 + $0x70] sm:$0xff] %v2930
          %2963 = vst [vmem:[%s440 + $0x78] sm:$0xff] %v2931
          %2964 = vst [vmem:[%s440 + $0x80] sm:$0xff] %v2932
          %2965 = vst [vmem:[%s440 + $0x88] sm:$0xff] %v2933
          %2966 = vst [vmem:[%s440 + $0x90] sm:$0xff] %v2934
          %2967 = vst [vmem:[%s440 + $0x98] sm:$0xff] %v2935
          %2968 = vst [vmem:[%s440 + $0xa0] sm:$0xff] %v2936
          %2969 = vst [vmem:[%s440 + $0xa8] sm:$0xff] %v2937
          %2970 = vst [vmem:[%s440 + $0xb0] sm:$0xff] %v2938
          %2971 = vst [vmem:[%s440 + $0xb8] sm:$0xff] %v2939
          %2972 = vst [vmem:[%s440 + $0xc0] sm:$0xff] %v2940
          %2973 = vst [vmem:[%s440 + $0xc8] sm:$0xff] %v2941
          %2974 = vst [vmem:[%s440 + $0xd0] sm:$0xff] %v2942
          %2975 = vst [vmem:[%s440 + $0xd8] sm:$0xff] %v2943
          %2976 = vst [vmem:[%s440 + $0xe0] sm:$0xff] %v2944
          %2977 = vst [vmem:[%s440 + $0xe8] sm:$0xff] %v2945
          %2978 = vst [vmem:[%s440 + $0xf0] sm:$0xff] %v2946
          %2979 = vst [vmem:[%s440 + $0xf8] sm:$0xff] %v2947
        $region76: #{tpu_custom_call.1} parent=47 // pred_fallthru
          _
        %p2980 = scmp.gt.s32.totalorder %s37, 0
        // Predicated region
        $region77: #{tpu_custom_call.1} parent=47 // pred_check
          %p2981 = pneg %p2980
        $region78: #{tpu_custom_call.1} parent=47 // pred_check_branch
          %2983 = sbr.rel (%p2981) target = $region80
        $region79: #{tpu_custom_call.1} parent=47 // pred_region
          %v2984 = vld [vmem:[%s440] sm:$0xff]
          %v2985 = vld [vmem:[%s440 + $0x8] sm:$0xff]
          %v2986 = vld [vmem:[%s440 + $0x10] sm:$0xff]
          %v2987 = vld [vmem:[%s440 + $0x18] sm:$0xff]
          %v2988 = vld [vmem:[%s440 + $0x20] sm:$0xff]
          %v2989 = vld [vmem:[%s440 + $0x28] sm:$0xff]
          %v2990 = vld [vmem:[%s440 + $0x30] sm:$0xff]
          %v2991 = vld [vmem:[%s440 + $0x38] sm:$0xff]
          %v2992 = vld [vmem:[%s440 + $0x40] sm:$0xff]
          %v2993 = vld [vmem:[%s440 + $0x48] sm:$0xff]
          %v2994 = vld [vmem:[%s440 + $0x50] sm:$0xff]
          %v2995 = vld [vmem:[%s440 + $0x58] sm:$0xff]
          %v2996 = vld [vmem:[%s440 + $0x60] sm:$0xff]
          %v2997 = vld [vmem:[%s440 + $0x68] sm:$0xff]
          %v2998 = vld [vmem:[%s440 + $0x70] sm:$0xff]
          %v2999 = vld [vmem:[%s440 + $0x78] sm:$0xff]
          %v3000 = vld [vmem:[%s440 + $0x80] sm:$0xff]
          %v3001 = vld [vmem:[%s440 + $0x88] sm:$0xff]
          %v3002 = vld [vmem:[%s440 + $0x90] sm:$0xff]
          %v3003 = vld [vmem:[%s440 + $0x98] sm:$0xff]
          %v3004 = vld [vmem:[%s440 + $0xa0] sm:$0xff]
          %v3005 = vld [vmem:[%s440 + $0xa8] sm:$0xff]
          %v3006 = vld [vmem:[%s440 + $0xb0] sm:$0xff]
          %v3007 = vld [vmem:[%s440 + $0xb8] sm:$0xff]
          %v3008 = vld [vmem:[%s440 + $0xc0] sm:$0xff]
          %v3009 = vld [vmem:[%s440 + $0xc8] sm:$0xff]
          %v3010 = vld [vmem:[%s440 + $0xd0] sm:$0xff]
          %v3011 = vld [vmem:[%s440 + $0xd8] sm:$0xff]
          %v3012 = vld [vmem:[%s440 + $0xe0] sm:$0xff]
          %v3013 = vld [vmem:[%s440 + $0xe8] sm:$0xff]
          %v3014 = vld [vmem:[%s440 + $0xf0] sm:$0xff]
          %v3015 = vld [vmem:[%s440 + $0xf8] sm:$0xff]
          %v3016 = vadd.f32 %v2984, %v2806
          %v3017 = vadd.f32 %v2985, %v2808
          %v3018 = vadd.f32 %v2986, %v2812
          %v3019 = vadd.f32 %v2987, %v2814
          %v3020 = vadd.f32 %v2988, %v2818
          %v3021 = vadd.f32 %v2989, %v2820
          %v3022 = vadd.f32 %v2990, %v2824
          %v3023 = vadd.f32 %v2991, %v2826
          %v3024 = vadd.f32 %v2992, %v2830
          %v3025 = vadd.f32 %v2993, %v2832
          %v3026 = vadd.f32 %v2994, %v2836
          %v3027 = vadd.f32 %v2995, %v2838
          %v3028 = vadd.f32 %v2996, %v2842
          %v3029 = vadd.f32 %v2997, %v2844
          %v3030 = vadd.f32 %v2998, %v2848
          %v3031 = vadd.f32 %v2999, %v2850
          %v3032 = vadd.f32 %v3000, %v2854
          %v3033 = vadd.f32 %v3001, %v2856
          %v3034 = vadd.f32 %v3002, %v2860
          %v3035 = vadd.f32 %v3003, %v2862
          %v3036 = vadd.f32 %v3004, %v2866
          %v3037 = vadd.f32 %v3005, %v2868
          %v3038 = vadd.f32 %v3006, %v2872
          %v3039 = vadd.f32 %v3007, %v2874
          %v3040 = vadd.f32 %v3008, %v2878
          %v3041 = vadd.f32 %v3009, %v2880
          %v3042 = vadd.f32 %v3010, %v2884
          %v3043 = vadd.f32 %v3011, %v2886
          %v3044 = vadd.f32 %v3012, %v2890
          %v3045 = vadd.f32 %v3013, %v2892
          %v3046 = vadd.f32 %v3014, %v2896
          %v3047 = vadd.f32 %v3015, %v2898
          %3048 = vst [vmem:[%s440] sm:$0xff] %v3016
          %3049 = vst [vmem:[%s440 + $0x8] sm:$0xff] %v3017
          %3050 = vst [vmem:[%s440 + $0x10] sm:$0xff] %v3018
          %3051 = vst [vmem:[%s440 + $0x18] sm:$0xff] %v3019
          %3052 = vst [vmem:[%s440 + $0x20] sm:$0xff] %v3020
          %3053 = vst [vmem:[%s440 + $0x28] sm:$0xff] %v3021
          %3054 = vst [vmem:[%s440 + $0x30] sm:$0xff] %v3022
          %3055 = vst [vmem:[%s440 + $0x38] sm:$0xff] %v3023
          %3056 = vst [vmem:[%s440 + $0x40] sm:$0xff] %v3024
          %3057 = vst [vmem:[%s440 + $0x48] sm:$0xff] %v3025
          %3058 = vst [vmem:[%s440 + $0x50] sm:$0xff] %v3026
          %3059 = vst [vmem:[%s440 + $0x58] sm:$0xff] %v3027
          %3060 = vst [vmem:[%s440 + $0x60] sm:$0xff] %v3028
          %3061 = vst [vmem:[%s440 + $0x68] sm:$0xff] %v3029
          %3062 = vst [vmem:[%s440 + $0x70] sm:$0xff] %v3030
          %3063 = vst [vmem:[%s440 + $0x78] sm:$0xff] %v3031
          %3064 = vst [vmem:[%s440 + $0x80] sm:$0xff] %v3032
          %3065 = vst [vmem:[%s440 + $0x88] sm:$0xff] %v3033
          %3066 = vst [vmem:[%s440 + $0x90] sm:$0xff] %v3034
          %3067 = vst [vmem:[%s440 + $0x98] sm:$0xff] %v3035
          %3068 = vst [vmem:[%s440 + $0xa0] sm:$0xff] %v3036
          %3069 = vst [vmem:[%s440 + $0xa8] sm:$0xff] %v3037
          %3070 = vst [vmem:[%s440 + $0xb0] sm:$0xff] %v3038
          %3071 = vst [vmem:[%s440 + $0xb8] sm:$0xff] %v3039
          %3072 = vst [vmem:[%s440 + $0xc0] sm:$0xff] %v3040
          %3073 = vst [vmem:[%s440 + $0xc8] sm:$0xff] %v3041
          %3074 = vst [vmem:[%s440 + $0xd0] sm:$0xff] %v3042
          %3075 = vst [vmem:[%s440 + $0xd8] sm:$0xff] %v3043
          %3076 = vst [vmem:[%s440 + $0xe0] sm:$0xff] %v3044
          %3077 = vst [vmem:[%s440 + $0xe8] sm:$0xff] %v3045
          %3078 = vst [vmem:[%s440 + $0xf0] sm:$0xff] %v3046
          %3079 = vst [vmem:[%s440 + $0xf8] sm:$0xff] %v3047
        $region80: #{tpu_custom_call.1} parent=47 // pred_fallthru
          _
        %s3080 = sand.u32 %s219, 1
        %s3081 = scalar_lea.sflag [#allocation4], %s3080
        %s3082 = sand.u32 %s219, 1
        %s3083 = smul.addr %s3082, 256
        %s3084 = scalar_lea.vmem [#allocation13], %s3083
        %s3085 = sand.u32 %s247, 1
        %s3086 = scalar_lea.sflag [#allocation15], %s3085
        %s3087 = sand.u32 %s247, 1
        %s3088 = smul.addr %s3087, 256
        %s3089 = scalar_lea.vmem [#allocation14], %s3088
        // Predicated region
        $region81: #{tpu_custom_call.1} parent=47 // pred_check
          %p3090 = pneg %p229
        $region82: #{tpu_custom_call.1} parent=47 // pred_check_branch
          %3092 = sbr.rel (%p3090) target = $region84
        $region83: #{tpu_custom_call.1} parent=47 // pred_region
          %s3094 = ssub.s32 4096, 4096
          %3095 = vsyncadd %s3081, %s3094
          %s3096 = smul.addr %s36, 32
          %s3097 = smul.addr %s3096, 128
          %s3098 = scalar_lea.hbm %s7, %s3097
          %s3099 = sshll.u32 %s3084, 4
          %s3100 = int_to_ptr.vmem [resolvable:$true] %s3099
          %3105 = dma.vmem_to_hbm [thread:$0]  %s3100, 4096, %s3098, %s3081, 256, 256, 16
        $region84: #{tpu_custom_call.1} parent=47 // pred_fallthru
          _
        // Predicated region
        $region85: #{tpu_custom_call.1} parent=47 // pred_check
          %p3106 = pneg %p257
        $region86: #{tpu_custom_call.1} parent=47 // pred_check_branch
          %3108 = sbr.rel (%p3106) target = $region88
        $region87: #{tpu_custom_call.1} parent=47 // pred_region
          %s3109 = smul.u32 2, %s37
          %s3111 = ssub.s32 4096, 4096
          %3112 = vsyncadd %s3086, %s3111
          %s3113 = smul.addr %s3109, 16
          %s3114 = smul.addr %s36, 32
          %s3115 = sadd.s32 %s3113, %s3114
          %s3116 = smul.addr %s3115, 128
          %s3117 = scalar_lea.hbm %s8, %s3116
          %s3118 = sshll.u32 %s3089, 4
          %s3119 = int_to_ptr.vmem [resolvable:$true] %s3118
          %3124 = dma.vmem_to_hbm [thread:$0]  %s3119, 4096, %s3117, %s3086, 128, 128, 8
        $region88: #{tpu_custom_call.1} parent=47 // pred_fallthru
          _
      $region48: #{tpu_custom_call.1} parent=5 // pred_fallthru
        _
      %p3125 = scmp.le.s32.totalorder 2, %s27
      // Predicated region
      $region89: #{tpu_custom_call.1} parent=5 // pred_check
        %p3126 = pneg %p3125
      $region90: #{tpu_custom_call.1} parent=5 // pred_check_branch
        %3128 = sbr.rel (%p3126) target = $region92
      $region91: #{tpu_custom_call.1} parent=5 // pred_region
        %s3129 = ssub.s32 %s27, 2
        // Predicated region
        $region93: #{tpu_custom_call.1} parent=91 // pred_check
          %p3130 = pneg %p235
        $region94: #{tpu_custom_call.1} parent=91 // pred_check_branch
          %3132 = sbr.rel (%p3130) target = $region96
        $region95: #{tpu_custom_call.1} parent=91 // pred_region
          %s3133 = sand.u32 %s220, 1
          %s3134 = scalar_lea.sflag [#allocation4], %s3133
          %s3135 = sand.u32 %s220, 1
          %s3136 = smul.addr %s3135, 256
          %s3137 = scalar_lea.vmem [#allocation13], %s3136
          %3138 = dma.done %s3134, 4096
        $region96: #{tpu_custom_call.1} parent=91 // pred_fallthru
          _
        // Predicated region
        $region97: #{tpu_custom_call.1} parent=91 // pred_check
          %p3139 = pneg %p263
        $region98: #{tpu_custom_call.1} parent=91 // pred_check_branch
          %3141 = sbr.rel (%p3139) target = $region100
        $region99: #{tpu_custom_call.1} parent=91 // pred_region
          %s3142 = sand.u32 %s248, 1
          %s3143 = scalar_lea.sflag [#allocation15], %s3142
          %s3144 = sand.u32 %s248, 1
          %s3145 = smul.addr %s3144, 256
          %s3146 = scalar_lea.vmem [#allocation14], %s3145
          %3147 = dma.done %s3143, 4096
        $region100: #{tpu_custom_call.1} parent=91 // pred_fallthru
          _
      $region92: #{tpu_custom_call.1} parent=5 // pred_fallthru
        _
    $region6: #{tpu_custom_call.1} parent=1 // loop_footer
      %s31 = sadd.s32 1, %s27
    $region7: #{tpu_custom_call.1} parent=1 // loop_footer_branch
      %26 = sbr.rel target = $region3
    $region8: #{tpu_custom_call.1} parent=1 // loop_exit
      _
    %3148 = vsyncpa [#allocation3], 1
    %s3149 = scalar_lea.sflag [#allocation3], 1
    %3150 = vsyncpa %s3149, 1
    %3151 = vsyncpa [#allocation6], 1
    %3152 = vsyncpa [#allocation9], 1
    %3153 = vsyncpa [#allocation12], 1
    %3154 = vsyncpa [#allocation4], 1
    %s3155 = scalar_lea.sflag [#allocation4], 1
    %3156 = vsyncpa %s3155, 1
    %3157 = vsyncpa [#allocation15], 1
    %s3158 = scalar_lea.sflag [#allocation15], 1
    %3159 = vsyncpa %s3158, 1

</llo_original>
